<compile_context>
chip_gen: v7x
topology: tpu7x:2x2x1
jax: 0.10.0
libtpu: 0.0.40
codegen_flags: <defaults>
</compile_context>

<pallas_src>
import functools

import jax
import jax.numpy as jnp
from jax.experimental import pallas as pl
from jax.experimental.pallas import tpu as pltpu


def _pick_row_tile(H, W, target_rows=128):
    """Pick a row tile TH dividing H with roughly `target_rows` output pixels."""
    th = max(1, min(H, target_rows // max(W, 1)))
    while H % th:
        th -= 1
    return th


# --------------------------------------------------------------------------
# Pass 1: conv3x3 (single concat-K MXU matmul) + per-channel sum / sumsq.
# --------------------------------------------------------------------------
def _conv_stats_kernel(x_ref, w_ref, y_ref, sum_ref, sumsq_ref, *, TH, W):
    # x_ref: (1, H+2, W+2, Cin) padded image of batch n (resident across i)
    # w_ref: (9*Cin, Cout) packed weights, K ordered (ky, kx, cin)
    # y_ref: (TH*W, Cout) conv output tile (f32)
    # sum_ref / sumsq_ref: (1, 1, Cout) per-batch accumulators
    i = pl.program_id(1)
    r0 = pl.multiple_of(i * TH, TH)

    taps = []
    for dy in range(3):                                   # statically unrolled
        slab = x_ref[0, pl.ds(r0 + dy, TH), :, :]         # (TH, W+2, Cin)
        for dx in range(3):
            taps.append(slab[:, dx:dx + W, :])            # (TH, W, Cin)
    # K ordering (dy, dx, cin) matches w_hwio.reshape(9*Cin, Cout).
    patches = jnp.concatenate(taps, axis=-1)              # (TH, W, 9*Cin)
    patches = patches.reshape(TH * W, -1)                 # (TH*W, 9*Cin)

    # One MXU matmul with K = 9*Cin, f32 accumulation.
    yt = jnp.dot(patches.astype(w_ref.dtype), w_ref[...],
                 preferred_element_type=jnp.float32)
    y_ref[...] = yt

    @pl.when(i == 0)
    def _():
        sum_ref[...] = jnp.zeros_like(sum_ref)
        sumsq_ref[...] = jnp.zeros_like(sumsq_ref)

    sum_ref[...] += jnp.sum(yt, axis=0, keepdims=True)[None]
    sumsq_ref[...] += jnp.sum(yt * yt, axis=0, keepdims=True)[None]


def _conv3x3_stats(x_pad, w9, *, TH):
    N, Hp, Wp, Cin = x_pad.shape
    H, W = Hp - 2, Wp - 2
    Cout = w9.shape[-1]
    nH = H // TH
    M = N * H * W

    flops = 2 * M * w9.shape[0] * Cout
    bytes_accessed = (x_pad.size * x_pad.dtype.itemsize
                      + w9.size * w9.dtype.itemsize
                      + M * Cout * 4 + 2 * N * Cout * 4)

    return pl.pallas_call(
        functools.partial(_conv_stats_kernel, TH=TH, W=W),
        grid=(N, nH),
        in_specs=[
            # padded image of batch n, fetched once per n, resident across i
            pl.BlockSpec((1, Hp, Wp, Cin), lambda n, i: (n, 0, 0, 0)),
            # packed weights, resident for the whole grid
            pl.BlockSpec((9 * Cin, Cout), lambda n, i: (0, 0)),
        ],
        out_specs=(
            pl.BlockSpec((TH * W, Cout), lambda n, i: (n * nH + i, 0)),
            pl.BlockSpec((1, 1, Cout), lambda n, i: (n, 0, 0)),
            pl.BlockSpec((1, 1, Cout), lambda n, i: (n, 0, 0)),
        ),
        out_shape=(
            jax.ShapeDtypeStruct((M, Cout), jnp.float32),
            jax.ShapeDtypeStruct((N, 1, Cout), jnp.float32),
            jax.ShapeDtypeStruct((N, 1, Cout), jnp.float32),
        ),
        compiler_params=pltpu.CompilerParams(
            dimension_semantics=("parallel", "arbitrary"),
            vmem_limit_bytes=64 * 1024 * 1024),
        cost_estimate=pl.CostEstimate(flops=flops, transcendentals=0,
                                      bytes_accessed=bytes_accessed),
    )(x_pad, w9)


# --------------------------------------------------------------------------
# Pass 2: BN affine + ReLU (optionally writing the zero-padded activation).
# --------------------------------------------------------------------------
def _bn_relu_kernel(y_ref, scale_ref, shift_ref, o_ref):
    o_ref[...] = jnp.maximum(
        y_ref[...] * scale_ref[...] + shift_ref[...], 0.0).astype(o_ref.dtype)


def _bn_relu_pad_kernel(y_ref, scale_ref, shift_ref, o_ref, *, H, W):
    a = jnp.maximum(y_ref[...] * scale_ref[...] + shift_ref[...], 0.0)
    o_ref[...] = jnp.zeros_like(o_ref)
    o_ref[0, 1:H + 1, 1:W + 1, :] = a.reshape(H, W, -1).astype(o_ref.dtype)


# --------------------------------------------------------------------------
# One Conv3x3 + BatchNorm2d (training stats) + ReLU stage.
# --------------------------------------------------------------------------
def conv3x3_bn_relu(x_pad, w_hwio, gamma, beta, *, eps=1e-5,
                    matmul_dtype=jnp.float32, pad_output=False):
    """x_pad: (N, H+2, W+2, Cin) zero-padded f32 NHWC input.
    Returns (N, H+2, W+2, Cout) padded f32 activation if pad_output,
    else (N*H*W, Cout) f32."""
    N, Hp, Wp, Cin = x_pad.shape
    H, W = Hp - 2, Wp - 2
    Cout = w_hwio.shape[-1]
    M = N * H * W
    TH = _pick_row_tile(H, W)

    # (ky, kx, cin)-ordered K axis, matching the in-kernel tap construction.
    w9 = w_hwio.reshape(9 * Cin, Cout).astype(matmul_dtype)

    y, sums, sumsqs = _conv3x3_stats(x_pad, w9, TH=TH)

    # Tiny per-channel glue in plain JAX: batch stats -> affine scale/shift.
    cnt = jnp.float32(M)
    mean = jnp.sum(sums, axis=0) / cnt                   # (1, Cout)
    var = jnp.sum(sumsqs, axis=0) / cnt - mean * mean    # E[x^2] - E[x]^2
    scale = gamma.reshape(1, Cout).astype(jnp.float32) * jax.lax.rsqrt(var + eps)
    shift = beta.reshape(1, Cout).astype(jnp.float32) - mean * scale

    cvec = pl.BlockSpec((1, Cout), lambda b: (0, 0))

    if pad_output:
        return pl.pallas_call(
            functools.partial(_bn_relu_pad_kernel, H=H, W=W),
            grid=(N,),
            in_specs=[pl.BlockSpec((H * W, Cout), lambda n: (n, 0)),
                      cvec, cvec],
            out_specs=pl.BlockSpec((1, Hp, Wp, Cout), lambda n: (n, 0, 0, 0)),
            out_shape=jax.ShapeDtypeStruct((N, Hp, Wp, Cout), jnp.float32),
            compiler_params=pltpu.CompilerParams(
                dimension_semantics=("parallel",)),
        )(y, scale, shift)

    TB = TH * W
    return pl.pallas_call(
        _bn_relu_kernel,
        grid=(M // TB,),
        in_specs=[pl.BlockSpec((TB, Cout), lambda b: (b, 0)), cvec, cvec],
        out_specs=pl.BlockSpec((TB, Cout), lambda b: (b, 0)),
        out_shape=jax.ShapeDtypeStruct((M, Cout), jnp.float32),
        compiler_params=pltpu.CompilerParams(
            dimension_semantics=("parallel",)),
    )(y, scale, shift)


# --------------------------------------------------------------------------
# BottleNeck forward (NCHW in / NCHW out, like PyTorch).
# --------------------------------------------------------------------------
def init_bottleneck_params(base_dim, key):
    in_ch = base_dim * 2 ** 3
    out_ch = base_dim * 2 ** 4
    k1, k2 = jax.random.split(key)
    w1 = jax.random.normal(k1, (out_ch, in_ch, 3, 3), jnp.float32) * 0.05
    w2 = jax.random.normal(k2, (out_ch, out_ch, 3, 3), jnp.float32) * 0.05
    g1 = jnp.ones((out_ch,), jnp.float32)
    b1 = jnp.zeros((out_ch,), jnp.float32)
    g2 = jnp.ones((out_ch,), jnp.float32)
    b2 = jnp.zeros((out_ch,), jnp.float32)
    return dict(w1=w1, g1=g1, b1=b1, w2=w2, g2=g2, b2=b2)


def bottleneck_forward(x_nchw, params, matmul_dtype=jnp.float32, eps=1e-5):
    N, Cin, H, W = x_nchw.shape
    x = jnp.transpose(x_nchw, (0, 2, 3, 1)).astype(jnp.float32)   # NCHW -> NHWC
    x_pad = jnp.pad(x, ((0, 0), (1, 1), (1, 1), (0, 0)))

    w1 = jnp.transpose(params['w1'], (2, 3, 1, 0))   # OIHW -> HWIO
    w2 = jnp.transpose(params['w2'], (2, 3, 1, 0))

    a_pad = conv3x3_bn_relu(x_pad, w1, params['g1'], params['b1'], eps=eps,
                            matmul_dtype=matmul_dtype, pad_output=True)
    y2 = conv3x3_bn_relu(a_pad, w2, params['g2'], params['b2'], eps=eps,
                         matmul_dtype=matmul_dtype, pad_output=False)

    Cout = params['w2'].shape[0]
    return jnp.transpose(y2.reshape(N, H, W, Cout), (0, 3, 1, 2))


def _ref_forward(x_nchw, params, eps=1e-5, conv_dtype=jnp.float32):
    """Pure-JAX reference (XLA conv + training-mode BN + ReLU) in NCHW."""
    def stage(x, w, g, b):
        y = jax.lax.conv_general_dilated(
            x.astype(conv_dtype), w.astype(conv_dtype),
            window_strides=(1, 1), padding='SAME',
            dimension_numbers=('NCHW', 'OIHW', 'NCHW'),
            preferred_element_type=jnp.float32)
        mean = y.mean(axis=(0, 2, 3), keepdims=True)
        var = ((y - mean) ** 2).mean(axis=(0, 2, 3), keepdims=True)
        y = (y - mean) * jax.lax.rsqrt(var + eps)
        y = y * g.reshape(1, -1, 1, 1) + b.reshape(1, -1, 1, 1)
        return jnp.maximum(y, 0.0)
    x = stage(x_nchw, params['w1'], params['g1'], params['b1'])
    x = stage(x, params['w2'], params['g2'], params['b2'])
    return x


if __name__ == "__main__":
    base_dim = 4                      # small: in_channels=32, out_channels=64
    N, H, W = 2, 16, 16
    in_ch = base_dim * 2 ** 3

    key = jax.random.PRNGKey(0)
    kx, kp = jax.random.split(key)
    x = jax.random.normal(kx, (N, in_ch, H, W), jnp.float32)   # NCHW like PyTorch
    params = init_bottleneck_params(base_dim, kp)

    # f32 MXU operands: exact module semantics, strict check vs f32 reference.
    out = jax.block_until_ready(jax.jit(bottleneck_forward)(x, params))
    ref = _ref_forward(x, params)
    assert out.shape == (N, base_dim * 2 ** 4, H, W), out.shape
    err = float(jnp.max(jnp.abs(out - ref)))
    assert jnp.allclose(out, ref, atol=2e-4, rtol=2e-4), err

    # bf16 MXU operands (v5e/v6e/v7x fast path): checked against a reference
    # that also uses bf16 conv operands with f32 accumulation.
    fwd_bf16 = jax.jit(functools.partial(bottleneck_forward,
                                         matmul_dtype=jnp.bfloat16))
    out_b = jax.block_until_ready(fwd_bf16(x, params))
    ref_b = _ref_forward(x, params, conv_dtype=jnp.bfloat16)
    err_b = float(jnp.max(jnp.abs(out_b - ref_b)))
    assert jnp.allclose(out_b, ref_b, atol=5e-3, rtol=5e-3), err_b

    print("KERNEL_OK")
</pallas_src>

<mosaic_0001>
module attributes {stable_mosaic.version = 11 : i64} {
  func.func @_conv_stats_kernel(%arg0: i32, %arg1: i32, %arg2: memref<1x18x18x32xf32, #tpu.memory_space<vmem>>, %arg3: memref<288x64xf32, #tpu.memory_space<vmem>>, %arg4: memref<128x64xf32, #tpu.memory_space<vmem>>, %arg5: memref<1x1x64xf32, #tpu.memory_space<vmem>>, %arg6: memref<1x1x64xf32, #tpu.memory_space<vmem>>) attributes {dimension_semantics = [#tpu.dimension_semantics<parallel>, #tpu.dimension_semantics<arbitrary>], iteration_bounds = array<i64: 2, 2>, scalar_prefetch = 0 : i64, scratch_operands = 0 : i64, tpu.core_type = #tpu.core_type<tc>, window_params = [{transform_indices = @transform_0, window_bounds = array<i64: 1, 18, 18, 32>}, {pipeline_mode = #tpu.pipeline_mode<synchronous>, transform_indices = @transform_1, window_bounds = array<i64: 288, 64>}, {transform_indices = @transform_2, window_bounds = array<i64: 128, 64>}, {transform_indices = @transform_3, window_bounds = array<i64: 1, 1, 64>}, {transform_indices = @transform_4, window_bounds = array<i64: 1, 1, 64>}]} {
    %c8_i32 = arith.constant 8 : i32
    %0 = arith.muli %arg1, %c8_i32 : i32
    %1 = tpu.assume_multiple %0, 8 : i32
    %c0_i32 = arith.constant 0 : i32
    %2 = arith.addi %1, %c0_i32 : i32
    %c0 = arith.constant 0 : index
    %3 = arith.index_cast %2 : i32 to index
    %c0_0 = arith.constant 0 : index
    %c0_1 = arith.constant 0 : index
    %4 = vector.load %arg2[%c0, %3, %c0_0, %c0_1] : memref<1x18x18x32xf32, #tpu.memory_space<vmem>>, vector<1x8x18x32xf32>
    %5 = vector.shape_cast %4 : vector<1x8x18x32xf32> to vector<8x18x32xf32>
    %6 = vector.extract_strided_slice %5 {offsets = [0, 0, 0], sizes = [8, 16, 32], strides = [1, 1, 1]} : vector<8x18x32xf32> to vector<8x16x32xf32>
    %7 = vector.extract_strided_slice %5 {offsets = [0, 1, 0], sizes = [8, 16, 32], strides = [1, 1, 1]} : vector<8x18x32xf32> to vector<8x16x32xf32>
    %8 = vector.extract_strided_slice %5 {offsets = [0, 2, 0], sizes = [8, 16, 32], strides = [1, 1, 1]} : vector<8x18x32xf32> to vector<8x16x32xf32>
    %c1_i32 = arith.constant 1 : i32
    %9 = arith.addi %1, %c1_i32 : i32
    %c0_2 = arith.constant 0 : index
    %10 = arith.index_cast %9 : i32 to index
    %c0_3 = arith.constant 0 : index
    %c0_4 = arith.constant 0 : index
    %11 = vector.load %arg2[%c0_2, %10, %c0_3, %c0_4] : memref<1x18x18x32xf32, #tpu.memory_space<vmem>>, vector<1x8x18x32xf32>
    %12 = vector.shape_cast %11 : vector<1x8x18x32xf32> to vector<8x18x32xf32>
    %13 = vector.extract_strided_slice %12 {offsets = [0, 0, 0], sizes = [8, 16, 32], strides = [1, 1, 1]} : vector<8x18x32xf32> to vector<8x16x32xf32>
    %14 = vector.extract_strided_slice %12 {offsets = [0, 1, 0], sizes = [8, 16, 32], strides = [1, 1, 1]} : vector<8x18x32xf32> to vector<8x16x32xf32>
    %15 = vector.extract_strided_slice %12 {offsets = [0, 2, 0], sizes = [8, 16, 32], strides = [1, 1, 1]} : vector<8x18x32xf32> to vector<8x16x32xf32>
    %c2_i32 = arith.constant 2 : i32
    %16 = arith.addi %1, %c2_i32 : i32
    %c0_5 = arith.constant 0 : index
    %17 = arith.index_cast %16 : i32 to index
    %c0_6 = arith.constant 0 : index
    %c0_7 = arith.constant 0 : index
    %18 = vector.load %arg2[%c0_5, %17, %c0_6, %c0_7] : memref<1x18x18x32xf32, #tpu.memory_space<vmem>>, vector<1x8x18x32xf32>
    %19 = vector.shape_cast %18 : vector<1x8x18x32xf32> to vector<8x18x32xf32>
    %20 = vector.extract_strided_slice %19 {offsets = [0, 0, 0], sizes = [8, 16, 32], strides = [1, 1, 1]} : vector<8x18x32xf32> to vector<8x16x32xf32>
    %21 = vector.extract_strided_slice %19 {offsets = [0, 1, 0], sizes = [8, 16, 32], strides = [1, 1, 1]} : vector<8x18x32xf32> to vector<8x16x32xf32>
    %22 = vector.extract_strided_slice %19 {offsets = [0, 2, 0], sizes = [8, 16, 32], strides = [1, 1, 1]} : vector<8x18x32xf32> to vector<8x16x32xf32>
    %23 = tpu.concatenate %6, %7, %8, %13, %14, %15, %20, %21, %22 in 2 : vector<8x16x32xf32>, vector<8x16x32xf32>, vector<8x16x32xf32>, vector<8x16x32xf32>, vector<8x16x32xf32>, vector<8x16x32xf32>, vector<8x16x32xf32>, vector<8x16x32xf32>, vector<8x16x32xf32> -> vector<8x16x288xf32>
    %24 = vector.shape_cast %23 : vector<8x16x288xf32> to vector<128x288xf32>
    %c0_8 = arith.constant 0 : index
    %c0_9 = arith.constant 0 : index
    %25 = vector.load %arg3[%c0_8, %c0_9] : memref<288x64xf32, #tpu.memory_space<vmem>>, vector<288x64xf32>
    %cst = arith.constant dense<0.000000e+00> : vector<128x64xf32>
    %26 = tpu.matmul %24, %25, %cst {dimension_numbers = #tpu.dot_dimension_numbers<[1], [0], [0], [1], [0, 0, 1, 1], [], []>} : vector<128x288xf32>, vector<288x64xf32>, vector<128x64xf32> -> vector<128x64xf32>
    %c0_10 = arith.constant 0 : index
    %c0_11 = arith.constant 0 : index
    %27 = vector.load %arg4[%c0_10, %c0_11] : memref<128x64xf32, #tpu.memory_space<vmem>>, vector<128x64xf32>
    tpu.vector_store %arg4[%c0_10, %c0_11], %26 {strides = array<i32>} : memref<128x64xf32, #tpu.memory_space<vmem>>, vector<128x64xf32>,
    %c0_i32_12 = arith.constant 0 : i32
    %28 = arith.cmpi eq, %arg1, %c0_i32_12 : i32
    %29 = arith.extui %28 : i1 to i32
    %c0_i32_13 = arith.constant 0 : i32
    %30 = arith.cmpi ne, %29, %c0_i32_13 : i32
    scf.if %30 {
      %cst_28 = arith.constant 0.000000e+00 : f32
      %44 = vector.broadcast %cst_28 : f32 to vector<1x1x64xf32>
      %c0_29 = arith.constant 0 : index
      %c0_30 = arith.constant 0 : index
      %c0_31 = arith.constant 0 : index
      %45 = vector.load %arg5[%c0_29, %c0_30, %c0_31] : memref<1x1x64xf32, #tpu.memory_space<vmem>>, vector<1x1x64xf32>
      tpu.vector_store %arg5[%c0_29, %c0_30, %c0_31], %44 {strides = array<i32>} : memref<1x1x64xf32, #tpu.memory_space<vmem>>, vector<1x1x64xf32>,
      %cst_32 = arith.constant 0.000000e+00 : f32
      %46 = vector.broadcast %cst_32 : f32 to vector<1x1x64xf32>
      %c0_33 = arith.constant 0 : index
      %c0_34 = arith.constant 0 : index
      %c0_35 = arith.constant 0 : index
      %47 = vector.load %arg6[%c0_33, %c0_34, %c0_35] : memref<1x1x64xf32, #tpu.memory_space<vmem>>, vector<1x1x64xf32>
      tpu.vector_store %arg6[%c0_33, %c0_34, %c0_35], %46 {strides = array<i32>} : memref<1x1x64xf32, #tpu.memory_space<vmem>>, vector<1x1x64xf32>,
    } else {
    }
    %c0_14 = arith.constant 0 : index
    %c0_15 = arith.constant 0 : index
    %c0_16 = arith.constant 0 : index
    %31 = vector.load %arg5[%c0_14, %c0_15, %c0_16] : memref<1x1x64xf32, #tpu.memory_space<vmem>>, vector<1x1x64xf32>
    %cst_17 = arith.constant dense<0.000000e+00> : vector<64xf32>
    %32 = vector.multi_reduction <add>, %26, %cst_17 [0] : vector<128x64xf32> to vector<64xf32>
    %33 = vector.shape_cast %32 : vector<64xf32> to vector<1x64xf32>
    %34 = vector.shape_cast %33 : vector<1x64xf32> to vector<1x1x64xf32>
    %35 = arith.addf %31, %34 : vector<1x1x64xf32>
    %c0_18 = arith.constant 0 : index
    %c0_19 = arith.constant 0 : index
    %c0_20 = arith.constant 0 : index
    %36 = vector.load %arg5[%c0_18, %c0_19, %c0_20] : memref<1x1x64xf32, #tpu.memory_space<vmem>>, vector<1x1x64xf32>
    tpu.vector_store %arg5[%c0_18, %c0_19, %c0_20], %35 {strides = array<i32>} : memref<1x1x64xf32, #tpu.memory_space<vmem>>, vector<1x1x64xf32>,
    %c0_21 = arith.constant 0 : index
    %c0_22 = arith.constant 0 : index
    %c0_23 = arith.constant 0 : index
    %37 = vector.load %arg6[%c0_21, %c0_22, %c0_23] : memref<1x1x64xf32, #tpu.memory_space<vmem>>, vector<1x1x64xf32>
    %38 = arith.mulf %26, %26 : vector<128x64xf32>
    %cst_24 = arith.constant dense<0.000000e+00> : vector<64xf32>
    %39 = vector.multi_reduction <add>, %38, %cst_24 [0] : vector<128x64xf32> to vector<64xf32>
    %40 = vector.shape_cast %39 : vector<64xf32> to vector<1x64xf32>
    %41 = vector.shape_cast %40 : vector<1x64xf32> to vector<1x1x64xf32>
    %42 = arith.addf %37, %41 : vector<1x1x64xf32>
    %c0_25 = arith.constant 0 : index
    %c0_26 = arith.constant 0 : index
    %c0_27 = arith.constant 0 : index
    %43 = vector.load %arg6[%c0_25, %c0_26, %c0_27] : memref<1x1x64xf32, #tpu.memory_space<vmem>>, vector<1x1x64xf32>
    tpu.vector_store %arg6[%c0_25, %c0_26, %c0_27], %42 {strides = array<i32>} : memref<1x1x64xf32, #tpu.memory_space<vmem>>, vector<1x1x64xf32>,
    return
  }
  func.func @transform_0(%arg0: i32, %arg1: i32) -> (i32, i32, i32, i32) {
    %c0_i32 = arith.constant 0 : i32
    %c0_i32_0 = arith.constant 0 : i32
    %c0_i32_1 = arith.constant 0 : i32
    %c0_i32_2 = arith.constant 0 : i32
    return %arg0, %c0_i32, %c0_i32_0, %c0_i32_1 : i32, i32, i32, i32
  }
  func.func @transform_1(%arg0: i32, %arg1: i32) -> (i32, i32) {
    %c0_i32 = arith.constant 0 : i32
    %c0_i32_0 = arith.constant 0 : i32
    %c0_i32_1 = arith.constant 0 : i32
    return %c0_i32, %c0_i32_0 : i32, i32
  }
  func.func @transform_2(%arg0: i32, %arg1: i32) -> (i32, i32) {
    %c2_i32 = arith.constant 2 : i32
    %0 = arith.muli %arg0, %c2_i32 : i32
    %1 = arith.addi %0, %arg1 : i32
    %c0_i32 = arith.constant 0 : i32
    %c0_i32_0 = arith.constant 0 : i32
    return %1, %c0_i32 : i32, i32
  }
  func.func @transform_3(%arg0: i32, %arg1: i32) -> (i32, i32, i32) {
    %c0_i32 = arith.constant 0 : i32
    %c0_i32_0 = arith.constant 0 : i32
    %c0_i32_1 = arith.constant 0 : i32
    return %arg0, %c0_i32, %c0_i32_0 : i32, i32, i32
  }
  func.func @transform_4(%arg0: i32, %arg1: i32) -> (i32, i32, i32) {
    %c0_i32 = arith.constant 0 : i32
    %c0_i32_0 = arith.constant 0 : i32
    %c0_i32_1 = arith.constant 0 : i32
    return %arg0, %c0_i32, %c0_i32_0 : i32, i32, i32
  }
}

module attributes {stable_mosaic.version = 11 : i64} {
  func.func @_conv_stats_kernel(%arg0: i32, %arg1: i32, %arg2: memref<1x18x18x64xf32, #tpu.memory_space<vmem>>, %arg3: memref<576x64xf32, #tpu.memory_space<vmem>>, %arg4: memref<128x64xf32, #tpu.memory_space<vmem>>, %arg5: memref<1x1x64xf32, #tpu.memory_space<vmem>>, %arg6: memref<1x1x64xf32, #tpu.memory_space<vmem>>) attributes {dimension_semantics = [#tpu.dimension_semantics<parallel>, #tpu.dimension_semantics<arbitrary>], iteration_bounds = array<i64: 2, 2>, scalar_prefetch = 0 : i64, scratch_operands = 0 : i64, tpu.core_type = #tpu.core_type<tc>, window_params = [{transform_indices = @transform_0, window_bounds = array<i64: 1, 18, 18, 64>}, {pipeline_mode = #tpu.pipeline_mode<synchronous>, transform_indices = @transform_1, window_bounds = array<i64: 576, 64>}, {transform_indices = @transform_2, window_bounds = array<i64: 128, 64>}, {transform_indices = @transform_3, window_bounds = array<i64: 1, 1, 64>}, {transform_indices = @transform_4, window_bounds = array<i64: 1, 1, 64>}]} {
    %c8_i32 = arith.constant 8 : i32
    %0 = arith.muli %arg1, %c8_i32 : i32
    %1 = tpu.assume_multiple %0, 8 : i32
    %c0_i32 = arith.constant 0 : i32
    %2 = arith.addi %1, %c0_i32 : i32
    %c0 = arith.constant 0 : index
    %3 = arith.index_cast %2 : i32 to index
    %c0_0 = arith.constant 0 : index
    %c0_1 = arith.constant 0 : index
    %4 = vector.load %arg2[%c0, %3, %c0_0, %c0_1] : memref<1x18x18x64xf32, #tpu.memory_space<vmem>>, vector<1x8x18x64xf32>
    %5 = vector.shape_cast %4 : vector<1x8x18x64xf32> to vector<8x18x64xf32>
    %6 = vector.extract_strided_slice %5 {offsets = [0, 0, 0], sizes = [8, 16, 64], strides = [1, 1, 1]} : vector<8x18x64xf32> to vector<8x16x64xf32>
    %7 = vector.extract_strided_slice %5 {offsets = [0, 1, 0], sizes = [8, 16, 64], strides = [1, 1, 1]} : vector<8x18x64xf32> to vector<8x16x64xf32>
    %8 = vector.extract_strided_slice %5 {offsets = [0, 2, 0], sizes = [8, 16, 64], strides = [1, 1, 1]} : vector<8x18x64xf32> to vector<8x16x64xf32>
    %c1_i32 = arith.constant 1 : i32
    %9 = arith.addi %1, %c1_i32 : i32
    %c0_2 = arith.constant 0 : index
    %10 = arith.index_cast %9 : i32 to index
    %c0_3 = arith.constant 0 : index
    %c0_4 = arith.constant 0 : index
    %11 = vector.load %arg2[%c0_2, %10, %c0_3, %c0_4] : memref<1x18x18x64xf32, #tpu.memory_space<vmem>>, vector<1x8x18x64xf32>
    %12 = vector.shape_cast %11 : vector<1x8x18x64xf32> to vector<8x18x64xf32>
    %13 = vector.extract_strided_slice %12 {offsets = [0, 0, 0], sizes = [8, 16, 64], strides = [1, 1, 1]} : vector<8x18x64xf32> to vector<8x16x64xf32>
    %14 = vector.extract_strided_slice %12 {offsets = [0, 1, 0], sizes = [8, 16, 64], strides = [1, 1, 1]} : vector<8x18x64xf32> to vector<8x16x64xf32>
    %15 = vector.extract_strided_slice %12 {offsets = [0, 2, 0], sizes = [8, 16, 64], strides = [1, 1, 1]} : vector<8x18x64xf32> to vector<8x16x64xf32>
    %c2_i32 = arith.constant 2 : i32
    %16 = arith.addi %1, %c2_i32 : i32
    %c0_5 = arith.constant 0 : index
    %17 = arith.index_cast %16 : i32 to index
    %c0_6 = arith.constant 0 : index
    %c0_7 = arith.constant 0 : index
    %18 = vector.load %arg2[%c0_5, %17, %c0_6, %c0_7] : memref<1x18x18x64xf32, #tpu.memory_space<vmem>>, vector<1x8x18x64xf32>
    %19 = vector.shape_cast %18 : vector<1x8x18x64xf32> to vector<8x18x64xf32>
    %20 = vector.extract_strided_slice %19 {offsets = [0, 0, 0], sizes = [8, 16, 64], strides = [1, 1, 1]} : vector<8x18x64xf32> to vector<8x16x64xf32>
    %21 = vector.extract_strided_slice %19 {offsets = [0, 1, 0], sizes = [8, 16, 64], strides = [1, 1, 1]} : vector<8x18x64xf32> to vector<8x16x64xf32>
    %22 = vector.extract_strided_slice %19 {offsets = [0, 2, 0], sizes = [8, 16, 64], strides = [1, 1, 1]} : vector<8x18x64xf32> to vector<8x16x64xf32>
    %23 = tpu.concatenate %6, %7, %8, %13, %14, %15, %20, %21, %22 in 2 : vector<8x16x64xf32>, vector<8x16x64xf32>, vector<8x16x64xf32>, vector<8x16x64xf32>, vector<8x16x64xf32>, vector<8x16x64xf32>, vector<8x16x64xf32>, vector<8x16x64xf32>, vector<8x16x64xf32> -> vector<8x16x576xf32>
    %24 = vector.shape_cast %23 : vector<8x16x576xf32> to vector<128x576xf32>
    %c0_8 = arith.constant 0 : index
    %c0_9 = arith.constant 0 : index
    %25 = vector.load %arg3[%c0_8, %c0_9] : memref<576x64xf32, #tpu.memory_space<vmem>>, vector<576x64xf32>
    %cst = arith.constant dense<0.000000e+00> : vector<128x64xf32>
    %26 = tpu.matmul %24, %25, %cst {dimension_numbers = #tpu.dot_dimension_numbers<[1], [0], [0], [1], [0, 0, 1, 1], [], []>} : vector<128x576xf32>, vector<576x64xf32>, vector<128x64xf32> -> vector<128x64xf32>
    %c0_10 = arith.constant 0 : index
    %c0_11 = arith.constant 0 : index
    %27 = vector.load %arg4[%c0_10, %c0_11] : memref<128x64xf32, #tpu.memory_space<vmem>>, vector<128x64xf32>
    tpu.vector_store %arg4[%c0_10, %c0_11], %26 {strides = array<i32>} : memref<128x64xf32, #tpu.memory_space<vmem>>, vector<128x64xf32>,
    %c0_i32_12 = arith.constant 0 : i32
    %28 = arith.cmpi eq, %arg1, %c0_i32_12 : i32
    %29 = arith.extui %28 : i1 to i32
    %c0_i32_13 = arith.constant 0 : i32
    %30 = arith.cmpi ne, %29, %c0_i32_13 : i32
    scf.if %30 {
      %cst_28 = arith.constant 0.000000e+00 : f32
      %44 = vector.broadcast %cst_28 : f32 to vector<1x1x64xf32>
      %c0_29 = arith.constant 0 : index
      %c0_30 = arith.constant 0 : index
      %c0_31 = arith.constant 0 : index
      %45 = vector.load %arg5[%c0_29, %c0_30, %c0_31] : memref<1x1x64xf32, #tpu.memory_space<vmem>>, vector<1x1x64xf32>
      tpu.vector_store %arg5[%c0_29, %c0_30, %c0_31], %44 {strides = array<i32>} : memref<1x1x64xf32, #tpu.memory_space<vmem>>, vector<1x1x64xf32>,
      %cst_32 = arith.constant 0.000000e+00 : f32
      %46 = vector.broadcast %cst_32 : f32 to vector<1x1x64xf32>
      %c0_33 = arith.constant 0 : index
      %c0_34 = arith.constant 0 : index
      %c0_35 = arith.constant 0 : index
      %47 = vector.load %arg6[%c0_33, %c0_34, %c0_35] : memref<1x1x64xf32, #tpu.memory_space<vmem>>, vector<1x1x64xf32>
      tpu.vector_store %arg6[%c0_33, %c0_34, %c0_35], %46 {strides = array<i32>} : memref<1x1x64xf32, #tpu.memory_space<vmem>>, vector<1x1x64xf32>,
    } else {
    }
    %c0_14 = arith.constant 0 : index
    %c0_15 = arith.constant 0 : index
    %c0_16 = arith.constant 0 : index
    %31 = vector.load %arg5[%c0_14, %c0_15, %c0_16] : memref<1x1x64xf32, #tpu.memory_space<vmem>>, vector<1x1x64xf32>
    %cst_17 = arith.constant dense<0.000000e+00> : vector<64xf32>
    %32 = vector.multi_reduction <add>, %26, %cst_17 [0] : vector<128x64xf32> to vector<64xf32>
    %33 = vector.shape_cast %32 : vector<64xf32> to vector<1x64xf32>
    %34 = vector.shape_cast %33 : vector<1x64xf32> to vector<1x1x64xf32>
    %35 = arith.addf %31, %34 : vector<1x1x64xf32>
    %c0_18 = arith.constant 0 : index
    %c0_19 = arith.constant 0 : index
    %c0_20 = arith.constant 0 : index
    %36 = vector.load %arg5[%c0_18, %c0_19, %c0_20] : memref<1x1x64xf32, #tpu.memory_space<vmem>>, vector<1x1x64xf32>
    tpu.vector_store %arg5[%c0_18, %c0_19, %c0_20], %35 {strides = array<i32>} : memref<1x1x64xf32, #tpu.memory_space<vmem>>, vector<1x1x64xf32>,
    %c0_21 = arith.constant 0 : index
    %c0_22 = arith.constant 0 : index
    %c0_23 = arith.constant 0 : index
    %37 = vector.load %arg6[%c0_21, %c0_22, %c0_23] : memref<1x1x64xf32, #tpu.memory_space<vmem>>, vector<1x1x64xf32>
    %38 = arith.mulf %26, %26 : vector<128x64xf32>
    %cst_24 = arith.constant dense<0.000000e+00> : vector<64xf32>
    %39 = vector.multi_reduction <add>, %38, %cst_24 [0] : vector<128x64xf32> to vector<64xf32>
    %40 = vector.shape_cast %39 : vector<64xf32> to vector<1x64xf32>
    %41 = vector.shape_cast %40 : vector<1x64xf32> to vector<1x1x64xf32>
    %42 = arith.addf %37, %41 : vector<1x1x64xf32>
    %c0_25 = arith.constant 0 : index
    %c0_26 = arith.constant 0 : index
    %c0_27 = arith.constant 0 : index
    %43 = vector.load %arg6[%c0_25, %c0_26, %c0_27] : memref<1x1x64xf32, #tpu.memory_space<vmem>>, vector<1x1x64xf32>
    tpu.vector_store %arg6[%c0_25, %c0_26, %c0_27], %42 {strides = array<i32>} : memref<1x1x64xf32, #tpu.memory_space<vmem>>, vector<1x1x64xf32>,
    return
  }
  func.func @transform_0(%arg0: i32, %arg1: i32) -> (i32, i32, i32, i32) {
    %c0_i32 = arith.constant 0 : i32
    %c0_i32_0 = arith.constant 0 : i32
    %c0_i32_1 = arith.constant 0 : i32
    %c0_i32_2 = arith.constant 0 : i32
    return %arg0, %c0_i32, %c0_i32_0, %c0_i32_1 : i32, i32, i32, i32
  }
  func.func @transform_1(%arg0: i32, %arg1: i32) -> (i32, i32) {
    %c0_i32 = arith.constant 0 : i32
    %c0_i32_0 = arith.constant 0 : i32
    %c0_i32_1 = arith.constant 0 : i32
    return %c0_i32, %c0_i32_0 : i32, i32
  }
  func.func @transform_2(%arg0: i32, %arg1: i32) -> (i32, i32) {
    %c2_i32 = arith.constant 2 : i32
    %0 = arith.muli %arg0, %c2_i32 : i32
    %1 = arith.addi %0, %arg1 : i32
    %c0_i32 = arith.constant 0 : i32
    %c0_i32_0 = arith.constant 0 : i32
    return %1, %c0_i32 : i32, i32
  }
  func.func @transform_3(%arg0: i32, %arg1: i32) -> (i32, i32, i32) {
    %c0_i32 = arith.constant 0 : i32
    %c0_i32_0 = arith.constant 0 : i32
    %c0_i32_1 = arith.constant 0 : i32
    return %arg0, %c0_i32, %c0_i32_0 : i32, i32, i32
  }
  func.func @transform_4(%arg0: i32, %arg1: i32) -> (i32, i32, i32) {
    %c0_i32 = arith.constant 0 : i32
    %c0_i32_0 = arith.constant 0 : i32
    %c0_i32_1 = arith.constant 0 : i32
    return %arg0, %c0_i32, %c0_i32_0 : i32, i32, i32
  }
}

module attributes {stable_mosaic.version = 11 : i64} {
  func.func @_bn_relu_pad_kernel(%arg0: i32, %arg1: memref<256x64xf32, #tpu.memory_space<vmem>>, %arg2: memref<1x64xf32, #tpu.memory_space<vmem>>, %arg3: memref<1x64xf32, #tpu.memory_space<vmem>>, %arg4: memref<1x18x18x64xf32, #tpu.memory_space<vmem>>) attributes {dimension_semantics = [#tpu.dimension_semantics<parallel>], iteration_bounds = array<i64: 2>, scalar_prefetch = 0 : i64, scratch_operands = 0 : i64, tpu.core_type = #tpu.core_type<tc>, window_params = [{transform_indices = @transform_0, window_bounds = array<i64: 256, 64>}, {pipeline_mode = #tpu.pipeline_mode<synchronous>, transform_indices = @transform_1, window_bounds = array<i64: 1, 64>}, {pipeline_mode = #tpu.pipeline_mode<synchronous>, transform_indices = @transform_2, window_bounds = array<i64: 1, 64>}, {transform_indices = @transform_3, window_bounds = array<i64: 1, 18, 18, 64>}]} {
    %c0 = arith.constant 0 : index
    %c0_0 = arith.constant 0 : index
    %0 = vector.load %arg1[%c0, %c0_0] : memref<256x64xf32, #tpu.memory_space<vmem>>, vector<256x64xf32>
    %c0_1 = arith.constant 0 : index
    %c0_2 = arith.constant 0 : index
    %1 = vector.load %arg2[%c0_1, %c0_2] : memref<1x64xf32, #tpu.memory_space<vmem>>, vector<1x64xf32>
    %2 = vector.broadcast %1 : vector<1x64xf32> to vector<256x64xf32>
    %3 = arith.mulf %0, %2 : vector<256x64xf32>
    %c0_3 = arith.constant 0 : index
    %c0_4 = arith.constant 0 : index
    %4 = vector.load %arg3[%c0_3, %c0_4] : memref<1x64xf32, #tpu.memory_space<vmem>>, vector<1x64xf32>
    %5 = vector.broadcast %4 : vector<1x64xf32> to vector<256x64xf32>
    %6 = arith.addf %3, %5 : vector<256x64xf32>
    %cst = arith.constant 0.000000e+00 : f32
    %7 = vector.broadcast %cst : f32 to vector<256x64xf32>
    %8 = arith.maximumf %6, %7 : vector<256x64xf32>
    %cst_5 = arith.constant 0.000000e+00 : f32
    %9 = vector.broadcast %cst_5 : f32 to vector<1x18x18x64xf32>
    %c0_6 = arith.constant 0 : index
    %c0_7 = arith.constant 0 : index
    %c0_8 = arith.constant 0 : index
    %c0_9 = arith.constant 0 : index
    %10 = vector.load %arg4[%c0_6, %c0_7, %c0_8, %c0_9] : memref<1x18x18x64xf32, #tpu.memory_space<vmem>>, vector<1x18x18x64xf32>
    tpu.vector_store %arg4[%c0_6, %c0_7, %c0_8, %c0_9], %9 {strides = array<i32>} : memref<1x18x18x64xf32, #tpu.memory_space<vmem>>, vector<1x18x18x64xf32>,
    %11 = vector.shape_cast %8 : vector<256x64xf32> to vector<16x16x64xf32>
    %c0_10 = arith.constant 0 : index
    %c1 = arith.constant 1 : index
    %c1_11 = arith.constant 1 : index
    %c0_12 = arith.constant 0 : index
    %12 = vector.load %arg4[%c0_10, %c1, %c1_11, %c0_12] : memref<1x18x18x64xf32, #tpu.memory_space<vmem>>, vector<1x16x16x64xf32>
    %13 = vector.shape_cast %12 : vector<1x16x16x64xf32> to vector<16x16x64xf32>
    %14 = vector.shape_cast %11 : vector<16x16x64xf32> to vector<1x16x16x64xf32>
    tpu.vector_store %arg4[%c0_10, %c1, %c1_11, %c0_12], %14 {strides = array<i32>} : memref<1x18x18x64xf32, #tpu.memory_space<vmem>>, vector<1x16x16x64xf32>,
    return
  }
  func.func @transform_0(%arg0: i32) -> (i32, i32) {
    %c0_i32 = arith.constant 0 : i32
    %c0_i32_0 = arith.constant 0 : i32
    return %arg0, %c0_i32 : i32, i32
  }
  func.func @transform_1(%arg0: i32) -> (i32, i32) {
    %c0_i32 = arith.constant 0 : i32
    %c0_i32_0 = arith.constant 0 : i32
    %c0_i32_1 = arith.constant 0 : i32
    return %c0_i32, %c0_i32_0 : i32, i32
  }
  func.func @transform_2(%arg0: i32) -> (i32, i32) {
    %c0_i32 = arith.constant 0 : i32
    %c0_i32_0 = arith.constant 0 : i32
    %c0_i32_1 = arith.constant 0 : i32
    return %c0_i32, %c0_i32_0 : i32, i32
  }
  func.func @transform_3(%arg0: i32) -> (i32, i32, i32, i32) {
    %c0_i32 = arith.constant 0 : i32
    %c0_i32_0 = arith.constant 0 : i32
    %c0_i32_1 = arith.constant 0 : i32
    %c0_i32_2 = arith.constant 0 : i32
    return %arg0, %c0_i32, %c0_i32_0, %c0_i32_1 : i32, i32, i32, i32
  }
}

module attributes {stable_mosaic.version = 11 : i64} {
  func.func @_bn_relu_kernel(%arg0: i32, %arg1: memref<128x64xf32, #tpu.memory_space<vmem>>, %arg2: memref<1x64xf32, #tpu.memory_space<vmem>>, %arg3: memref<1x64xf32, #tpu.memory_space<vmem>>, %arg4: memref<128x64xf32, #tpu.memory_space<vmem>>) attributes {dimension_semantics = [#tpu.dimension_semantics<parallel>], iteration_bounds = array<i64: 4>, scalar_prefetch = 0 : i64, scratch_operands = 0 : i64, tpu.core_type = #tpu.core_type<tc>, window_params = [{transform_indices = @transform_0, window_bounds = array<i64: 128, 64>}, {pipeline_mode = #tpu.pipeline_mode<synchronous>, transform_indices = @transform_1, window_bounds = array<i64: 1, 64>}, {pipeline_mode = #tpu.pipeline_mode<synchronous>, transform_indices = @transform_2, window_bounds = array<i64: 1, 64>}, {transform_indices = @transform_3, window_bounds = array<i64: 128, 64>}]} {
    %c0 = arith.constant 0 : index
    %c0_0 = arith.constant 0 : index
    %0 = vector.load %arg1[%c0, %c0_0] : memref<128x64xf32, #tpu.memory_space<vmem>>, vector<128x64xf32>
    %c0_1 = arith.constant 0 : index
    %c0_2 = arith.constant 0 : index
    %1 = vector.load %arg2[%c0_1, %c0_2] : memref<1x64xf32, #tpu.memory_space<vmem>>, vector<1x64xf32>
    %2 = vector.broadcast %1 : vector<1x64xf32> to vector<128x64xf32>
    %3 = arith.mulf %0, %2 : vector<128x64xf32>
    %c0_3 = arith.constant 0 : index
    %c0_4 = arith.constant 0 : index
    %4 = vector.load %arg3[%c0_3, %c0_4] : memref<1x64xf32, #tpu.memory_space<vmem>>, vector<1x64xf32>
    %5 = vector.broadcast %4 : vector<1x64xf32> to vector<128x64xf32>
    %6 = arith.addf %3, %5 : vector<128x64xf32>
    %cst = arith.constant 0.000000e+00 : f32
    %7 = vector.broadcast %cst : f32 to vector<128x64xf32>
    %8 = arith.maximumf %6, %7 : vector<128x64xf32>
    %c0_5 = arith.constant 0 : index
    %c0_6 = arith.constant 0 : index
    %9 = vector.load %arg4[%c0_5, %c0_6] : memref<128x64xf32, #tpu.memory_space<vmem>>, vector<128x64xf32>
    tpu.vector_store %arg4[%c0_5, %c0_6], %8 {strides = array<i32>} : memref<128x64xf32, #tpu.memory_space<vmem>>, vector<128x64xf32>,
    return
  }
  func.func @transform_0(%arg0: i32) -> (i32, i32) {
    %c0_i32 = arith.constant 0 : i32
    %c0_i32_0 = arith.constant 0 : i32
    return %arg0, %c0_i32 : i32, i32
  }
  func.func @transform_1(%arg0: i32) -> (i32, i32) {
    %c0_i32 = arith.constant 0 : i32
    %c0_i32_0 = arith.constant 0 : i32
    %c0_i32_1 = arith.constant 0 : i32
    return %c0_i32, %c0_i32_0 : i32, i32
  }
  func.func @transform_2(%arg0: i32) -> (i32, i32) {
    %c0_i32 = arith.constant 0 : i32
    %c0_i32_0 = arith.constant 0 : i32
    %c0_i32_1 = arith.constant 0 : i32
    return %c0_i32, %c0_i32_0 : i32, i32
  }
  func.func @transform_3(%arg0: i32) -> (i32, i32) {
    %c0_i32 = arith.constant 0 : i32
    %c0_i32_0 = arith.constant 0 : i32
    return %arg0, %c0_i32 : i32, i32
  }
}

</mosaic_0001>

<llo_original>
// kernel: bottleneck_forward.7
$region0: #{bottleneck_forward.7}
  #allocation0 [shape = 'u32[]', space=smem, size = 0x4, offset = 0x4, fixed_abs, tag = 'smem constant byte address 0x4 - core index']
  #allocation1 [shape = 'u32[144,128]{1,0:T(1,128)}', space=vmem, size = 0x12000, scoped, tag = 'internal scratch']
  %s0 = inlined_call_operand.hbm [shape: f32[512,64], index: 0, kind: input, shape index: {}]
  %s1 = inlined_call_operand.vmem [shape: f32[1,64], index: 1, kind: input, shape index: {}]
  %s2 = inlined_call_operand.vmem [shape: f32[1,64], index: 2, kind: input, shape index: {}]
  %s3 = inlined_call_operand.hbm [shape: f32[512,64], index: 3, kind: output, shape index: {}]
  %s4 = sld [smem:[#allocation0]]
  $region49: #{bottleneck_forward.7} parent=0
    _
  %s6 = ssub.s32 1, %s4
  %s7 = scalar_select 0, %s6, %s4
  $region1: #{bottleneck_forward.7} parent=0
    #allocation2 [shape = 'u8[131072]{0}', space=vmem, size = 0x20000, scoped, tag = 'input window, operand 0']
    #allocation3 [shape = 's32[2]{0}', space=sflag, size = 0x8, scoped, tag = 'scoped memory for bottleneck_forward.7']
    #allocation4 [shape = 's32[2]{0}', space=sflag, size = 0x8, scoped, tag = 'scoped memory for bottleneck_forward.7']
    #allocation5 [shape = 'u8[131072]{0}', space=vmem, size = 0x20000, scoped, tag = 'output window, operand 0']
    %8 = vsyncpa [#allocation3], 0
    %s9 = scalar_lea.sflag [#allocation3], 1
    %10 = vsyncpa %s9, 0
    %11 = vsyncpa [#allocation4], 0
    %s12 = scalar_lea.sflag [#allocation4], 1
    %13 = vsyncpa %s12, 0
    loop: start=0, step=1, limit=6
    $region2: #{bottleneck_forward.7} parent=1 // loop_pre_header
      _
    $region3: #{bottleneck_forward.7} parent=1 // loop_header
      %s15 = sphi 0, %s19
      %p16 = scmp.ge.s32.totalorder %s15, 6
      %s25 = sphi 0, %s27
      %s28 = sphi 0, %s25
      %s29 = sphi 0, %s28
      %s45 = sphi 0, %s29
      %s49 = sphi 0, %s49
      %s51 = sphi 0, %s49
      %s52 = sphi 0, %s51
      %s66 = sphi 0, %s52
      %s70 = sphi 0, %s70
      %s72 = sphi 0, %s70
      %s73 = sphi 0, %s72
      %s87 = sphi 0, %s73
      %s93 = sphi 0, %s95
      %s96 = sphi 0, %s93
      %s97 = sphi 0, %s96
      %s113 = sphi 0, %s97
    $region4: #{bottleneck_forward.7} parent=1 // loop_header_branch
      %18 = sbr.rel (%p16) target = $region8
    $region5: #{bottleneck_forward.7} parent=1 // loop_body
      %s20 = ssub.s32 %s15, 1
      %s21 = ssub.s32 %s15, 2
      %s22 = sadd.s32 %s15, 1
      %s23 = ssub.s32 %s15, %s22
      %p24 = scmp.eq.s32.totalorder %s23, 0
      %s26 = sadd.s32 %s25, 1
      %s27 = scalar_select %p24, %s25, %s26
      %p30 = pneg %p24
      %p31 = scmp.eq.s32.totalorder %s15, 3
      %p32 = por %p30, %p31
      %p33 = scmp.ne.s32.totalorder %s25, %s28
      %p34 = scmp.eq.s32.totalorder %s15, 0
      %p35 = por %p33, %p34
      %p36 = scmp.ne.s32.totalorder %s25, %s28
      %p37 = scmp.eq.s32.totalorder %s20, 3
      %p38 = por %p36, %p37
      %p39 = scmp.ne.s32.totalorder %s28, %s29
      %p40 = scmp.eq.s32.totalorder %s20, 0
      %p41 = por %p39, %p40
      %p42 = scmp.ne.s32.totalorder %s28, %s29
      %p43 = scmp.eq.s32.totalorder %s21, 3
      %p44 = por %p42, %p43
      %p46 = scmp.ne.s32.totalorder %s29, %s45
      %p47 = scmp.eq.s32.totalorder %s21, 0
      %p48 = por %p46, %p47
      %s50 = sadd.s32 %s49, 1
      %p53 = scmp.eq.s32.totalorder %s15, 3
      %p54 = scmp.ne.s32.totalorder %s49, %s51
      %p55 = scmp.eq.s32.totalorder %s15, 0
      %p56 = por %p54, %p55
      %p57 = scmp.ne.s32.totalorder %s49, %s51
      %p58 = scmp.eq.s32.totalorder %s20, 3
      %p59 = por %p57, %p58
      %p60 = scmp.ne.s32.totalorder %s51, %s52
      %p61 = scmp.eq.s32.totalorder %s20, 0
      %p62 = por %p60, %p61
      %p63 = scmp.ne.s32.totalorder %s51, %s52
      %p64 = scmp.eq.s32.totalorder %s21, 3
      %p65 = por %p63, %p64
      %p67 = scmp.ne.s32.totalorder %s52, %s66
      %p68 = scmp.eq.s32.totalorder %s21, 0
      %p69 = por %p67, %p68
      %s71 = sadd.s32 %s70, 1
      %p74 = scmp.eq.s32.totalorder %s15, 3
      %p75 = scmp.ne.s32.totalorder %s70, %s72
      %p76 = scmp.eq.s32.totalorder %s15, 0
      %p77 = por %p75, %p76
      %p78 = scmp.ne.s32.totalorder %s70, %s72
      %p79 = scmp.eq.s32.totalorder %s20, 3
      %p80 = por %p78, %p79
      %p81 = scmp.ne.s32.totalorder %s72, %s73
      %p82 = scmp.eq.s32.totalorder %s20, 0
      %p83 = por %p81, %p82
      %p84 = scmp.ne.s32.totalorder %s72, %s73
      %p85 = scmp.eq.s32.totalorder %s21, 3
      %p86 = por %p84, %p85
      %p88 = scmp.ne.s32.totalorder %s73, %s87
      %p89 = scmp.eq.s32.totalorder %s21, 0
      %p90 = por %p88, %p89
      %s91 = ssub.s32 %s15, %s22
      %p92 = scmp.eq.s32.totalorder %s91, 0
      %s94 = sadd.s32 %s93, 1
      %s95 = scalar_select %p92, %s93, %s94
      %p98 = pneg %p92
      %p99 = scmp.eq.s32.totalorder %s15, 3
      %p100 = por %p98, %p99
      %p101 = scmp.ne.s32.totalorder %s93, %s96
      %p102 = scmp.eq.s32.totalorder %s15, 0
      %p103 = por %p101, %p102
      %p104 = scmp.ne.s32.totalorder %s93, %s96
      %p105 = scmp.eq.s32.totalorder %s20, 3
      %p106 = por %p104, %p105
      %p107 = scmp.ne.s32.totalorder %s96, %s97
      %p108 = scmp.eq.s32.totalorder %s20, 0
      %p109 = por %p107, %p108
      %p110 = scmp.ne.s32.totalorder %s96, %s97
      %p111 = scmp.eq.s32.totalorder %s21, 3
      %p112 = por %p110, %p111
      %p114 = scmp.ne.s32.totalorder %s97, %s113
      %p115 = scmp.eq.s32.totalorder %s21, 0
      %p116 = por %p114, %p115
      %p117 = scmp.le.s32.totalorder 1, %s15
      %p118 = scmp.lt.s32.totalorder %s15, 5
      %p119 = pnand %p117, %p118
      %p120 = pneg %p119
      // Predicated region
      $region9: #{bottleneck_forward.7} parent=5 // pred_check
        _
      $region10: #{bottleneck_forward.7} parent=5 // pred_check_branch
        %122 = sbr.rel (%p119) target = $region12
      $region11: #{bottleneck_forward.7} parent=5 // pred_region
        %s123 = ssub.s32 %s15, 1
        // Predicated region
        $region13: #{bottleneck_forward.7} parent=11 // pred_check
          %p124 = pneg %p62
        $region14: #{bottleneck_forward.7} parent=11 // pred_check_branch
          %126 = sbr.rel (%p124) target = $region16
        $region15: #{bottleneck_forward.7} parent=11 // pred_region
          _
        $region16: #{bottleneck_forward.7} parent=11 // pred_fallthru
          _
        // Predicated region
        $region17: #{bottleneck_forward.7} parent=11 // pred_check
          %p127 = pneg %p83
        $region18: #{bottleneck_forward.7} parent=11 // pred_check_branch
          %129 = sbr.rel (%p127) target = $region20
        $region19: #{bottleneck_forward.7} parent=11 // pred_region
          _
        $region20: #{bottleneck_forward.7} parent=11 // pred_fallthru
          _
      $region12: #{bottleneck_forward.7} parent=5 // pred_fallthru
        _
      %p130 = scmp.lt.s32.totalorder %s15, 4
      // Predicated region
      $region21: #{bottleneck_forward.7} parent=5 // pred_check
        %p131 = pneg %p130
      $region22: #{bottleneck_forward.7} parent=5 // pred_check_branch
        %133 = sbr.rel (%p131) target = $region24
      $region23: #{bottleneck_forward.7} parent=5 // pred_region
        // Predicated region
        $region25: #{bottleneck_forward.7} parent=23 // pred_check
          %p134 = pneg %p35
        $region26: #{bottleneck_forward.7} parent=23 // pred_check_branch
          %136 = sbr.rel (%p134) target = $region28
        $region27: #{bottleneck_forward.7} parent=23 // pred_region
          %s137 = sand.u32 %s25, 1
          %s138 = scalar_lea.sflag [#allocation3], %s137
          %s139 = sand.u32 %s25, 1
          %s140 = smul.addr %s139, 128
          %s141 = scalar_lea.vmem [#allocation2], %s140
          %s142 = smul.u32 16, %s15
          %s144 = ssub.s32 2048, 2048
          %145 = vsyncadd %s138, %s144
          %s146 = smul.addr %s142, 128
          %s147 = scalar_lea.hbm %s0, %s146
          %s148 = sshll.u32 %s141, 4
          %s149 = int_to_ptr.vmem [resolvable:$true] %s148
          %154 = dma.hbm_to_vmem [thread:$0]  %s147, 2048, %s149, %s138, 128, 128, 8
        $region28: #{bottleneck_forward.7} parent=23 // pred_fallthru
          _
      $region24: #{bottleneck_forward.7} parent=5 // pred_fallthru
        _
      %p155 = scmp.le.s32.totalorder 1, %s15
      %p156 = scmp.lt.s32.totalorder %s15, 5
      %p157 = pnand %p155, %p156
      %p158 = pneg %p157
      // Predicated region
      $region29: #{bottleneck_forward.7} parent=5 // pred_check
        _
      $region30: #{bottleneck_forward.7} parent=5 // pred_check_branch
        %160 = sbr.rel (%p157) target = $region32
      $region31: #{bottleneck_forward.7} parent=5 // pred_region
        %s161 = ssub.s32 %s15, 1
        %s162 = sand.u32 %s28, 1
        %s163 = scalar_lea.sflag [#allocation3], %s162
        %s164 = sand.u32 %s28, 1
        %s165 = smul.addr %s164, 128
        %s166 = scalar_lea.vmem [#allocation2], %s165
        // Predicated region
        $region33: #{bottleneck_forward.7} parent=31 // pred_check
          %p167 = pneg %p41
        $region34: #{bottleneck_forward.7} parent=31 // pred_check_branch
          %169 = sbr.rel (%p167) target = $region36
        $region35: #{bottleneck_forward.7} parent=31 // pred_region
          %170 = dma.done %s163, 2048
        $region36: #{bottleneck_forward.7} parent=31 // pred_fallthru
          _
        %s171 = sand.u32 %s28, 1
        %s172 = scalar_lea.sflag [#allocation3], %s171
        %s173 = sand.u32 %s28, 1
        %s174 = smul.addr %s173, 128
        %s175 = scalar_lea.vmem [#allocation2], %s174
        %p176 = pneg %p41
        %p177 = pneg %p38
        %p178 = pneg %p62
        %p179 = pneg %p59
        %p180 = pneg %p83
        %p181 = pneg %p80
        %p182 = pneg %p109
        %p183 = pneg %p106
        %s184 = sand.u32 %s96, 1
        %s185 = scalar_lea.sflag [#allocation4], %s184
        %s186 = sand.u32 %s96, 1
        %s187 = smul.addr %s186, 128
        %s188 = scalar_lea.vmem [#allocation5], %s187
        %s189 = smul.u32 16, %s20
        %s190 = smul.u32 16, %s20
        %v191 = vld [vmem:[%s166] sm:$0xff]
        %v192 = vld [vmem:[%s166 + $0x8] sm:$0xff]
        %v193 = vld [vmem:[%s166 + $0x10] sm:$0xff]
        %v194 = vld [vmem:[%s166 + $0x18] sm:$0xff]
        %v195 = vld [vmem:[%s166 + $0x20] sm:$0xff]
        %v196 = vld [vmem:[%s166 + $0x28] sm:$0xff]
        %v197 = vld [vmem:[%s166 + $0x30] sm:$0xff]
        %v198 = vld [vmem:[%s166 + $0x38] sm:$0xff]
        %v199 = vld [vmem:[%s166 + $0x40] sm:$0xff]
        %v200 = vld [vmem:[%s166 + $0x48] sm:$0xff]
        %v201 = vld [vmem:[%s166 + $0x50] sm:$0xff]
        %v202 = vld [vmem:[%s166 + $0x58] sm:$0xff]
        %v203 = vld [vmem:[%s166 + $0x60] sm:$0xff]
        %v204 = vld [vmem:[%s166 + $0x68] sm:$0xff]
        %v205 = vld [vmem:[%s166 + $0x70] sm:$0xff]
        %v206 = vld [vmem:[%s166 + $0x78] sm:$0xff]
        %v207 = vld [vmem:[%s1] sm:$0x1]
        %v209 = vlaneseq
        %v210 = vshrl.u32 %v209, 7
        %v211 = vsub.s32 0, %v210
        %v212 = vrot.slane %v207, %v211
        %v214 = vmul.f32 %v191, %v212
        %v215 = vmul.f32 %v192, %v212
        %v216 = vmul.f32 %v193, %v212
        %v217 = vmul.f32 %v194, %v212
        %v218 = vmul.f32 %v195, %v212
        %v219 = vmul.f32 %v196, %v212
        %v220 = vmul.f32 %v197, %v212
        %v221 = vmul.f32 %v198, %v212
        %v222 = vmul.f32 %v199, %v212
        %v223 = vmul.f32 %v200, %v212
        %v224 = vmul.f32 %v201, %v212
        %v225 = vmul.f32 %v202, %v212
        %v226 = vmul.f32 %v203, %v212
        %v227 = vmul.f32 %v204, %v212
        %v228 = vmul.f32 %v205, %v212
        %v229 = vmul.f32 %v206, %v212
        %v230 = vld [vmem:[%s2] sm:$0x1]
        %v232 = vlaneseq
        %v233 = vshrl.u32 %v232, 7
        %v234 = vsub.s32 0, %v233
        %v235 = vrot.slane %v230, %v234
        %v237 = vadd.f32 %v214, %v235
        %v238 = vadd.f32 %v215, %v235
        %v239 = vadd.f32 %v216, %v235
        %v240 = vadd.f32 %v217, %v235
        %v241 = vadd.f32 %v218, %v235
        %v242 = vadd.f32 %v219, %v235
        %v243 = vadd.f32 %v220, %v235
        %v244 = vadd.f32 %v221, %v235
        %v245 = vadd.f32 %v222, %v235
        %v246 = vadd.f32 %v223, %v235
        %v247 = vadd.f32 %v224, %v235
        %v248 = vadd.f32 %v225, %v235
        %v249 = vadd.f32 %v226, %v235
        %v250 = vadd.f32 %v227, %v235
        %v251 = vadd.f32 %v228, %v235
        %v252 = vadd.f32 %v229, %v235
        %v253 = vmax.f32 %v237, 0.0
        %v254 = vmax.f32 %v238, 0.0
        %v255 = vmax.f32 %v239, 0.0
        %v256 = vmax.f32 %v240, 0.0
        %v257 = vmax.f32 %v241, 0.0
        %v258 = vmax.f32 %v242, 0.0
        %v259 = vmax.f32 %v243, 0.0
        %v260 = vmax.f32 %v244, 0.0
        %v261 = vmax.f32 %v245, 0.0
        %v262 = vmax.f32 %v246, 0.0
        %v263 = vmax.f32 %v247, 0.0
        %v264 = vmax.f32 %v248, 0.0
        %v265 = vmax.f32 %v249, 0.0
        %v266 = vmax.f32 %v250, 0.0
        %v267 = vmax.f32 %v251, 0.0
        %v268 = vmax.f32 %v252, 0.0
        %vm269 = vcmask 523264
        %270 = vst.msk [vmem:[%s188] sm:$0xff] %vm269, %v253
        %271 = vst.msk [vmem:[%s188 + $0x8] sm:$0xff] %vm269, %v254
        %272 = vst.msk [vmem:[%s188 + $0x10] sm:$0xff] %vm269, %v255
        %273 = vst.msk [vmem:[%s188 + $0x18] sm:$0xff] %vm269, %v256
        %274 = vst.msk [vmem:[%s188 + $0x20] sm:$0xff] %vm269, %v257
        %275 = vst.msk [vmem:[%s188 + $0x28] sm:$0xff] %vm269, %v258
        %276 = vst.msk [vmem:[%s188 + $0x30] sm:$0xff] %vm269, %v259
        %277 = vst.msk [vmem:[%s188 + $0x38] sm:$0xff] %vm269, %v260
        %278 = vst.msk [vmem:[%s188 + $0x40] sm:$0xff] %vm269, %v261
        %279 = vst.msk [vmem:[%s188 + $0x48] sm:$0xff] %vm269, %v262
        %280 = vst.msk [vmem:[%s188 + $0x50] sm:$0xff] %vm269, %v263
        %281 = vst.msk [vmem:[%s188 + $0x58] sm:$0xff] %vm269, %v264
        %282 = vst.msk [vmem:[%s188 + $0x60] sm:$0xff] %vm269, %v265
        %283 = vst.msk [vmem:[%s188 + $0x68] sm:$0xff] %vm269, %v266
        %284 = vst.msk [vmem:[%s188 + $0x70] sm:$0xff] %vm269, %v267
        %285 = vst.msk [vmem:[%s188 + $0x78] sm:$0xff] %vm269, %v268
        %s286 = sand.u32 %s96, 1
        %s287 = scalar_lea.sflag [#allocation4], %s286
        %s288 = sand.u32 %s96, 1
        %s289 = smul.addr %s288, 128
        %s290 = scalar_lea.vmem [#allocation5], %s289
        // Predicated region
        $region37: #{bottleneck_forward.7} parent=31 // pred_check
          %p291 = pneg %p106
        $region38: #{bottleneck_forward.7} parent=31 // pred_check_branch
          %293 = sbr.rel (%p291) target = $region40
        $region39: #{bottleneck_forward.7} parent=31 // pred_region
          %s294 = smul.u32 16, %s20
          %s296 = ssub.s32 2048, 2048
          %297 = vsyncadd %s287, %s296
          %s298 = smul.addr %s294, 128
          %s299 = scalar_lea.hbm %s3, %s298
          %s300 = sshll.u32 %s290, 4
          %s301 = int_to_ptr.vmem [resolvable:$true] %s300
          %306 = dma.vmem_to_hbm [thread:$0]  %s301, 2048, %s299, %s287, 128, 128, 8
        $region40: #{bottleneck_forward.7} parent=31 // pred_fallthru
          _
      $region32: #{bottleneck_forward.7} parent=5 // pred_fallthru
        _
      %p307 = scmp.le.s32.totalorder 2, %s15
      // Predicated region
      $region41: #{bottleneck_forward.7} parent=5 // pred_check
        %p308 = pneg %p307
      $region42: #{bottleneck_forward.7} parent=5 // pred_check_branch
        %310 = sbr.rel (%p308) target = $region44
      $region43: #{bottleneck_forward.7} parent=5 // pred_region
        %s311 = ssub.s32 %s15, 2
        // Predicated region
        $region45: #{bottleneck_forward.7} parent=43 // pred_check
          %p312 = pneg %p112
        $region46: #{bottleneck_forward.7} parent=43 // pred_check_branch
          %314 = sbr.rel (%p312) target = $region48
        $region47: #{bottleneck_forward.7} parent=43 // pred_region
          %s315 = sand.u32 %s97, 1
          %s316 = scalar_lea.sflag [#allocation4], %s315
          %s317 = sand.u32 %s97, 1
          %s318 = smul.addr %s317, 128
          %s319 = scalar_lea.vmem [#allocation5], %s318
          %320 = dma.done %s316, 2048
        $region48: #{bottleneck_forward.7} parent=43 // pred_fallthru
          _
      $region44: #{bottleneck_forward.7} parent=5 // pred_fallthru
        _
    $region6: #{bottleneck_forward.7} parent=1 // loop_footer
      %s19 = sadd.s32 1, %s15
    $region7: #{bottleneck_forward.7} parent=1 // loop_footer_branch
      %14 = sbr.rel target = $region3
    $region8: #{bottleneck_forward.7} parent=1 // loop_exit
      _
    %321 = vsyncpa [#allocation3], 1
    %s322 = scalar_lea.sflag [#allocation3], 1
    %323 = vsyncpa %s322, 1
    %324 = vsyncpa [#allocation4], 1
    %s325 = scalar_lea.sflag [#allocation4], 1
    %326 = vsyncpa %s325, 1

// kernel: bottleneck_forward.5
$region0: #{bottleneck_forward.5}
  #allocation0 [shape = 'u32[]', space=smem, size = 0x4, offset = 0x4, fixed_abs, tag = 'smem constant byte address 0x4 - core index']
  #allocation1 [shape = 'u32[144,128]{1,0:T(1,128)}', space=vmem, size = 0x12000, scoped, tag = 'internal scratch']
  %s0 = inlined_call_operand.hbm [shape: f32[512,64], index: 0, kind: input, shape index: {}]
  %s1 = inlined_call_operand.vmem [shape: f32[1,64], index: 1, kind: input, shape index: {}]
  %s2 = inlined_call_operand.vmem [shape: f32[1,64], index: 2, kind: input, shape index: {}]
  %s3 = inlined_call_operand.hbm [shape: f32[2,18,18,64], index: 3, kind: output, shape index: {}]
  %s4 = sld [smem:[#allocation0]]
  $region49: #{bottleneck_forward.5} parent=0
    _
  %s6 = ssub.s32 1, %s4
  %s7 = scalar_select 0, %s6, %s4
  $region1: #{bottleneck_forward.5} parent=0
    #allocation2 [shape = 'u8[262144]{0}', space=vmem, size = 0x40000, scoped, tag = 'input window, operand 0']
    #allocation3 [shape = 's32[2]{0}', space=sflag, size = 0x8, scoped, tag = 'scoped memory for bottleneck_forward.5']
    #allocation4 [shape = 's32[2]{0}', space=sflag, size = 0x8, scoped, tag = 'scoped memory for bottleneck_forward.5']
    #allocation5 [shape = 'u8[442368]{0}', space=vmem, size = 0x6c000, scoped, tag = 'output window, operand 0']
    %8 = vsyncpa [#allocation3], 0
    %s9 = scalar_lea.sflag [#allocation3], 1
    %10 = vsyncpa %s9, 0
    %11 = vsyncpa [#allocation4], 0
    %s12 = scalar_lea.sflag [#allocation4], 1
    %13 = vsyncpa %s12, 0
    loop: start=0, step=1, limit=4
    $region2: #{bottleneck_forward.5} parent=1 // loop_pre_header
      _
    $region3: #{bottleneck_forward.5} parent=1 // loop_header
      %s15 = sphi 0, %s19
      %p16 = scmp.ge.s32.totalorder %s15, 4
      %s25 = sphi 0, %s27
      %s28 = sphi 0, %s25
      %s29 = sphi 0, %s28
      %s45 = sphi 0, %s29
      %s49 = sphi 0, %s49
      %s51 = sphi 0, %s49
      %s52 = sphi 0, %s51
      %s66 = sphi 0, %s52
      %s70 = sphi 0, %s70
      %s72 = sphi 0, %s70
      %s73 = sphi 0, %s72
      %s87 = sphi 0, %s73
      %s93 = sphi 0, %s95
      %s96 = sphi 0, %s93
      %s97 = sphi 0, %s96
      %s113 = sphi 0, %s97
    $region4: #{bottleneck_forward.5} parent=1 // loop_header_branch
      %18 = sbr.rel (%p16) target = $region8
    $region5: #{bottleneck_forward.5} parent=1 // loop_body
      %s20 = ssub.s32 %s15, 1
      %s21 = ssub.s32 %s15, 2
      %s22 = sadd.s32 %s15, 1
      %s23 = ssub.s32 %s15, %s22
      %p24 = scmp.eq.s32.totalorder %s23, 0
      %s26 = sadd.s32 %s25, 1
      %s27 = scalar_select %p24, %s25, %s26
      %p30 = pneg %p24
      %p31 = scmp.eq.s32.totalorder %s15, 1
      %p32 = por %p30, %p31
      %p33 = scmp.ne.s32.totalorder %s25, %s28
      %p34 = scmp.eq.s32.totalorder %s15, 0
      %p35 = por %p33, %p34
      %p36 = scmp.ne.s32.totalorder %s25, %s28
      %p37 = scmp.eq.s32.totalorder %s20, 1
      %p38 = por %p36, %p37
      %p39 = scmp.ne.s32.totalorder %s28, %s29
      %p40 = scmp.eq.s32.totalorder %s20, 0
      %p41 = por %p39, %p40
      %p42 = scmp.ne.s32.totalorder %s28, %s29
      %p43 = scmp.eq.s32.totalorder %s21, 1
      %p44 = por %p42, %p43
      %p46 = scmp.ne.s32.totalorder %s29, %s45
      %p47 = scmp.eq.s32.totalorder %s21, 0
      %p48 = por %p46, %p47
      %s50 = sadd.s32 %s49, 1
      %p53 = scmp.eq.s32.totalorder %s15, 1
      %p54 = scmp.ne.s32.totalorder %s49, %s51
      %p55 = scmp.eq.s32.totalorder %s15, 0
      %p56 = por %p54, %p55
      %p57 = scmp.ne.s32.totalorder %s49, %s51
      %p58 = scmp.eq.s32.totalorder %s20, 1
      %p59 = por %p57, %p58
      %p60 = scmp.ne.s32.totalorder %s51, %s52
      %p61 = scmp.eq.s32.totalorder %s20, 0
      %p62 = por %p60, %p61
      %p63 = scmp.ne.s32.totalorder %s51, %s52
      %p64 = scmp.eq.s32.totalorder %s21, 1
      %p65 = por %p63, %p64
      %p67 = scmp.ne.s32.totalorder %s52, %s66
      %p68 = scmp.eq.s32.totalorder %s21, 0
      %p69 = por %p67, %p68
      %s71 = sadd.s32 %s70, 1
      %p74 = scmp.eq.s32.totalorder %s15, 1
      %p75 = scmp.ne.s32.totalorder %s70, %s72
      %p76 = scmp.eq.s32.totalorder %s15, 0
      %p77 = por %p75, %p76
      %p78 = scmp.ne.s32.totalorder %s70, %s72
      %p79 = scmp.eq.s32.totalorder %s20, 1
      %p80 = por %p78, %p79
      %p81 = scmp.ne.s32.totalorder %s72, %s73
      %p82 = scmp.eq.s32.totalorder %s20, 0
      %p83 = por %p81, %p82
      %p84 = scmp.ne.s32.totalorder %s72, %s73
      %p85 = scmp.eq.s32.totalorder %s21, 1
      %p86 = por %p84, %p85
      %p88 = scmp.ne.s32.totalorder %s73, %s87
      %p89 = scmp.eq.s32.totalorder %s21, 0
      %p90 = por %p88, %p89
      %s91 = ssub.s32 %s15, %s22
      %p92 = scmp.eq.s32.totalorder %s91, 0
      %s94 = sadd.s32 %s93, 1
      %s95 = scalar_select %p92, %s93, %s94
      %p98 = pneg %p92
      %p99 = scmp.eq.s32.totalorder %s15, 1
      %p100 = por %p98, %p99
      %p101 = scmp.ne.s32.totalorder %s93, %s96
      %p102 = scmp.eq.s32.totalorder %s15, 0
      %p103 = por %p101, %p102
      %p104 = scmp.ne.s32.totalorder %s93, %s96
      %p105 = scmp.eq.s32.totalorder %s20, 1
      %p106 = por %p104, %p105
      %p107 = scmp.ne.s32.totalorder %s96, %s97
      %p108 = scmp.eq.s32.totalorder %s20, 0
      %p109 = por %p107, %p108
      %p110 = scmp.ne.s32.totalorder %s96, %s97
      %p111 = scmp.eq.s32.totalorder %s21, 1
      %p112 = por %p110, %p111
      %p114 = scmp.ne.s32.totalorder %s97, %s113
      %p115 = scmp.eq.s32.totalorder %s21, 0
      %p116 = por %p114, %p115
      %p117 = scmp.le.s32.totalorder 1, %s15
      %p118 = scmp.lt.s32.totalorder %s15, 3
      %p119 = pnand %p117, %p118
      %p120 = pneg %p119
      // Predicated region
      $region9: #{bottleneck_forward.5} parent=5 // pred_check
        _
      $region10: #{bottleneck_forward.5} parent=5 // pred_check_branch
        %122 = sbr.rel (%p119) target = $region12
      $region11: #{bottleneck_forward.5} parent=5 // pred_region
        %s123 = ssub.s32 %s15, 1
        // Predicated region
        $region13: #{bottleneck_forward.5} parent=11 // pred_check
          %p124 = pneg %p62
        $region14: #{bottleneck_forward.5} parent=11 // pred_check_branch
          %126 = sbr.rel (%p124) target = $region16
        $region15: #{bottleneck_forward.5} parent=11 // pred_region
          _
        $region16: #{bottleneck_forward.5} parent=11 // pred_fallthru
          _
        // Predicated region
        $region17: #{bottleneck_forward.5} parent=11 // pred_check
          %p127 = pneg %p83
        $region18: #{bottleneck_forward.5} parent=11 // pred_check_branch
          %129 = sbr.rel (%p127) target = $region20
        $region19: #{bottleneck_forward.5} parent=11 // pred_region
          _
        $region20: #{bottleneck_forward.5} parent=11 // pred_fallthru
          _
      $region12: #{bottleneck_forward.5} parent=5 // pred_fallthru
        _
      %p130 = scmp.lt.s32.totalorder %s15, 2
      // Predicated region
      $region21: #{bottleneck_forward.5} parent=5 // pred_check
        %p131 = pneg %p130
      $region22: #{bottleneck_forward.5} parent=5 // pred_check_branch
        %133 = sbr.rel (%p131) target = $region24
      $region23: #{bottleneck_forward.5} parent=5 // pred_region
        // Predicated region
        $region25: #{bottleneck_forward.5} parent=23 // pred_check
          %p134 = pneg %p35
        $region26: #{bottleneck_forward.5} parent=23 // pred_check_branch
          %136 = sbr.rel (%p134) target = $region28
        $region27: #{bottleneck_forward.5} parent=23 // pred_region
          %s137 = sand.u32 %s25, 1
          %s138 = scalar_lea.sflag [#allocation3], %s137
          %s139 = sand.u32 %s25, 1
          %s140 = smul.addr %s139, 256
          %s141 = scalar_lea.vmem [#allocation2], %s140
          %s142 = smul.u32 32, %s15
          %s144 = ssub.s32 4096, 4096
          %145 = vsyncadd %s138, %s144
          %s146 = smul.addr %s142, 128
          %s147 = scalar_lea.hbm %s0, %s146
          %s148 = sshll.u32 %s141, 4
          %s149 = int_to_ptr.vmem [resolvable:$true] %s148
          %154 = dma.hbm_to_vmem [thread:$0]  %s147, 4096, %s149, %s138, 128, 128, 8
        $region28: #{bottleneck_forward.5} parent=23 // pred_fallthru
          _
      $region24: #{bottleneck_forward.5} parent=5 // pred_fallthru
        _
      %p155 = scmp.le.s32.totalorder 1, %s15
      %p156 = scmp.lt.s32.totalorder %s15, 3
      %p157 = pnand %p155, %p156
      %p158 = pneg %p157
      // Predicated region
      $region29: #{bottleneck_forward.5} parent=5 // pred_check
        _
      $region30: #{bottleneck_forward.5} parent=5 // pred_check_branch
        %160 = sbr.rel (%p157) target = $region32
      $region31: #{bottleneck_forward.5} parent=5 // pred_region
        %s161 = ssub.s32 %s15, 1
        %s162 = sand.u32 %s28, 1
        %s163 = scalar_lea.sflag [#allocation3], %s162
        %s164 = sand.u32 %s28, 1
        %s165 = smul.addr %s164, 256
        %s166 = scalar_lea.vmem [#allocation2], %s165
        // Predicated region
        $region33: #{bottleneck_forward.5} parent=31 // pred_check
          %p167 = pneg %p41
        $region34: #{bottleneck_forward.5} parent=31 // pred_check_branch
          %169 = sbr.rel (%p167) target = $region36
        $region35: #{bottleneck_forward.5} parent=31 // pred_region
          %170 = dma.done %s163, 4096
        $region36: #{bottleneck_forward.5} parent=31 // pred_fallthru
          _
        %s171 = sand.u32 %s28, 1
        %s172 = scalar_lea.sflag [#allocation3], %s171
        %s173 = sand.u32 %s28, 1
        %s174 = smul.addr %s173, 256
        %s175 = scalar_lea.vmem [#allocation2], %s174
        %p176 = pneg %p41
        %p177 = pneg %p38
        %p178 = pneg %p62
        %p179 = pneg %p59
        %p180 = pneg %p83
        %p181 = pneg %p80
        %p182 = pneg %p109
        %p183 = pneg %p106
        %s184 = sand.u32 %s96, 1
        %s185 = scalar_lea.sflag [#allocation4], %s184
        %s186 = sand.u32 %s96, 1
        %s187 = smul.addr %s186, 432
        %s188 = scalar_lea.vmem [#allocation5], %s187
        %s189 = smul.u32 32, %s20
        %v190 = vld [vmem:[%s166] sm:$0xff]
        %v191 = vld [vmem:[%s166 + $0x8] sm:$0xff]
        %v192 = vld [vmem:[%s166 + $0x10] sm:$0xff]
        %v193 = vld [vmem:[%s166 + $0x18] sm:$0xff]
        %v194 = vld [vmem:[%s166 + $0x20] sm:$0xff]
        %v195 = vld [vmem:[%s166 + $0x28] sm:$0xff]
        %v196 = vld [vmem:[%s166 + $0x30] sm:$0xff]
        %v197 = vld [vmem:[%s166 + $0x38] sm:$0xff]
        %v198 = vld [vmem:[%s166 + $0x40] sm:$0xff]
        %v199 = vld [vmem:[%s166 + $0x48] sm:$0xff]
        %v200 = vld [vmem:[%s166 + $0x50] sm:$0xff]
        %v201 = vld [vmem:[%s166 + $0x58] sm:$0xff]
        %v202 = vld [vmem:[%s166 + $0x60] sm:$0xff]
        %v203 = vld [vmem:[%s166 + $0x68] sm:$0xff]
        %v204 = vld [vmem:[%s166 + $0x70] sm:$0xff]
        %v205 = vld [vmem:[%s166 + $0x78] sm:$0xff]
        %v206 = vld [vmem:[%s166 + $0x80] sm:$0xff]
        %v207 = vld [vmem:[%s166 + $0x88] sm:$0xff]
        %v208 = vld [vmem:[%s166 + $0x90] sm:$0xff]
        %v209 = vld [vmem:[%s166 + $0x98] sm:$0xff]
        %v210 = vld [vmem:[%s166 + $0xa0] sm:$0xff]
        %v211 = vld [vmem:[%s166 + $0xa8] sm:$0xff]
        %v212 = vld [vmem:[%s166 + $0xb0] sm:$0xff]
        %v213 = vld [vmem:[%s166 + $0xb8] sm:$0xff]
        %v214 = vld [vmem:[%s166 + $0xc0] sm:$0xff]
        %v215 = vld [vmem:[%s166 + $0xc8] sm:$0xff]
        %v216 = vld [vmem:[%s166 + $0xd0] sm:$0xff]
        %v217 = vld [vmem:[%s166 + $0xd8] sm:$0xff]
        %v218 = vld [vmem:[%s166 + $0xe0] sm:$0xff]
        %v219 = vld [vmem:[%s166 + $0xe8] sm:$0xff]
        %v220 = vld [vmem:[%s166 + $0xf0] sm:$0xff]
        %v221 = vld [vmem:[%s166 + $0xf8] sm:$0xff]
        %v222 = vld [vmem:[%s1] sm:$0x1]
        %v224 = vlaneseq
        %v225 = vshrl.u32 %v224, 7
        %v226 = vsub.s32 0, %v225
        %v227 = vrot.slane %v222, %v226
        %v229 = vmul.f32 %v190, %v227
        %v230 = vmul.f32 %v191, %v227
        %v231 = vmul.f32 %v192, %v227
        %v232 = vmul.f32 %v193, %v227
        %v233 = vmul.f32 %v194, %v227
        %v234 = vmul.f32 %v195, %v227
        %v235 = vmul.f32 %v196, %v227
        %v236 = vmul.f32 %v197, %v227
        %v237 = vmul.f32 %v198, %v227
        %v238 = vmul.f32 %v199, %v227
        %v239 = vmul.f32 %v200, %v227
        %v240 = vmul.f32 %v201, %v227
        %v241 = vmul.f32 %v202, %v227
        %v242 = vmul.f32 %v203, %v227
        %v243 = vmul.f32 %v204, %v227
        %v244 = vmul.f32 %v205, %v227
        %v245 = vmul.f32 %v206, %v227
        %v246 = vmul.f32 %v207, %v227
        %v247 = vmul.f32 %v208, %v227
        %v248 = vmul.f32 %v209, %v227
        %v249 = vmul.f32 %v210, %v227
        %v250 = vmul.f32 %v211, %v227
        %v251 = vmul.f32 %v212, %v227
        %v252 = vmul.f32 %v213, %v227
        %v253 = vmul.f32 %v214, %v227
        %v254 = vmul.f32 %v215, %v227
        %v255 = vmul.f32 %v216, %v227
        %v256 = vmul.f32 %v217, %v227
        %v257 = vmul.f32 %v218, %v227
        %v258 = vmul.f32 %v219, %v227
        %v259 = vmul.f32 %v220, %v227
        %v260 = vmul.f32 %v221, %v227
        %v261 = vld [vmem:[%s2] sm:$0x1]
        %v263 = vlaneseq
        %v264 = vshrl.u32 %v263, 7
        %v265 = vsub.s32 0, %v264
        %v266 = vrot.slane %v261, %v265
        %v268 = vadd.f32 %v229, %v266
        %v269 = vadd.f32 %v230, %v266
        %v270 = vadd.f32 %v231, %v266
        %v271 = vadd.f32 %v232, %v266
        %v272 = vadd.f32 %v233, %v266
        %v273 = vadd.f32 %v234, %v266
        %v274 = vadd.f32 %v235, %v266
        %v275 = vadd.f32 %v236, %v266
        %v276 = vadd.f32 %v237, %v266
        %v277 = vadd.f32 %v238, %v266
        %v278 = vadd.f32 %v239, %v266
        %v279 = vadd.f32 %v240, %v266
        %v280 = vadd.f32 %v241, %v266
        %v281 = vadd.f32 %v242, %v266
        %v282 = vadd.f32 %v243, %v266
        %v283 = vadd.f32 %v244, %v266
        %v284 = vadd.f32 %v245, %v266
        %v285 = vadd.f32 %v246, %v266
        %v286 = vadd.f32 %v247, %v266
        %v287 = vadd.f32 %v248, %v266
        %v288 = vadd.f32 %v249, %v266
        %v289 = vadd.f32 %v250, %v266
        %v290 = vadd.f32 %v251, %v266
        %v291 = vadd.f32 %v252, %v266
        %v292 = vadd.f32 %v253, %v266
        %v293 = vadd.f32 %v254, %v266
        %v294 = vadd.f32 %v255, %v266
        %v295 = vadd.f32 %v256, %v266
        %v296 = vadd.f32 %v257, %v266
        %v297 = vadd.f32 %v258, %v266
        %v298 = vadd.f32 %v259, %v266
        %v299 = vadd.f32 %v260, %v266
        %v300 = vmax.f32 %v268, 0.0
        %v301 = vmax.f32 %v269, 0.0
        %v302 = vmax.f32 %v270, 0.0
        %v303 = vmax.f32 %v271, 0.0
        %v304 = vmax.f32 %v272, 0.0
        %v305 = vmax.f32 %v273, 0.0
        %v306 = vmax.f32 %v274, 0.0
        %v307 = vmax.f32 %v275, 0.0
        %v308 = vmax.f32 %v276, 0.0
        %v309 = vmax.f32 %v277, 0.0
        %v310 = vmax.f32 %v278, 0.0
        %v311 = vmax.f32 %v279, 0.0
        %v312 = vmax.f32 %v280, 0.0
        %v313 = vmax.f32 %v281, 0.0
        %v314 = vmax.f32 %v282, 0.0
        %v315 = vmax.f32 %v283, 0.0
        %v316 = vmax.f32 %v284, 0.0
        %v317 = vmax.f32 %v285, 0.0
        %v318 = vmax.f32 %v286, 0.0
        %v319 = vmax.f32 %v287, 0.0
        %v320 = vmax.f32 %v288, 0.0
        %v321 = vmax.f32 %v289, 0.0
        %v322 = vmax.f32 %v290, 0.0
        %v323 = vmax.f32 %v291, 0.0
        %v324 = vmax.f32 %v292, 0.0
        %v325 = vmax.f32 %v293, 0.0
        %v326 = vmax.f32 %v294, 0.0
        %v327 = vmax.f32 %v295, 0.0
        %v328 = vmax.f32 %v296, 0.0
        %v329 = vmax.f32 %v297, 0.0
        %v330 = vmax.f32 %v298, 0.0
        %v331 = vmax.f32 %v299, 0.0
        %vm332 = vcmask 523264
        %333 = vst.msk [vmem:[%s188] sm:$0xff] %vm332, 0.0
        %334 = vst.msk [vmem:[%s188 + $0x8] sm:$0xff] %vm332, 0.0
        %vm335 = vcmask 517120
        %336 = vst.msk [vmem:[%s188 + $0x10] sm:$0x3] %vm335, 0.0
        %337 = vst.msk [vmem:[%s188 + $0x18] sm:$0xff] %vm332, 0.0
        %338 = vst.msk [vmem:[%s188 + $0x20] sm:$0xff] %vm332, 0.0
        %339 = vst.msk [vmem:[%s188 + $0x28] sm:$0x3] %vm335, 0.0
        %340 = vst.msk [vmem:[%s188 + $0x30] sm:$0xff] %vm332, 0.0
        %341 = vst.msk [vmem:[%s188 + $0x38] sm:$0xff] %vm332, 0.0
        %342 = vst.msk [vmem:[%s188 + $0x40] sm:$0x3] %vm335, 0.0
        %343 = vst.msk [vmem:[%s188 + $0x48] sm:$0xff] %vm332, 0.0
        %344 = vst.msk [vmem:[%s188 + $0x50] sm:$0xff] %vm332, 0.0
        %345 = vst.msk [vmem:[%s188 + $0x58] sm:$0x3] %vm335, 0.0
        %346 = vst.msk [vmem:[%s188 + $0x60] sm:$0xff] %vm332, 0.0
        %347 = vst.msk [vmem:[%s188 + $0x68] sm:$0xff] %vm332, 0.0
        %348 = vst.msk [vmem:[%s188 + $0x70] sm:$0x3] %vm335, 0.0
        %349 = vst.msk [vmem:[%s188 + $0x78] sm:$0xff] %vm332, 0.0
        %350 = vst.msk [vmem:[%s188 + $0x80] sm:$0xff] %vm332, 0.0
        %351 = vst.msk [vmem:[%s188 + $0x88] sm:$0x3] %vm335, 0.0
        %352 = vst.msk [vmem:[%s188 + $0x90] sm:$0xff] %vm332, 0.0
        %353 = vst.msk [vmem:[%s188 + $0x98] sm:$0xff] %vm332, 0.0
        %354 = vst.msk [vmem:[%s188 + $0xa0] sm:$0x3] %vm335, 0.0
        %355 = vst.msk [vmem:[%s188 + $0xa8] sm:$0xff] %vm332, 0.0
        %356 = vst.msk [vmem:[%s188 + $0xb0] sm:$0xff] %vm332, 0.0
        %357 = vst.msk [vmem:[%s188 + $0xb8] sm:$0x3] %vm335, 0.0
        %358 = vst.msk [vmem:[%s188 + $0xc0] sm:$0xff] %vm332, 0.0
        %359 = vst.msk [vmem:[%s188 + $0xc8] sm:$0xff] %vm332, 0.0
        %360 = vst.msk [vmem:[%s188 + $0xd0] sm:$0x3] %vm335, 0.0
        %361 = vst.msk [vmem:[%s188 + $0xd8] sm:$0xff] %vm332, 0.0
        %362 = vst.msk [vmem:[%s188 + $0xe0] sm:$0xff] %vm332, 0.0
        %363 = vst.msk [vmem:[%s188 + $0xe8] sm:$0x3] %vm335, 0.0
        %364 = vst.msk [vmem:[%s188 + $0xf0] sm:$0xff] %vm332, 0.0
        %365 = vst.msk [vmem:[%s188 + $0xf8] sm:$0xff] %vm332, 0.0
        %366 = vst.msk [vmem:[%s188 + $0x100] sm:$0x3] %vm335, 0.0
        %367 = vst.msk [vmem:[%s188 + $0x108] sm:$0xff] %vm332, 0.0
        %368 = vst.msk [vmem:[%s188 + $0x110] sm:$0xff] %vm332, 0.0
        %369 = vst.msk [vmem:[%s188 + $0x118] sm:$0x3] %vm335, 0.0
        %370 = vst.msk [vmem:[%s188 + $0x120] sm:$0xff] %vm332, 0.0
        %371 = vst.msk [vmem:[%s188 + $0x128] sm:$0xff] %vm332, 0.0
        %372 = vst.msk [vmem:[%s188 + $0x130] sm:$0x3] %vm335, 0.0
        %373 = vst.msk [vmem:[%s188 + $0x138] sm:$0xff] %vm332, 0.0
        %374 = vst.msk [vmem:[%s188 + $0x140] sm:$0xff] %vm332, 0.0
        %375 = vst.msk [vmem:[%s188 + $0x148] sm:$0x3] %vm335, 0.0
        %376 = vst.msk [vmem:[%s188 + $0x150] sm:$0xff] %vm332, 0.0
        %377 = vst.msk [vmem:[%s188 + $0x158] sm:$0xff] %vm332, 0.0
        %378 = vst.msk [vmem:[%s188 + $0x160] sm:$0x3] %vm335, 0.0
        %379 = vst.msk [vmem:[%s188 + $0x168] sm:$0xff] %vm332, 0.0
        %380 = vst.msk [vmem:[%s188 + $0x170] sm:$0xff] %vm332, 0.0
        %381 = vst.msk [vmem:[%s188 + $0x178] sm:$0x3] %vm335, 0.0
        %382 = vst.msk [vmem:[%s188 + $0x180] sm:$0xff] %vm332, 0.0
        %383 = vst.msk [vmem:[%s188 + $0x188] sm:$0xff] %vm332, 0.0
        %384 = vst.msk [vmem:[%s188 + $0x190] sm:$0x3] %vm335, 0.0
        %385 = vst.msk [vmem:[%s188 + $0x198] sm:$0xff] %vm332, 0.0
        %386 = vst.msk [vmem:[%s188 + $0x1a0] sm:$0xff] %vm332, 0.0
        %387 = vst.msk [vmem:[%s188 + $0x1a8] sm:$0x3] %vm335, 0.0
        %s388 = scalar_lea.vmem %s188, 24 [#allocation5]
        %389 = vst.msk [vmem:[%s388 + $0x1] sm:$0xff] %vm332, %v300
        %390 = vst.msk [vmem:[%s388 + $0x9] sm:$0xff] %vm332, %v301
        %391 = vst.msk [vmem:[%s388 + $0x19] sm:$0xff] %vm332, %v302
        %392 = vst.msk [vmem:[%s388 + $0x21] sm:$0xff] %vm332, %v303
        %393 = vst.msk [vmem:[%s388 + $0x31] sm:$0xff] %vm332, %v304
        %394 = vst.msk [vmem:[%s388 + $0x39] sm:$0xff] %vm332, %v305
        %395 = vst.msk [vmem:[%s388 + $0x49] sm:$0xff] %vm332, %v306
        %396 = vst.msk [vmem:[%s388 + $0x51] sm:$0xff] %vm332, %v307
        %397 = vst.msk [vmem:[%s388 + $0x61] sm:$0xff] %vm332, %v308
        %398 = vst.msk [vmem:[%s388 + $0x69] sm:$0xff] %vm332, %v309
        %399 = vst.msk [vmem:[%s388 + $0x79] sm:$0xff] %vm332, %v310
        %400 = vst.msk [vmem:[%s388 + $0x81] sm:$0xff] %vm332, %v311
        %401 = vst.msk [vmem:[%s388 + $0x91] sm:$0xff] %vm332, %v312
        %402 = vst.msk [vmem:[%s388 + $0x99] sm:$0xff] %vm332, %v313
        %403 = vst.msk [vmem:[%s388 + $0xa9] sm:$0xff] %vm332, %v314
        %404 = vst.msk [vmem:[%s388 + $0xb1] sm:$0xff] %vm332, %v315
        %405 = vst.msk [vmem:[%s388 + $0xc1] sm:$0xff] %vm332, %v316
        %406 = vst.msk [vmem:[%s388 + $0xc9] sm:$0xff] %vm332, %v317
        %407 = vst.msk [vmem:[%s388 + $0xd9] sm:$0xff] %vm332, %v318
        %408 = vst.msk [vmem:[%s388 + $0xe1] sm:$0xff] %vm332, %v319
        %409 = vst.msk [vmem:[%s388 + $0xf1] sm:$0xff] %vm332, %v320
        %410 = vst.msk [vmem:[%s388 + $0xf9] sm:$0xff] %vm332, %v321
        %411 = vst.msk [vmem:[%s388 + $0x109] sm:$0xff] %vm332, %v322
        %412 = vst.msk [vmem:[%s388 + $0x111] sm:$0xff] %vm332, %v323
        %413 = vst.msk [vmem:[%s388 + $0x121] sm:$0xff] %vm332, %v324
        %414 = vst.msk [vmem:[%s388 + $0x129] sm:$0xff] %vm332, %v325
        %415 = vst.msk [vmem:[%s388 + $0x139] sm:$0xff] %vm332, %v326
        %416 = vst.msk [vmem:[%s388 + $0x141] sm:$0xff] %vm332, %v327
        %417 = vst.msk [vmem:[%s388 + $0x151] sm:$0xff] %vm332, %v328
        %418 = vst.msk [vmem:[%s388 + $0x159] sm:$0xff] %vm332, %v329
        %419 = vst.msk [vmem:[%s388 + $0x169] sm:$0xff] %vm332, %v330
        %420 = vst.msk [vmem:[%s388 + $0x171] sm:$0xff] %vm332, %v331
        %s421 = sand.u32 %s96, 1
        %s422 = scalar_lea.sflag [#allocation4], %s421
        %s423 = sand.u32 %s96, 1
        %s424 = smul.addr %s423, 432
        %s425 = scalar_lea.vmem [#allocation5], %s424
        // Predicated region
        $region37: #{bottleneck_forward.5} parent=31 // pred_check
          %p426 = pneg %p106
        $region38: #{bottleneck_forward.5} parent=31 // pred_check_branch
          %428 = sbr.rel (%p426) target = $region40
        $region39: #{bottleneck_forward.5} parent=31 // pred_region
          %s430 = ssub.s32 6912, 6912
          %431 = vsyncadd %s422, %s430
          %s432 = smul.addr %s20, 54
          %s433 = smul.addr %s432, 128
          %s434 = scalar_lea.hbm %s3, %s433
          %s435 = sshll.u32 %s425, 4
          %s436 = int_to_ptr.vmem [resolvable:$true] %s435
          %441 = dma.vmem_to_hbm [thread:$0]  %s436, 6912, %s434, %s422, 128, 128, 8
        $region40: #{bottleneck_forward.5} parent=31 // pred_fallthru
          _
      $region32: #{bottleneck_forward.5} parent=5 // pred_fallthru
        _
      %p442 = scmp.le.s32.totalorder 2, %s15
      // Predicated region
      $region41: #{bottleneck_forward.5} parent=5 // pred_check
        %p443 = pneg %p442
      $region42: #{bottleneck_forward.5} parent=5 // pred_check_branch
        %445 = sbr.rel (%p443) target = $region44
      $region43: #{bottleneck_forward.5} parent=5 // pred_region
        %s446 = ssub.s32 %s15, 2
        // Predicated region
        $region45: #{bottleneck_forward.5} parent=43 // pred_check
          %p447 = pneg %p112
        $region46: #{bottleneck_forward.5} parent=43 // pred_check_branch
          %449 = sbr.rel (%p447) target = $region48
        $region47: #{bottleneck_forward.5} parent=43 // pred_region
          %s450 = sand.u32 %s97, 1
          %s451 = scalar_lea.sflag [#allocation4], %s450
          %s452 = sand.u32 %s97, 1
          %s453 = smul.addr %s452, 432
          %s454 = scalar_lea.vmem [#allocation5], %s453
          %455 = dma.done %s451, 6912
        $region48: #{bottleneck_forward.5} parent=43 // pred_fallthru
          _
      $region44: #{bottleneck_forward.5} parent=5 // pred_fallthru
        _
    $region6: #{bottleneck_forward.5} parent=1 // loop_footer
      %s19 = sadd.s32 1, %s15
    $region7: #{bottleneck_forward.5} parent=1 // loop_footer_branch
      %14 = sbr.rel target = $region3
    $region8: #{bottleneck_forward.5} parent=1 // loop_exit
      _
    %456 = vsyncpa [#allocation3], 1
    %s457 = scalar_lea.sflag [#allocation3], 1
    %458 = vsyncpa %s457, 1
    %459 = vsyncpa [#allocation4], 1
    %s460 = scalar_lea.sflag [#allocation4], 1
    %461 = vsyncpa %s460, 1

// kernel: bottleneck_forward.4
$region0: #{bottleneck_forward.4}
  #allocation0 [shape = 'u32[]', space=smem, size = 0x4, offset = 0x4, fixed_abs, tag = 'smem constant byte address 0x4 - core index']
  #allocation1 [shape = 'u32[144,128]{1,0:T(1,128)}', space=vmem, size = 0x12000, scoped, tag = 'internal scratch']
  %s0 = inlined_call_operand.hbm [shape: f32[2,18,18,32], index: 0, kind: input, shape index: {}]
  %s1 = inlined_call_operand.hbm [shape: f32[288,64], index: 1, kind: input, shape index: {}]
  %s2 = inlined_call_operand.hbm [shape: f32[512,64], index: 2, kind: output, shape index: {0}]
  %s3 = inlined_call_operand.hbm [shape: f32[2,1,64], index: 3, kind: output, shape index: {1}]
  %s4 = inlined_call_operand.hbm [shape: f32[2,1,64], index: 4, kind: output, shape index: {2}]
  %5 = xla_tuple %s2, %s3, %s4
  %s6 = sld [smem:[#allocation0]]
  $region69: #{bottleneck_forward.4} parent=0
    _
  %s8 = ssub.s32 1, %s6
  %s9 = scalar_select 0, %s8, %s6
  $region1: #{bottleneck_forward.4} parent=0
    #allocation2 [shape = 'u8[442368]{0}', space=vmem, size = 0x6c000, scoped, tag = 'input window, operand 0']
    #allocation3 [shape = 's32[2]{0}', space=sflag, size = 0x8, scoped, tag = 'scoped memory for bottleneck_forward.4']
    #allocation4 [shape = 's32[2]{0}', space=sflag, size = 0x8, scoped, tag = 'scoped memory for bottleneck_forward.4']
    #allocation5 [shape = 'u8[147456]{0}', space=vmem, size = 0x24000, scoped, tag = 'input window, operand 1, single buffered']
    #allocation6 [shape = 's32[1]{0}', space=sflag, size = 0x4, scoped, tag = 'scoped memory for bottleneck_forward.4']
    #allocation7 [shape = 'u8[131072]{0}', space=vmem, size = 0x20000, scoped, tag = 'output window, operand 0']
    #allocation8 [shape = 'u8[1024]{0}', space=vmem, size = 0x400, scoped, tag = 'output window, operand 1']
    #allocation9 [shape = 's32[2]{0}', space=sflag, size = 0x8, scoped, tag = 'scoped memory for bottleneck_forward.4']
    #allocation10 [shape = 'u8[1024]{0}', space=vmem, size = 0x400, scoped, tag = 'output window, operand 2']
    %10 = vsyncpa [#allocation3], 0
    %s11 = scalar_lea.sflag [#allocation3], 1
    %12 = vsyncpa %s11, 0
    %13 = vsyncpa [#allocation6], 0
    %14 = vsyncpa [#allocation4], 0
    %s15 = scalar_lea.sflag [#allocation4], 1
    %16 = vsyncpa %s15, 0
    %17 = vsyncpa [#allocation9], 0
    %s18 = scalar_lea.sflag [#allocation9], 1
    %19 = vsyncpa %s18, 0
    loop: start=0, step=1, limit=6
    $region2: #{bottleneck_forward.4} parent=1 // loop_pre_header
      _
    $region3: #{bottleneck_forward.4} parent=1 // loop_header
      %s21 = sphi 0, %s25
      %p22 = scmp.ge.s32.totalorder %s21, 6
      %s28 = sphi 0, %s40
      %s29 = sphi 0, %s36
      %s30 = sphi 0, %s28
      %s31 = sphi 0, %s29
      %s32 = sphi 0, %s30
      %s33 = sphi 0, %s31
      %s43 = sphi 0, %s45
      %s46 = sphi 0, %s43
      %s47 = sphi 0, %s46
      %s63 = sphi 0, %s47
      %s67 = sphi 0, %s67
      %s69 = sphi 0, %s67
      %s70 = sphi 0, %s69
      %s84 = sphi 0, %s70
      %s94 = sphi 0, %s96
      %s97 = sphi 0, %s94
      %s98 = sphi 0, %s97
      %s114 = sphi 0, %s98
      %s120 = sphi 0, %s122
      %s123 = sphi 0, %s120
      %s124 = sphi 0, %s123
      %s140 = sphi 0, %s124
      %s146 = sphi 0, %s148
      %s149 = sphi 0, %s146
      %s150 = sphi 0, %s149
      %s166 = sphi 0, %s150
    $region4: #{bottleneck_forward.4} parent=1 // loop_header_branch
      %24 = sbr.rel (%p22) target = $region8
    $region5: #{bottleneck_forward.4} parent=1 // loop_body
      %s26 = ssub.s32 %s21, 1
      %s27 = ssub.s32 %s21, 2
      %s34 = sadd.s32 1, %s29
      %p35 = scmp.ge.s32.totalorder %s34, 2
      %s36 = scalar_select %p35, 0, %s34
      %s37 = sadd.s32 1, %s28
      %s38 = scalar_select %p35, %s37, %s28
      %p39 = scmp.ge.s32.totalorder %s38, 2
      %s40 = scalar_select %p39, 0, %s38
      %s41 = ssub.s32 %s28, %s40
      %p42 = scmp.eq.s32.totalorder %s41, 0
      %s44 = sadd.s32 %s43, 1
      %s45 = scalar_select %p42, %s43, %s44
      %p48 = pneg %p42
      %p49 = scmp.eq.s32.totalorder %s21, 3
      %p50 = por %p48, %p49
      %p51 = scmp.ne.s32.totalorder %s43, %s46
      %p52 = scmp.eq.s32.totalorder %s21, 0
      %p53 = por %p51, %p52
      %p54 = scmp.ne.s32.totalorder %s43, %s46
      %p55 = scmp.eq.s32.totalorder %s26, 3
      %p56 = por %p54, %p55
      %p57 = scmp.ne.s32.totalorder %s46, %s47
      %p58 = scmp.eq.s32.totalorder %s26, 0
      %p59 = por %p57, %p58
      %p60 = scmp.ne.s32.totalorder %s46, %s47
      %p61 = scmp.eq.s32.totalorder %s27, 3
      %p62 = por %p60, %p61
      %p64 = scmp.ne.s32.totalorder %s47, %s63
      %p65 = scmp.eq.s32.totalorder %s27, 0
      %p66 = por %p64, %p65
      %s68 = sadd.s32 %s67, 1
      %p71 = scmp.eq.s32.totalorder %s21, 3
      %p72 = scmp.ne.s32.totalorder %s67, %s69
      %p73 = scmp.eq.s32.totalorder %s21, 0
      %p74 = por %p72, %p73
      %p75 = scmp.ne.s32.totalorder %s67, %s69
      %p76 = scmp.eq.s32.totalorder %s26, 3
      %p77 = por %p75, %p76
      %p78 = scmp.ne.s32.totalorder %s69, %s70
      %p79 = scmp.eq.s32.totalorder %s26, 0
      %p80 = por %p78, %p79
      %p81 = scmp.ne.s32.totalorder %s69, %s70
      %p82 = scmp.eq.s32.totalorder %s27, 3
      %p83 = por %p81, %p82
      %p85 = scmp.ne.s32.totalorder %s70, %s84
      %p86 = scmp.eq.s32.totalorder %s27, 0
      %p87 = por %p85, %p86
      %s88 = smul.u32 %s28, 2
      %s89 = sadd.s32 %s88, %s29
      %s90 = smul.u32 %s40, 2
      %s91 = sadd.s32 %s90, %s36
      %s92 = ssub.s32 %s89, %s91
      %p93 = scmp.eq.s32.totalorder %s92, 0
      %s95 = sadd.s32 %s94, 1
      %s96 = scalar_select %p93, %s94, %s95
      %p99 = pneg %p93
      %p100 = scmp.eq.s32.totalorder %s21, 3
      %p101 = por %p99, %p100
      %p102 = scmp.ne.s32.totalorder %s94, %s97
      %p103 = scmp.eq.s32.totalorder %s21, 0
      %p104 = por %p102, %p103
      %p105 = scmp.ne.s32.totalorder %s94, %s97
      %p106 = scmp.eq.s32.totalorder %s26, 3
      %p107 = por %p105, %p106
      %p108 = scmp.ne.s32.totalorder %s97, %s98
      %p109 = scmp.eq.s32.totalorder %s26, 0
      %p110 = por %p108, %p109
      %p111 = scmp.ne.s32.totalorder %s97, %s98
      %p112 = scmp.eq.s32.totalorder %s27, 3
      %p113 = por %p111, %p112
      %p115 = scmp.ne.s32.totalorder %s98, %s114
      %p116 = scmp.eq.s32.totalorder %s27, 0
      %p117 = por %p115, %p116
      %s118 = ssub.s32 %s28, %s40
      %p119 = scmp.eq.s32.totalorder %s118, 0
      %s121 = sadd.s32 %s120, 1
      %s122 = scalar_select %p119, %s120, %s121
      %p125 = pneg %p119
      %p126 = scmp.eq.s32.totalorder %s21, 3
      %p127 = por %p125, %p126
      %p128 = scmp.ne.s32.totalorder %s120, %s123
      %p129 = scmp.eq.s32.totalorder %s21, 0
      %p130 = por %p128, %p129
      %p131 = scmp.ne.s32.totalorder %s120, %s123
      %p132 = scmp.eq.s32.totalorder %s26, 3
      %p133 = por %p131, %p132
      %p134 = scmp.ne.s32.totalorder %s123, %s124
      %p135 = scmp.eq.s32.totalorder %s26, 0
      %p136 = por %p134, %p135
      %p137 = scmp.ne.s32.totalorder %s123, %s124
      %p138 = scmp.eq.s32.totalorder %s27, 3
      %p139 = por %p137, %p138
      %p141 = scmp.ne.s32.totalorder %s124, %s140
      %p142 = scmp.eq.s32.totalorder %s27, 0
      %p143 = por %p141, %p142
      %s144 = ssub.s32 %s28, %s40
      %p145 = scmp.eq.s32.totalorder %s144, 0
      %s147 = sadd.s32 %s146, 1
      %s148 = scalar_select %p145, %s146, %s147
      %p151 = pneg %p145
      %p152 = scmp.eq.s32.totalorder %s21, 3
      %p153 = por %p151, %p152
      %p154 = scmp.ne.s32.totalorder %s146, %s149
      %p155 = scmp.eq.s32.totalorder %s21, 0
      %p156 = por %p154, %p155
      %p157 = scmp.ne.s32.totalorder %s146, %s149
      %p158 = scmp.eq.s32.totalorder %s26, 3
      %p159 = por %p157, %p158
      %p160 = scmp.ne.s32.totalorder %s149, %s150
      %p161 = scmp.eq.s32.totalorder %s26, 0
      %p162 = por %p160, %p161
      %p163 = scmp.ne.s32.totalorder %s149, %s150
      %p164 = scmp.eq.s32.totalorder %s27, 3
      %p165 = por %p163, %p164
      %p167 = scmp.ne.s32.totalorder %s150, %s166
      %p168 = scmp.eq.s32.totalorder %s27, 0
      %p169 = por %p167, %p168
      %p170 = scmp.le.s32.totalorder 1, %s21
      %p171 = scmp.lt.s32.totalorder %s21, 5
      %p172 = pnand %p170, %p171
      %p173 = pneg %p172
      // Predicated region
      $region9: #{bottleneck_forward.4} parent=5 // pred_check
        _
      $region10: #{bottleneck_forward.4} parent=5 // pred_check_branch
        %175 = sbr.rel (%p172) target = $region12
      $region11: #{bottleneck_forward.4} parent=5 // pred_region
        %s176 = ssub.s32 %s21, 1
        // Predicated region
        $region13: #{bottleneck_forward.4} parent=11 // pred_check
          %p177 = pneg %p80
        $region14: #{bottleneck_forward.4} parent=11 // pred_check_branch
          %179 = sbr.rel (%p177) target = $region16
        $region15: #{bottleneck_forward.4} parent=11 // pred_region
          %s181 = ssub.s32 4608, 4608
          %182 = vsyncadd [#allocation6], %s181
          %s183 = sshll.u32 [#allocation5], 4
          %s184 = int_to_ptr.vmem [resolvable:$true] %s183
          %189 = dma.hbm_to_vmem [thread:$0]  %s1, 4608, %s184, [#allocation6], 128, 128, 8
        $region16: #{bottleneck_forward.4} parent=11 // pred_fallthru
          _
      $region12: #{bottleneck_forward.4} parent=5 // pred_fallthru
        _
      %p190 = scmp.lt.s32.totalorder %s21, 4
      // Predicated region
      $region17: #{bottleneck_forward.4} parent=5 // pred_check
        %p191 = pneg %p190
      $region18: #{bottleneck_forward.4} parent=5 // pred_check_branch
        %193 = sbr.rel (%p191) target = $region20
      $region19: #{bottleneck_forward.4} parent=5 // pred_region
        // Predicated region
        $region21: #{bottleneck_forward.4} parent=19 // pred_check
          %p194 = pneg %p53
        $region22: #{bottleneck_forward.4} parent=19 // pred_check_branch
          %196 = sbr.rel (%p194) target = $region24
        $region23: #{bottleneck_forward.4} parent=19 // pred_region
          %s197 = sand.u32 %s43, 1
          %s198 = scalar_lea.sflag [#allocation3], %s197
          %s199 = sand.u32 %s43, 1
          %s200 = smul.addr %s199, 432
          %s201 = scalar_lea.vmem [#allocation2], %s200
          %s203 = ssub.s32 6912, 6912
          %204 = vsyncadd %s198, %s203
          %s205 = smul.addr %s28, 54
          %s206 = smul.addr %s205, 128
          %s207 = scalar_lea.hbm %s0, %s206
          %s208 = sshll.u32 %s201, 4
          %s209 = int_to_ptr.vmem [resolvable:$true] %s208
          %214 = dma.hbm_to_vmem [thread:$0]  %s207, 6912, %s209, %s198, 128, 128, 8
        $region24: #{bottleneck_forward.4} parent=19 // pred_fallthru
          _
      $region20: #{bottleneck_forward.4} parent=5 // pred_fallthru
        _
      %p215 = scmp.le.s32.totalorder 1, %s21
      %p216 = scmp.lt.s32.totalorder %s21, 5
      %p217 = pnand %p215, %p216
      %p218 = pneg %p217
      // Predicated region
      $region25: #{bottleneck_forward.4} parent=5 // pred_check
        _
      $region26: #{bottleneck_forward.4} parent=5 // pred_check_branch
        %220 = sbr.rel (%p217) target = $region28
      $region27: #{bottleneck_forward.4} parent=5 // pred_region
        %s221 = ssub.s32 %s21, 1
        %s222 = sand.u32 %s46, 1
        %s223 = scalar_lea.sflag [#allocation3], %s222
        %s224 = sand.u32 %s46, 1
        %s225 = smul.addr %s224, 432
        %s226 = scalar_lea.vmem [#allocation2], %s225
        // Predicated region
        $region29: #{bottleneck_forward.4} parent=27 // pred_check
          %p227 = pneg %p59
        $region30: #{bottleneck_forward.4} parent=27 // pred_check_branch
          %229 = sbr.rel (%p227) target = $region32
        $region31: #{bottleneck_forward.4} parent=27 // pred_region
          %230 = dma.done %s223, 6912
        $region32: #{bottleneck_forward.4} parent=27 // pred_fallthru
          _
        // Predicated region
        $region33: #{bottleneck_forward.4} parent=27 // pred_check
          %p231 = pneg %p80
        $region34: #{bottleneck_forward.4} parent=27 // pred_check_branch
          %233 = sbr.rel (%p231) target = $region36
        $region35: #{bottleneck_forward.4} parent=27 // pred_region
          %234 = dma.done [#allocation6], 4608
        $region36: #{bottleneck_forward.4} parent=27 // pred_fallthru
          _
        %s235 = sand.u32 %s46, 1
        %s236 = scalar_lea.sflag [#allocation3], %s235
        %s237 = sand.u32 %s46, 1
        %s238 = smul.addr %s237, 432
        %s239 = scalar_lea.vmem [#allocation2], %s238
        %p240 = pneg %p59
        %p241 = pneg %p56
        %p242 = pneg %p80
        %p243 = pneg %p77
        %p244 = pneg %p110
        %p245 = pneg %p107
        %s246 = sand.u32 %s97, 1
        %s247 = scalar_lea.sflag [#allocation4], %s246
        %s248 = sand.u32 %s97, 1
        %s249 = smul.addr %s248, 128
        %s250 = scalar_lea.vmem [#allocation7], %s249
        %p251 = pneg %p136
        %p252 = pneg %p133
        %s253 = sand.u32 %s26, 1
        %s254 = scalar_lea.sflag [#allocation9], %s253
        %s255 = sand.u32 %s123, 1
        %s256 = scalar_lea.vmem [#allocation8], %s255
        %p257 = pneg %p162
        %p258 = pneg %p159
        %s259 = sand.u32 %s26, 1
        %s260 = scalar_lea.sflag [#allocation9], %s259
        %s261 = sand.u32 %s149, 1
        %s262 = scalar_lea.vmem [#allocation10], %s261
        %s263 = smul.u32 %s30, 2
        %s264 = sadd.s32 %s263, %s31
        %s265 = smul.u32 16, %s264
        %s266 = smul.u32 %s31, 8
        %s267 = smul.u32 %s266, 24
        %s268 = scalar_lea.vmem %s226, %s267 [#allocation2]
        %v269 = vld [vmem:[%s268] sm:$0xff]
        %v270 = vld [vmem:[%s268 + $0x8] sm:$0xff]
        %v271 = vld [vmem:[%s268 + $0x10] sm:$0x3]
        %v272 = vld [vmem:[%s268 + $0x18] sm:$0xff]
        %v273 = vld [vmem:[%s268 + $0x20] sm:$0xff]
        %v274 = vld [vmem:[%s268 + $0x28] sm:$0x3]
        %v275 = vld [vmem:[%s268 + $0x30] sm:$0xff]
        %v276 = vld [vmem:[%s268 + $0x38] sm:$0xff]
        %v277 = vld [vmem:[%s268 + $0x40] sm:$0x3]
        %v278 = vld [vmem:[%s268 + $0x48] sm:$0xff]
        %v279 = vld [vmem:[%s268 + $0x50] sm:$0xff]
        %v280 = vld [vmem:[%s268 + $0x58] sm:$0x3]
        %v281 = vld [vmem:[%s268 + $0x60] sm:$0xff]
        %v282 = vld [vmem:[%s268 + $0x68] sm:$0xff]
        %v283 = vld [vmem:[%s268 + $0x70] sm:$0x3]
        %v284 = vld [vmem:[%s268 + $0x78] sm:$0xff]
        %v285 = vld [vmem:[%s268 + $0x80] sm:$0xff]
        %v286 = vld [vmem:[%s268 + $0x88] sm:$0x3]
        %v287 = vld [vmem:[%s268 + $0x90] sm:$0xff]
        %v288 = vld [vmem:[%s268 + $0x98] sm:$0xff]
        %v289 = vld [vmem:[%s268 + $0xa0] sm:$0x3]
        %v290 = vld [vmem:[%s268 + $0xa8] sm:$0xff]
        %v291 = vld [vmem:[%s268 + $0xb0] sm:$0xff]
        %v292 = vld [vmem:[%s268 + $0xb8] sm:$0x3]
        %s293 = sadd.s32 %s266, 1
        %s294 = smul.u32 %s293, 24
        %s295 = scalar_lea.vmem %s226, %s294 [#allocation2]
        %v296 = vld [vmem:[%s295] sm:$0xff]
        %v297 = vld [vmem:[%s295 + $0x8] sm:$0xff]
        %v298 = vld [vmem:[%s295 + $0x10] sm:$0x3]
        %v299 = vld [vmem:[%s295 + $0x18] sm:$0xff]
        %v300 = vld [vmem:[%s295 + $0x20] sm:$0xff]
        %v301 = vld [vmem:[%s295 + $0x28] sm:$0x3]
        %v302 = vld [vmem:[%s295 + $0x30] sm:$0xff]
        %v303 = vld [vmem:[%s295 + $0x38] sm:$0xff]
        %v304 = vld [vmem:[%s295 + $0x40] sm:$0x3]
        %v305 = vld [vmem:[%s295 + $0x48] sm:$0xff]
        %v306 = vld [vmem:[%s295 + $0x50] sm:$0xff]
        %v307 = vld [vmem:[%s295 + $0x58] sm:$0x3]
        %v308 = vld [vmem:[%s295 + $0x60] sm:$0xff]
        %v309 = vld [vmem:[%s295 + $0x68] sm:$0xff]
        %v310 = vld [vmem:[%s295 + $0x70] sm:$0x3]
        %v311 = vld [vmem:[%s295 + $0x78] sm:$0xff]
        %v312 = vld [vmem:[%s295 + $0x80] sm:$0xff]
        %v313 = vld [vmem:[%s295 + $0x88] sm:$0x3]
        %v314 = vld [vmem:[%s295 + $0x90] sm:$0xff]
        %v315 = vld [vmem:[%s295 + $0x98] sm:$0xff]
        %v316 = vld [vmem:[%s295 + $0xa0] sm:$0x3]
        %v317 = vld [vmem:[%s295 + $0xa8] sm:$0xff]
        %v318 = vld [vmem:[%s295 + $0xb0] sm:$0xff]
        %v319 = vld [vmem:[%s295 + $0xb8] sm:$0x3]
        %s320 = sadd.s32 %s266, 2
        %s321 = smul.u32 %s320, 24
        %s322 = scalar_lea.vmem %s226, %s321 [#allocation2]
        %v323 = vld [vmem:[%s322] sm:$0xff]
        %v324 = vld [vmem:[%s322 + $0x8] sm:$0xff]
        %v325 = vld [vmem:[%s322 + $0x10] sm:$0x3]
        %v326 = vld [vmem:[%s322 + $0x18] sm:$0xff]
        %v327 = vld [vmem:[%s322 + $0x20] sm:$0xff]
        %v328 = vld [vmem:[%s322 + $0x28] sm:$0x3]
        %v329 = vld [vmem:[%s322 + $0x30] sm:$0xff]
        %v330 = vld [vmem:[%s322 + $0x38] sm:$0xff]
        %v331 = vld [vmem:[%s322 + $0x40] sm:$0x3]
        %v332 = vld [vmem:[%s322 + $0x48] sm:$0xff]
        %v333 = vld [vmem:[%s322 + $0x50] sm:$0xff]
        %v334 = vld [vmem:[%s322 + $0x58] sm:$0x3]
        %v335 = vld [vmem:[%s322 + $0x60] sm:$0xff]
        %v336 = vld [vmem:[%s322 + $0x68] sm:$0xff]
        %v337 = vld [vmem:[%s322 + $0x70] sm:$0x3]
        %v338 = vld [vmem:[%s322 + $0x78] sm:$0xff]
        %v339 = vld [vmem:[%s322 + $0x80] sm:$0xff]
        %v340 = vld [vmem:[%s322 + $0x88] sm:$0x3]
        %v341 = vld [vmem:[%s322 + $0x90] sm:$0xff]
        %v342 = vld [vmem:[%s322 + $0x98] sm:$0xff]
        %v343 = vld [vmem:[%s322 + $0xa0] sm:$0x3]
        %v344 = vld [vmem:[%s322 + $0xa8] sm:$0xff]
        %v345 = vld [vmem:[%s322 + $0xb0] sm:$0xff]
        %v346 = vld [vmem:[%s322 + $0xb8] sm:$0x3]
        %vm371 = vcmask 1046528
        %v372 = vrot.slane %v269, 1
        %v373 = vrot.slane %v270, 1
        %v374 = vsel %vm371, %v372, %v373
        %v375 = vrot.slane %v271, 1
        %v376 = vsel %vm371, %v373, %v375
        %v377 = vrot.slane %v272, 1
        %v378 = vrot.slane %v273, 1
        %v379 = vsel %vm371, %v377, %v378
        %v380 = vrot.slane %v274, 1
        %v381 = vsel %vm371, %v378, %v380
        %v382 = vrot.slane %v275, 1
        %v383 = vrot.slane %v276, 1
        %v384 = vsel %vm371, %v382, %v383
        %v385 = vrot.slane %v277, 1
        %v386 = vsel %vm371, %v383, %v385
        %v387 = vrot.slane %v278, 1
        %v388 = vrot.slane %v279, 1
        %v389 = vsel %vm371, %v387, %v388
        %v390 = vrot.slane %v280, 1
        %v391 = vsel %vm371, %v388, %v390
        %v392 = vrot.slane %v281, 1
        %v393 = vrot.slane %v282, 1
        %v394 = vsel %vm371, %v392, %v393
        %v395 = vrot.slane %v283, 1
        %v396 = vsel %vm371, %v393, %v395
        %v397 = vrot.slane %v284, 1
        %v398 = vrot.slane %v285, 1
        %v399 = vsel %vm371, %v397, %v398
        %v400 = vrot.slane %v286, 1
        %v401 = vsel %vm371, %v398, %v400
        %v402 = vrot.slane %v287, 1
        %v403 = vrot.slane %v288, 1
        %v404 = vsel %vm371, %v402, %v403
        %v405 = vrot.slane %v289, 1
        %v406 = vsel %vm371, %v403, %v405
        %v407 = vrot.slane %v290, 1
        %v408 = vrot.slane %v291, 1
        %v409 = vsel %vm371, %v407, %v408
        %v410 = vrot.slane %v292, 1
        %v411 = vsel %vm371, %v408, %v410
        %412 = vrot.lane.b32.xlu0 %v374, 32
        %v413 = vpop.permute.xlu0 %412
        %414 = vrot.lane.b32.xlu0 %v376, 32
        %v415 = vpop.permute.xlu0 %414
        %416 = vrot.lane.b32.xlu0 %v379, 32
        %v417 = vpop.permute.xlu0 %416
        %418 = vrot.lane.b32.xlu0 %v381, 32
        %v419 = vpop.permute.xlu0 %418
        %420 = vrot.lane.b32.xlu0 %v384, 32
        %v421 = vpop.permute.xlu0 %420
        %422 = vrot.lane.b32.xlu0 %v386, 32
        %v423 = vpop.permute.xlu0 %422
        %424 = vrot.lane.b32.xlu0 %v389, 32
        %v425 = vpop.permute.xlu0 %424
        %426 = vrot.lane.b32.xlu0 %v391, 32
        %v427 = vpop.permute.xlu0 %426
        %428 = vrot.lane.b32.xlu0 %v394, 32
        %v429 = vpop.permute.xlu0 %428
        %430 = vrot.lane.b32.xlu0 %v396, 32
        %v431 = vpop.permute.xlu0 %430
        %432 = vrot.lane.b32.xlu0 %v399, 32
        %v433 = vpop.permute.xlu0 %432
        %434 = vrot.lane.b32.xlu0 %v401, 32
        %v435 = vpop.permute.xlu0 %434
        %436 = vrot.lane.b32.xlu0 %v404, 32
        %v437 = vpop.permute.xlu0 %436
        %438 = vrot.lane.b32.xlu0 %v406, 32
        %v439 = vpop.permute.xlu0 %438
        %440 = vrot.lane.b32.xlu0 %v409, 32
        %v441 = vpop.permute.xlu0 %440
        %442 = vrot.lane.b32.xlu0 %v411, 32
        %v443 = vpop.permute.xlu0 %442
        %vm460 = vcmask 1045504
        %v461 = vrot.slane %v269, 2
        %v462 = vrot.slane %v270, 2
        %v463 = vsel %vm460, %v461, %v462
        %v464 = vrot.slane %v271, 2
        %v465 = vsel %vm460, %v462, %v464
        %v466 = vrot.slane %v272, 2
        %v467 = vrot.slane %v273, 2
        %v468 = vsel %vm460, %v466, %v467
        %v469 = vrot.slane %v274, 2
        %v470 = vsel %vm460, %v467, %v469
        %v471 = vrot.slane %v275, 2
        %v472 = vrot.slane %v276, 2
        %v473 = vsel %vm460, %v471, %v472
        %v474 = vrot.slane %v277, 2
        %v475 = vsel %vm460, %v472, %v474
        %v476 = vrot.slane %v278, 2
        %v477 = vrot.slane %v279, 2
        %v478 = vsel %vm460, %v476, %v477
        %v479 = vrot.slane %v280, 2
        %v480 = vsel %vm460, %v477, %v479
        %v481 = vrot.slane %v281, 2
        %v482 = vrot.slane %v282, 2
        %v483 = vsel %vm460, %v481, %v482
        %v484 = vrot.slane %v283, 2
        %v485 = vsel %vm460, %v482, %v484
        %v486 = vrot.slane %v284, 2
        %v487 = vrot.slane %v285, 2
        %v488 = vsel %vm460, %v486, %v487
        %v489 = vrot.slane %v286, 2
        %v490 = vsel %vm460, %v487, %v489
        %v491 = vrot.slane %v287, 2
        %v492 = vrot.slane %v288, 2
        %v493 = vsel %vm460, %v491, %v492
        %v494 = vrot.slane %v289, 2
        %v495 = vsel %vm460, %v492, %v494
        %v496 = vrot.slane %v290, 2
        %v497 = vrot.slane %v291, 2
        %v498 = vsel %vm460, %v496, %v497
        %v499 = vrot.slane %v292, 2
        %v500 = vsel %vm460, %v497, %v499
        %501 = vrot.lane.b32.xlu0 %v463, 64
        %v502 = vpop.permute.xlu0 %501
        %503 = vrot.lane.b32.xlu0 %v465, 64
        %v504 = vpop.permute.xlu0 %503
        %505 = vrot.lane.b32.xlu0 %v468, 64
        %v506 = vpop.permute.xlu0 %505
        %507 = vrot.lane.b32.xlu0 %v470, 64
        %v508 = vpop.permute.xlu0 %507
        %509 = vrot.lane.b32.xlu0 %v473, 64
        %v510 = vpop.permute.xlu0 %509
        %511 = vrot.lane.b32.xlu0 %v475, 64
        %v512 = vpop.permute.xlu0 %511
        %513 = vrot.lane.b32.xlu0 %v478, 64
        %v514 = vpop.permute.xlu0 %513
        %515 = vrot.lane.b32.xlu0 %v480, 64
        %v516 = vpop.permute.xlu0 %515
        %517 = vrot.lane.b32.xlu0 %v483, 64
        %v518 = vpop.permute.xlu0 %517
        %519 = vrot.lane.b32.xlu0 %v485, 64
        %v520 = vpop.permute.xlu0 %519
        %521 = vrot.lane.b32.xlu0 %v488, 64
        %v522 = vpop.permute.xlu0 %521
        %523 = vrot.lane.b32.xlu0 %v490, 64
        %v524 = vpop.permute.xlu0 %523
        %525 = vrot.lane.b32.xlu0 %v493, 64
        %v526 = vpop.permute.xlu0 %525
        %527 = vrot.lane.b32.xlu0 %v495, 64
        %v528 = vpop.permute.xlu0 %527
        %529 = vrot.lane.b32.xlu0 %v498, 64
        %v530 = vpop.permute.xlu0 %529
        %531 = vrot.lane.b32.xlu0 %v500, 64
        %v532 = vpop.permute.xlu0 %531
        %565 = vrot.lane.b32.xlu0 %v296, 96
        %v566 = vpop.permute.xlu0 %565
        %567 = vrot.lane.b32.xlu0 %v297, 96
        %v568 = vpop.permute.xlu0 %567
        %569 = vrot.lane.b32.xlu0 %v299, 96
        %v570 = vpop.permute.xlu0 %569
        %571 = vrot.lane.b32.xlu0 %v300, 96
        %v572 = vpop.permute.xlu0 %571
        %573 = vrot.lane.b32.xlu0 %v302, 96
        %v574 = vpop.permute.xlu0 %573
        %575 = vrot.lane.b32.xlu0 %v303, 96
        %v576 = vpop.permute.xlu0 %575
        %577 = vrot.lane.b32.xlu0 %v305, 96
        %v578 = vpop.permute.xlu0 %577
        %579 = vrot.lane.b32.xlu0 %v306, 96
        %v580 = vpop.permute.xlu0 %579
        %581 = vrot.lane.b32.xlu0 %v308, 96
        %v582 = vpop.permute.xlu0 %581
        %583 = vrot.lane.b32.xlu0 %v309, 96
        %v584 = vpop.permute.xlu0 %583
        %585 = vrot.lane.b32.xlu0 %v311, 96
        %v586 = vpop.permute.xlu0 %585
        %587 = vrot.lane.b32.xlu0 %v312, 96
        %v588 = vpop.permute.xlu0 %587
        %589 = vrot.lane.b32.xlu0 %v314, 96
        %v590 = vpop.permute.xlu0 %589
        %591 = vrot.lane.b32.xlu0 %v315, 96
        %v592 = vpop.permute.xlu0 %591
        %593 = vrot.lane.b32.xlu0 %v317, 96
        %v594 = vpop.permute.xlu0 %593
        %595 = vrot.lane.b32.xlu0 %v318, 96
        %v596 = vpop.permute.xlu0 %595
        %v621 = vrot.slane %v296, 1
        %v622 = vrot.slane %v297, 1
        %v623 = vsel %vm371, %v621, %v622
        %v624 = vrot.slane %v298, 1
        %v625 = vsel %vm371, %v622, %v624
        %v626 = vrot.slane %v299, 1
        %v627 = vrot.slane %v300, 1
        %v628 = vsel %vm371, %v626, %v627
        %v629 = vrot.slane %v301, 1
        %v630 = vsel %vm371, %v627, %v629
        %v631 = vrot.slane %v302, 1
        %v632 = vrot.slane %v303, 1
        %v633 = vsel %vm371, %v631, %v632
        %v634 = vrot.slane %v304, 1
        %v635 = vsel %vm371, %v632, %v634
        %v636 = vrot.slane %v305, 1
        %v637 = vrot.slane %v306, 1
        %v638 = vsel %vm371, %v636, %v637
        %v639 = vrot.slane %v307, 1
        %v640 = vsel %vm371, %v637, %v639
        %v641 = vrot.slane %v308, 1
        %v642 = vrot.slane %v309, 1
        %v643 = vsel %vm371, %v641, %v642
        %v644 = vrot.slane %v310, 1
        %v645 = vsel %vm371, %v642, %v644
        %v646 = vrot.slane %v311, 1
        %v647 = vrot.slane %v312, 1
        %v648 = vsel %vm371, %v646, %v647
        %v649 = vrot.slane %v313, 1
        %v650 = vsel %vm371, %v647, %v649
        %v651 = vrot.slane %v314, 1
        %v652 = vrot.slane %v315, 1
        %v653 = vsel %vm371, %v651, %v652
        %v654 = vrot.slane %v316, 1
        %v655 = vsel %vm371, %v652, %v654
        %v656 = vrot.slane %v317, 1
        %v657 = vrot.slane %v318, 1
        %v658 = vsel %vm371, %v656, %v657
        %v659 = vrot.slane %v319, 1
        %v660 = vsel %vm371, %v657, %v659
        %v677 = vrot.slane %v296, 2
        %v678 = vrot.slane %v297, 2
        %v679 = vsel %vm460, %v677, %v678
        %v680 = vrot.slane %v298, 2
        %v681 = vsel %vm460, %v678, %v680
        %v682 = vrot.slane %v299, 2
        %v683 = vrot.slane %v300, 2
        %v684 = vsel %vm460, %v682, %v683
        %v685 = vrot.slane %v301, 2
        %v686 = vsel %vm460, %v683, %v685
        %v687 = vrot.slane %v302, 2
        %v688 = vrot.slane %v303, 2
        %v689 = vsel %vm460, %v687, %v688
        %v690 = vrot.slane %v304, 2
        %v691 = vsel %vm460, %v688, %v690
        %v692 = vrot.slane %v305, 2
        %v693 = vrot.slane %v306, 2
        %v694 = vsel %vm460, %v692, %v693
        %v695 = vrot.slane %v307, 2
        %v696 = vsel %vm460, %v693, %v695
        %v697 = vrot.slane %v308, 2
        %v698 = vrot.slane %v309, 2
        %v699 = vsel %vm460, %v697, %v698
        %v700 = vrot.slane %v310, 2
        %v701 = vsel %vm460, %v698, %v700
        %v702 = vrot.slane %v311, 2
        %v703 = vrot.slane %v312, 2
        %v704 = vsel %vm460, %v702, %v703
        %v705 = vrot.slane %v313, 2
        %v706 = vsel %vm460, %v703, %v705
        %v707 = vrot.slane %v314, 2
        %v708 = vrot.slane %v315, 2
        %v709 = vsel %vm460, %v707, %v708
        %v710 = vrot.slane %v316, 2
        %v711 = vsel %vm460, %v708, %v710
        %v712 = vrot.slane %v317, 2
        %v713 = vrot.slane %v318, 2
        %v714 = vsel %vm460, %v712, %v713
        %v715 = vrot.slane %v319, 2
        %v716 = vsel %vm460, %v713, %v715
        %717 = vrot.lane.b32.xlu0 %v679, 32
        %v718 = vpop.permute.xlu0 %717
        %719 = vrot.lane.b32.xlu0 %v681, 32
        %v720 = vpop.permute.xlu0 %719
        %721 = vrot.lane.b32.xlu0 %v684, 32
        %v722 = vpop.permute.xlu0 %721
        %723 = vrot.lane.b32.xlu0 %v686, 32
        %v724 = vpop.permute.xlu0 %723
        %725 = vrot.lane.b32.xlu0 %v689, 32
        %v726 = vpop.permute.xlu0 %725
        %727 = vrot.lane.b32.xlu0 %v691, 32
        %v728 = vpop.permute.xlu0 %727
        %729 = vrot.lane.b32.xlu0 %v694, 32
        %v730 = vpop.permute.xlu0 %729
        %731 = vrot.lane.b32.xlu0 %v696, 32
        %v732 = vpop.permute.xlu0 %731
        %733 = vrot.lane.b32.xlu0 %v699, 32
        %v734 = vpop.permute.xlu0 %733
        %735 = vrot.lane.b32.xlu0 %v701, 32
        %v736 = vpop.permute.xlu0 %735
        %737 = vrot.lane.b32.xlu0 %v704, 32
        %v738 = vpop.permute.xlu0 %737
        %739 = vrot.lane.b32.xlu0 %v706, 32
        %v740 = vpop.permute.xlu0 %739
        %741 = vrot.lane.b32.xlu0 %v709, 32
        %v742 = vpop.permute.xlu0 %741
        %743 = vrot.lane.b32.xlu0 %v711, 32
        %v744 = vpop.permute.xlu0 %743
        %745 = vrot.lane.b32.xlu0 %v714, 32
        %v746 = vpop.permute.xlu0 %745
        %747 = vrot.lane.b32.xlu0 %v716, 32
        %v748 = vpop.permute.xlu0 %747
        %781 = vrot.lane.b32.xlu0 %v323, 64
        %v782 = vpop.permute.xlu0 %781
        %783 = vrot.lane.b32.xlu0 %v324, 64
        %v784 = vpop.permute.xlu0 %783
        %785 = vrot.lane.b32.xlu0 %v326, 64
        %v786 = vpop.permute.xlu0 %785
        %787 = vrot.lane.b32.xlu0 %v327, 64
        %v788 = vpop.permute.xlu0 %787
        %789 = vrot.lane.b32.xlu0 %v329, 64
        %v790 = vpop.permute.xlu0 %789
        %791 = vrot.lane.b32.xlu0 %v330, 64
        %v792 = vpop.permute.xlu0 %791
        %793 = vrot.lane.b32.xlu0 %v332, 64
        %v794 = vpop.permute.xlu0 %793
        %795 = vrot.lane.b32.xlu0 %v333, 64
        %v796 = vpop.permute.xlu0 %795
        %797 = vrot.lane.b32.xlu0 %v335, 64
        %v798 = vpop.permute.xlu0 %797
        %799 = vrot.lane.b32.xlu0 %v336, 64
        %v800 = vpop.permute.xlu0 %799
        %801 = vrot.lane.b32.xlu0 %v338, 64
        %v802 = vpop.permute.xlu0 %801
        %803 = vrot.lane.b32.xlu0 %v339, 64
        %v804 = vpop.permute.xlu0 %803
        %805 = vrot.lane.b32.xlu0 %v341, 64
        %v806 = vpop.permute.xlu0 %805
        %807 = vrot.lane.b32.xlu0 %v342, 64
        %v808 = vpop.permute.xlu0 %807
        %809 = vrot.lane.b32.xlu0 %v344, 64
        %v810 = vpop.permute.xlu0 %809
        %811 = vrot.lane.b32.xlu0 %v345, 64
        %v812 = vpop.permute.xlu0 %811
        %v837 = vrot.slane %v323, 1
        %v838 = vrot.slane %v324, 1
        %v839 = vsel %vm371, %v837, %v838
        %v840 = vrot.slane %v325, 1
        %v841 = vsel %vm371, %v838, %v840
        %v842 = vrot.slane %v326, 1
        %v843 = vrot.slane %v327, 1
        %v844 = vsel %vm371, %v842, %v843
        %v845 = vrot.slane %v328, 1
        %v846 = vsel %vm371, %v843, %v845
        %v847 = vrot.slane %v329, 1
        %v848 = vrot.slane %v330, 1
        %v849 = vsel %vm371, %v847, %v848
        %v850 = vrot.slane %v331, 1
        %v851 = vsel %vm371, %v848, %v850
        %v852 = vrot.slane %v332, 1
        %v853 = vrot.slane %v333, 1
        %v854 = vsel %vm371, %v852, %v853
        %v855 = vrot.slane %v334, 1
        %v856 = vsel %vm371, %v853, %v855
        %v857 = vrot.slane %v335, 1
        %v858 = vrot.slane %v336, 1
        %v859 = vsel %vm371, %v857, %v858
        %v860 = vrot.slane %v337, 1
        %v861 = vsel %vm371, %v858, %v860
        %v862 = vrot.slane %v338, 1
        %v863 = vrot.slane %v339, 1
        %v864 = vsel %vm371, %v862, %v863
        %v865 = vrot.slane %v340, 1
        %v866 = vsel %vm371, %v863, %v865
        %v867 = vrot.slane %v341, 1
        %v868 = vrot.slane %v342, 1
        %v869 = vsel %vm371, %v867, %v868
        %v870 = vrot.slane %v343, 1
        %v871 = vsel %vm371, %v868, %v870
        %v872 = vrot.slane %v344, 1
        %v873 = vrot.slane %v345, 1
        %v874 = vsel %vm371, %v872, %v873
        %v875 = vrot.slane %v346, 1
        %v876 = vsel %vm371, %v873, %v875
        %877 = vrot.lane.b32.xlu0 %v839, 96
        %v878 = vpop.permute.xlu0 %877
        %879 = vrot.lane.b32.xlu0 %v841, 96
        %v880 = vpop.permute.xlu0 %879
        %881 = vrot.lane.b32.xlu0 %v844, 96
        %v882 = vpop.permute.xlu0 %881
        %883 = vrot.lane.b32.xlu0 %v846, 96
        %v884 = vpop.permute.xlu0 %883
        %885 = vrot.lane.b32.xlu0 %v849, 96
        %v886 = vpop.permute.xlu0 %885
        %887 = vrot.lane.b32.xlu0 %v851, 96
        %v888 = vpop.permute.xlu0 %887
        %889 = vrot.lane.b32.xlu0 %v854, 96
        %v890 = vpop.permute.xlu0 %889
        %891 = vrot.lane.b32.xlu0 %v856, 96
        %v892 = vpop.permute.xlu0 %891
        %893 = vrot.lane.b32.xlu0 %v859, 96
        %v894 = vpop.permute.xlu0 %893
        %895 = vrot.lane.b32.xlu0 %v861, 96
        %v896 = vpop.permute.xlu0 %895
        %897 = vrot.lane.b32.xlu0 %v864, 96
        %v898 = vpop.permute.xlu0 %897
        %899 = vrot.lane.b32.xlu0 %v866, 96
        %v900 = vpop.permute.xlu0 %899
        %901 = vrot.lane.b32.xlu0 %v869, 96
        %v902 = vpop.permute.xlu0 %901
        %903 = vrot.lane.b32.xlu0 %v871, 96
        %v904 = vpop.permute.xlu0 %903
        %905 = vrot.lane.b32.xlu0 %v874, 96
        %v906 = vpop.permute.xlu0 %905
        %907 = vrot.lane.b32.xlu0 %v876, 96
        %v908 = vpop.permute.xlu0 %907
        %v925 = vrot.slane %v323, 2
        %v926 = vrot.slane %v324, 2
        %v927 = vsel %vm460, %v925, %v926
        %v928 = vrot.slane %v325, 2
        %v929 = vsel %vm460, %v926, %v928
        %v930 = vrot.slane %v326, 2
        %v931 = vrot.slane %v327, 2
        %v932 = vsel %vm460, %v930, %v931
        %v933 = vrot.slane %v328, 2
        %v934 = vsel %vm460, %v931, %v933
        %v935 = vrot.slane %v329, 2
        %v936 = vrot.slane %v330, 2
        %v937 = vsel %vm460, %v935, %v936
        %v938 = vrot.slane %v331, 2
        %v939 = vsel %vm460, %v936, %v938
        %v940 = vrot.slane %v332, 2
        %v941 = vrot.slane %v333, 2
        %v942 = vsel %vm460, %v940, %v941
        %v943 = vrot.slane %v334, 2
        %v944 = vsel %vm460, %v941, %v943
        %v945 = vrot.slane %v335, 2
        %v946 = vrot.slane %v336, 2
        %v947 = vsel %vm460, %v945, %v946
        %v948 = vrot.slane %v337, 2
        %v949 = vsel %vm460, %v946, %v948
        %v950 = vrot.slane %v338, 2
        %v951 = vrot.slane %v339, 2
        %v952 = vsel %vm460, %v950, %v951
        %v953 = vrot.slane %v340, 2
        %v954 = vsel %vm460, %v951, %v953
        %v955 = vrot.slane %v341, 2
        %v956 = vrot.slane %v342, 2
        %v957 = vsel %vm460, %v955, %v956
        %v958 = vrot.slane %v343, 2
        %v959 = vsel %vm460, %v956, %v958
        %v960 = vrot.slane %v344, 2
        %v961 = vrot.slane %v345, 2
        %v962 = vsel %vm460, %v960, %v961
        %v963 = vrot.slane %v346, 2
        %v964 = vsel %vm460, %v961, %v963
        %vm965 = vcmask 261120
        %v966 = vsel %vm965, %v269, %v413
        %v967 = vsel %vm965, %v270, %v415
        %v968 = vsel %vm965, %v272, %v417
        %v969 = vsel %vm965, %v273, %v419
        %v970 = vsel %vm965, %v275, %v421
        %v971 = vsel %vm965, %v276, %v423
        %v972 = vsel %vm965, %v278, %v425
        %v973 = vsel %vm965, %v279, %v427
        %v974 = vsel %vm965, %v281, %v429
        %v975 = vsel %vm965, %v282, %v431
        %v976 = vsel %vm965, %v284, %v433
        %v977 = vsel %vm965, %v285, %v435
        %v978 = vsel %vm965, %v287, %v437
        %v979 = vsel %vm965, %v288, %v439
        %v980 = vsel %vm965, %v290, %v441
        %v981 = vsel %vm965, %v291, %v443
        %vm982 = vcmask 523264
        %v983 = vsel %vm982, %v966, %v502
        %v984 = vsel %vm982, %v967, %v504
        %v985 = vsel %vm982, %v968, %v506
        %v986 = vsel %vm982, %v969, %v508
        %v987 = vsel %vm982, %v970, %v510
        %v988 = vsel %vm982, %v971, %v512
        %v989 = vsel %vm982, %v972, %v514
        %v990 = vsel %vm982, %v973, %v516
        %v991 = vsel %vm982, %v974, %v518
        %v992 = vsel %vm982, %v975, %v520
        %v993 = vsel %vm982, %v976, %v522
        %v994 = vsel %vm982, %v977, %v524
        %v995 = vsel %vm982, %v978, %v526
        %v996 = vsel %vm982, %v979, %v528
        %v997 = vsel %vm982, %v980, %v530
        %v998 = vsel %vm982, %v981, %v532
        %vm999 = vcmask 785408
        %v1000 = vsel %vm999, %v983, %v566
        %v1001 = vsel %vm999, %v984, %v568
        %v1002 = vsel %vm999, %v985, %v570
        %v1003 = vsel %vm999, %v986, %v572
        %v1004 = vsel %vm999, %v987, %v574
        %v1005 = vsel %vm999, %v988, %v576
        %v1006 = vsel %vm999, %v989, %v578
        %v1007 = vsel %vm999, %v990, %v580
        %v1008 = vsel %vm999, %v991, %v582
        %v1009 = vsel %vm999, %v992, %v584
        %v1010 = vsel %vm999, %v993, %v586
        %v1011 = vsel %vm999, %v994, %v588
        %v1012 = vsel %vm999, %v995, %v590
        %v1013 = vsel %vm999, %v996, %v592
        %v1014 = vsel %vm999, %v997, %v594
        %v1015 = vsel %vm999, %v998, %v596
        %v1016 = vsel %vm965, %v623, %v718
        %v1017 = vsel %vm965, %v625, %v720
        %v1018 = vsel %vm965, %v628, %v722
        %v1019 = vsel %vm965, %v630, %v724
        %v1020 = vsel %vm965, %v633, %v726
        %v1021 = vsel %vm965, %v635, %v728
        %v1022 = vsel %vm965, %v638, %v730
        %v1023 = vsel %vm965, %v640, %v732
        %v1024 = vsel %vm965, %v643, %v734
        %v1025 = vsel %vm965, %v645, %v736
        %v1026 = vsel %vm965, %v648, %v738
        %v1027 = vsel %vm965, %v650, %v740
        %v1028 = vsel %vm965, %v653, %v742
        %v1029 = vsel %vm965, %v655, %v744
        %v1030 = vsel %vm965, %v658, %v746
        %v1031 = vsel %vm965, %v660, %v748
        %v1032 = vsel %vm982, %v1016, %v782
        %v1033 = vsel %vm982, %v1017, %v784
        %v1034 = vsel %vm982, %v1018, %v786
        %v1035 = vsel %vm982, %v1019, %v788
        %v1036 = vsel %vm982, %v1020, %v790
        %v1037 = vsel %vm982, %v1021, %v792
        %v1038 = vsel %vm982, %v1022, %v794
        %v1039 = vsel %vm982, %v1023, %v796
        %v1040 = vsel %vm982, %v1024, %v798
        %v1041 = vsel %vm982, %v1025, %v800
        %v1042 = vsel %vm982, %v1026, %v802
        %v1043 = vsel %vm982, %v1027, %v804
        %v1044 = vsel %vm982, %v1028, %v806
        %v1045 = vsel %vm982, %v1029, %v808
        %v1046 = vsel %vm982, %v1030, %v810
        %v1047 = vsel %vm982, %v1031, %v812
        %v1048 = vsel %vm999, %v1032, %v878
        %v1049 = vsel %vm999, %v1033, %v880
        %v1050 = vsel %vm999, %v1034, %v882
        %v1051 = vsel %vm999, %v1035, %v884
        %v1052 = vsel %vm999, %v1036, %v886
        %v1053 = vsel %vm999, %v1037, %v888
        %v1054 = vsel %vm999, %v1038, %v890
        %v1055 = vsel %vm999, %v1039, %v892
        %v1056 = vsel %vm999, %v1040, %v894
        %v1057 = vsel %vm999, %v1041, %v896
        %v1058 = vsel %vm999, %v1042, %v898
        %v1059 = vsel %vm999, %v1043, %v900
        %v1060 = vsel %vm999, %v1044, %v902
        %v1061 = vsel %vm999, %v1045, %v904
        %v1062 = vsel %vm999, %v1046, %v906
        %v1063 = vsel %vm999, %v1047, %v908
        %v1064 = vld [vmem:[#allocation5] sm:$0xff]
        %v1065 = vld [vmem:[#allocation5 + $0x8] sm:$0xff]
        %v1066 = vld [vmem:[#allocation5 + $0x10] sm:$0xff]
        %v1067 = vld [vmem:[#allocation5 + $0x18] sm:$0xff]
        %v1068 = vld [vmem:[#allocation5 + $0x20] sm:$0xff]
        %v1069 = vld [vmem:[#allocation5 + $0x28] sm:$0xff]
        %v1070 = vld [vmem:[#allocation5 + $0x30] sm:$0xff]
        %v1071 = vld [vmem:[#allocation5 + $0x38] sm:$0xff]
        %v1072 = vld [vmem:[#allocation5 + $0x40] sm:$0xff]
        %v1073 = vld [vmem:[#allocation5 + $0x48] sm:$0xff]
        %v1074 = vld [vmem:[#allocation5 + $0x50] sm:$0xff]
        %v1075 = vld [vmem:[#allocation5 + $0x58] sm:$0xff]
        %v1076 = vld [vmem:[#allocation5 + $0x60] sm:$0xff]
        %v1077 = vld [vmem:[#allocation5 + $0x68] sm:$0xff]
        %v1078 = vld [vmem:[#allocation5 + $0x70] sm:$0xff]
        %v1079 = vld [vmem:[#allocation5 + $0x78] sm:$0xff]
        %v1080 = vld [vmem:[#allocation5 + $0x80] sm:$0xff]
        %v1081 = vld [vmem:[#allocation5 + $0x88] sm:$0xff]
        %v1082 = vld [vmem:[#allocation5 + $0x90] sm:$0xff]
        %v1083 = vld [vmem:[#allocation5 + $0x98] sm:$0xff]
        %v1084 = vld [vmem:[#allocation5 + $0xa0] sm:$0xff]
        %v1085 = vld [vmem:[#allocation5 + $0xa8] sm:$0xff]
        %v1086 = vld [vmem:[#allocation5 + $0xb0] sm:$0xff]
        %v1087 = vld [vmem:[#allocation5 + $0xb8] sm:$0xff]
        %v1088 = vld [vmem:[#allocation5 + $0xc0] sm:$0xff]
        %v1089 = vld [vmem:[#allocation5 + $0xc8] sm:$0xff]
        %v1090 = vld [vmem:[#allocation5 + $0xd0] sm:$0xff]
        %v1091 = vld [vmem:[#allocation5 + $0xd8] sm:$0xff]
        %v1092 = vld [vmem:[#allocation5 + $0xe0] sm:$0xff]
        %v1093 = vld [vmem:[#allocation5 + $0xe8] sm:$0xff]
        %v1094 = vld [vmem:[#allocation5 + $0xf0] sm:$0xff]
        %v1095 = vld [vmem:[#allocation5 + $0xf8] sm:$0xff]
        %v1096 = vld [vmem:[#allocation5 + $0x100] sm:$0xff]
        %v1097 = vld [vmem:[#allocation5 + $0x108] sm:$0xff]
        %v1098 = vld [vmem:[#allocation5 + $0x110] sm:$0xff]
        %v1099 = vld [vmem:[#allocation5 + $0x118] sm:$0xff]
        %v1100 = vsel %vm965, %v927, 0
        %v1102 = vsel %vm965, %v929, 0
        %v1104 = vsel %vm965, %v932, 0
        %v1106 = vsel %vm965, %v934, 0
        %v1108 = vsel %vm965, %v937, 0
        %v1110 = vsel %vm965, %v939, 0
        %v1112 = vsel %vm965, %v942, 0
        %v1114 = vsel %vm965, %v944, 0
        %v1116 = vsel %vm965, %v947, 0
        %v1118 = vsel %vm965, %v949, 0
        %v1120 = vsel %vm965, %v952, 0
        %v1122 = vsel %vm965, %v954, 0
        %v1124 = vsel %vm965, %v957, 0
        %v1126 = vsel %vm965, %v959, 0
        %v1128 = vsel %vm965, %v962, 0
        %v1130 = vsel %vm965, %v964, 0
        %1132 = vmatprep.subr.mxu0 0.0
        %1133 = vmatpush1.msra.mxu0 %v1064
        %1134 = vmatprep.subr.mxu0 0.0
        %1135 = vmatpush1.msra.mxu0 %v1065
        %1136 = vmatprep.subr.mxu0 0.0
        %1137 = vmatpush1.msra.mxu0 %v1066
        %1138 = vmatprep.subr.mxu0 0.0
        %1139 = vmatpush1.msra.mxu0 %v1067
        %1140 = vmatprep.subr.mxu0 0.0
        %1141 = vmatpush1.msra.mxu0 %v1068
        %1142 = vmatprep.subr.mxu0 0.0
        %1143 = vmatpush1.msra.mxu0 %v1069
        %1144 = vmatprep.subr.mxu0 0.0
        %1145 = vmatpush1.msra.mxu0 %v1070
        %1146 = vmatprep.subr.mxu0 0.0
        %1147 = vmatpush1.msra.mxu0 %v1071
        %1148 = vmatprep.subr.mxu0 0.0
        %1149 = vmatpush1.msra.mxu0 %v1072
        %1150 = vmatprep.subr.mxu0 0.0
        %1151 = vmatpush1.msra.mxu0 %v1073
        %1152 = vmatprep.subr.mxu0 0.0
        %1153 = vmatpush1.msra.mxu0 %v1074
        %1154 = vmatprep.subr.mxu0 0.0
        %1155 = vmatpush1.msra.mxu0 %v1075
        %1156 = vmatprep.subr.mxu0 0.0
        %1157 = vmatpush1.msra.mxu0 %v1076
        %1158 = vmatprep.subr.mxu0 0.0
        %1159 = vmatpush1.msra.mxu0 %v1077
        %1160 = vmatprep.subr.mxu0 0.0
        %1161 = vmatpush1.msra.mxu0 %v1078
        %1162 = vmatprep.subr.mxu0 0.0
        %1163 = vmatpush1.msra.mxu0 %v1079
        %1164 = vmatprep.subr.mxu0 0.0
        %1165 = vmatpush1.msra.mxu0 %v1080
        %1166 = vmatprep.subr.mxu0 0.0
        %1167 = vmatpush1.msra.mxu0 %v1081
        %1168 = vmatprep.subr.mxu0 0.0
        %1169 = vmatpush1.msra.mxu0 %v1082
        %1170 = vmatprep.subr.mxu0 0.0
        %1171 = vmatpush1.msra.mxu0 %v1083
        %1172 = vmatprep.subr.mxu0 0.0
        %1173 = vmatpush1.msra.mxu0 %v1084
        %1174 = vmatprep.subr.mxu0 0.0
        %1175 = vmatpush1.msra.mxu0 %v1085
        %1176 = vmatprep.subr.mxu0 0.0
        %1177 = vmatpush1.msra.mxu0 %v1086
        %1178 = vmatprep.subr.mxu0 0.0
        %1179 = vmatpush1.msra.mxu0 %v1087
        %1180 = vmatprep.subr.mxu0 0.0
        %1181 = vmatpush1.msra.mxu0 %v1088
        %1182 = vmatprep.subr.mxu0 0.0
        %1183 = vmatpush1.msra.mxu0 %v1089
        %1184 = vmatprep.subr.mxu0 0.0
        %1185 = vmatpush1.msra.mxu0 %v1090
        %1186 = vmatprep.subr.mxu0 0.0
        %1187 = vmatpush1.msra.mxu0 %v1091
        %1188 = vmatprep.subr.mxu0 0.0
        %1189 = vmatpush1.msra.mxu0 %v1092
        %1190 = vmatprep.subr.mxu0 0.0
        %1191 = vmatpush1.msra.mxu0 %v1093
        %1192 = vmatprep.subr.mxu0 0.0
        %1193 = vmatpush1.msra.mxu0 %v1094
        %1194 = vmatprep.subr.mxu0 0.0
        %1195 = vmatpush1.msra.mxu0 %v1095
        %1196 = vmatprep.mubr.f32.mxu0 %v1048
        %1197 = vmatmul.mubr.f32.gmra.mrb[0].mxu0 %v1000
        %v1198 = vpop.f32.mrb[0].mxu0
        %v1199 = vadd.f32 0.0, %v1198
        %v1200 = vpop.f32.mrb[0].mxu0
        %1201 = vmatprep.mubr.f32.mxu0 %v1049
        %1202 = vmatmul.mubr.f32.gmra.mrb[0].mxu0 %v1001
        %v1203 = vpop.f32.mrb[0].mxu0
        %v1204 = vadd.f32 0.0, %v1203
        %v1205 = vpop.f32.mrb[0].mxu0
        %1206 = vmatprep.mubr.f32.mxu0 %v1050
        %1207 = vmatmul.mubr.f32.gmra.mrb[0].mxu0 %v1002
        %v1208 = vpop.f32.mrb[0].mxu0
        %v1209 = vadd.f32 0.0, %v1208
        %v1210 = vpop.f32.mrb[0].mxu0
        %1211 = vmatprep.mubr.f32.mxu0 %v1051
        %1212 = vmatmul.mubr.f32.gmra.mrb[0].mxu0 %v1003
        %v1213 = vpop.f32.mrb[0].mxu0
        %v1214 = vadd.f32 0.0, %v1213
        %v1215 = vpop.f32.mrb[0].mxu0
        %1216 = vmatprep.mubr.f32.mxu0 %v1052
        %1217 = vmatmul.mubr.f32.gmra.mrb[0].mxu0 %v1004
        %v1218 = vpop.f32.mrb[0].mxu0
        %v1219 = vadd.f32 0.0, %v1218
        %v1220 = vpop.f32.mrb[0].mxu0
        %1221 = vmatprep.mubr.f32.mxu0 %v1053
        %1222 = vmatmul.mubr.f32.gmra.mrb[0].mxu0 %v1005
        %v1223 = vpop.f32.mrb[0].mxu0
        %v1224 = vadd.f32 0.0, %v1223
        %v1225 = vpop.f32.mrb[0].mxu0
        %1226 = vmatprep.mubr.f32.mxu0 %v1054
        %1227 = vmatmul.mubr.f32.gmra.mrb[0].mxu0 %v1006
        %v1228 = vpop.f32.mrb[0].mxu0
        %v1229 = vadd.f32 0.0, %v1228
        %v1230 = vpop.f32.mrb[0].mxu0
        %1231 = vmatprep.mubr.f32.mxu0 %v1055
        %1232 = vmatmul.mubr.f32.gmra.mrb[0].mxu0 %v1007
        %v1233 = vpop.f32.mrb[0].mxu0
        %v1234 = vadd.f32 0.0, %v1233
        %v1235 = vpop.f32.mrb[0].mxu0
        %1236 = vmatprep.mubr.f32.mxu0 %v1056
        %1237 = vmatmul.mubr.f32.gmra.mrb[0].mxu0 %v1008
        %v1238 = vpop.f32.mrb[0].mxu0
        %v1239 = vadd.f32 0.0, %v1238
        %v1240 = vpop.f32.mrb[0].mxu0
        %1241 = vmatprep.mubr.f32.mxu0 %v1057
        %1242 = vmatmul.mubr.f32.gmra.mrb[0].mxu0 %v1009
        %v1243 = vpop.f32.mrb[0].mxu0
        %v1244 = vadd.f32 0.0, %v1243
        %v1245 = vpop.f32.mrb[0].mxu0
        %1246 = vmatprep.mubr.f32.mxu0 %v1058
        %1247 = vmatmul.mubr.f32.gmra.mrb[0].mxu0 %v1010
        %v1248 = vpop.f32.mrb[0].mxu0
        %v1249 = vadd.f32 0.0, %v1248
        %v1250 = vpop.f32.mrb[0].mxu0
        %1251 = vmatprep.mubr.f32.mxu0 %v1059
        %1252 = vmatmul.mubr.f32.gmra.mrb[0].mxu0 %v1011
        %v1253 = vpop.f32.mrb[0].mxu0
        %v1254 = vadd.f32 0.0, %v1253
        %v1255 = vpop.f32.mrb[0].mxu0
        %1256 = vmatprep.mubr.f32.mxu0 %v1060
        %1257 = vmatmul.mubr.f32.gmra.mrb[0].mxu0 %v1012
        %v1258 = vpop.f32.mrb[0].mxu0
        %v1259 = vadd.f32 0.0, %v1258
        %v1260 = vpop.f32.mrb[0].mxu0
        %1261 = vmatprep.mubr.f32.mxu0 %v1061
        %1262 = vmatmul.mubr.f32.gmra.mrb[0].mxu0 %v1013
        %v1263 = vpop.f32.mrb[0].mxu0
        %v1264 = vadd.f32 0.0, %v1263
        %v1265 = vpop.f32.mrb[0].mxu0
        %1266 = vmatprep.mubr.f32.mxu0 %v1062
        %1267 = vmatmul.mubr.f32.gmra.mrb[0].mxu0 %v1014
        %v1268 = vpop.f32.mrb[0].mxu0
        %v1269 = vadd.f32 0.0, %v1268
        %v1270 = vpop.f32.mrb[0].mxu0
        %1271 = vmatprep.mubr.f32.mxu0 %v1063
        %1272 = vmatmul.mubr.f32.gmra.mrb[0].mxu0 %v1015
        %v1273 = vpop.f32.mrb[0].mxu0
        %v1274 = vadd.f32 0.0, %v1273
        %v1275 = vpop.f32.mrb[0].mxu0
        %1276 = vdwg.mxu0
        %1277 = vmatprep.subr.mxu0 0.0
        %1278 = vmatpush1.msra.mxu0 %v1096
        %1279 = vmatprep.subr.mxu0 0.0
        %1280 = vmatpush1.msra.mxu0 %v1097
        %1281 = vmatprep.subr.mxu0 0.0
        %1282 = vmatpush1.msra.mxu0 %v1098
        %1283 = vmatprep.subr.mxu0 0.0
        %1284 = vmatpush1.msra.mxu0 %v1099
        %1285 = vmatprep.subr.mxu0 0.0
        %1286 = vmatpush1.msra.mxu0 0.0
        %1287 = vmatprep.subr.mxu0 0.0
        %1288 = vmatpush1.msra.mxu0 0.0
        %1289 = vmatprep.subr.mxu0 0.0
        %1290 = vmatpush1.msra.mxu0 0.0
        %1291 = vmatprep.subr.mxu0 0.0
        %1292 = vmatpush1.msra.mxu0 0.0
        %1293 = vmatprep.subr.mxu0 0.0
        %1294 = vmatpush1.msra.mxu0 0.0
        %1295 = vmatprep.subr.mxu0 0.0
        %1296 = vmatpush1.msra.mxu0 0.0
        %1297 = vmatprep.subr.mxu0 0.0
        %1298 = vmatpush1.msra.mxu0 0.0
        %1299 = vmatprep.subr.mxu0 0.0
        %1300 = vmatpush1.msra.mxu0 0.0
        %1301 = vmatprep.subr.mxu0 0.0
        %1302 = vmatpush1.msra.mxu0 0.0
        %1303 = vmatprep.subr.mxu0 0.0
        %1304 = vmatpush1.msra.mxu0 0.0
        %1305 = vmatprep.subr.mxu0 0.0
        %1306 = vmatpush1.msra.mxu0 0.0
        %1307 = vmatprep.subr.mxu0 0.0
        %1308 = vmatpush1.msra.mxu0 0.0
        %1309 = vmatprep.subr.mxu0 0.0
        %1310 = vmatpush1.msra.mxu0 0.0
        %1311 = vmatprep.subr.mxu0 0.0
        %1312 = vmatpush1.msra.mxu0 0.0
        %1313 = vmatprep.subr.mxu0 0.0
        %1314 = vmatpush1.msra.mxu0 0.0
        %1315 = vmatprep.subr.mxu0 0.0
        %1316 = vmatpush1.msra.mxu0 0.0
        %1317 = vmatprep.subr.mxu0 0.0
        %1318 = vmatpush1.msra.mxu0 0.0
        %1319 = vmatprep.subr.mxu0 0.0
        %1320 = vmatpush1.msra.mxu0 0.0
        %1321 = vmatprep.subr.mxu0 0.0
        %1322 = vmatpush1.msra.mxu0 0.0
        %1323 = vmatprep.subr.mxu0 0.0
        %1324 = vmatpush1.msra.mxu0 0.0
        %1325 = vmatprep.subr.mxu0 0.0
        %1326 = vmatpush1.msra.mxu0 0.0
        %1327 = vmatprep.subr.mxu0 0.0
        %1328 = vmatpush1.msra.mxu0 0.0
        %1329 = vmatprep.subr.mxu0 0.0
        %1330 = vmatpush1.msra.mxu0 0.0
        %1331 = vmatprep.subr.mxu0 0.0
        %1332 = vmatpush1.msra.mxu0 0.0
        %1333 = vmatprep.subr.mxu0 0.0
        %1334 = vmatpush1.msra.mxu0 0.0
        %1335 = vmatprep.subr.mxu0 0.0
        %1336 = vmatpush1.msra.mxu0 0.0
        %1337 = vmatprep.subr.mxu0 0.0
        %1338 = vmatpush1.msra.mxu0 0.0
        %1339 = vmatprep.subr.mxu0 0.0
        %1340 = vmatpush1.msra.mxu0 0.0
        %1341 = vmatprep.mubr.f32.mxu0 0.0
        %1342 = vmatmul.mubr.f32.gmra.mrb[0].mxu0 %v1100
        %v1343 = vpop.f32.mrb[0].mxu0
        %v1344 = vadd.f32 %v1199, %v1343
        %v1345 = vpop.f32.mrb[0].mxu0
        %1346 = vmatprep.mubr.f32.mxu0 0.0
        %1347 = vmatmul.mubr.f32.gmra.mrb[0].mxu0 %v1102
        %v1348 = vpop.f32.mrb[0].mxu0
        %v1349 = vadd.f32 %v1204, %v1348
        %v1350 = vpop.f32.mrb[0].mxu0
        %1351 = vmatprep.mubr.f32.mxu0 0.0
        %1352 = vmatmul.mubr.f32.gmra.mrb[0].mxu0 %v1104
        %v1353 = vpop.f32.mrb[0].mxu0
        %v1354 = vadd.f32 %v1209, %v1353
        %v1355 = vpop.f32.mrb[0].mxu0
        %1356 = vmatprep.mubr.f32.mxu0 0.0
        %1357 = vmatmul.mubr.f32.gmra.mrb[0].mxu0 %v1106
        %v1358 = vpop.f32.mrb[0].mxu0
        %v1359 = vadd.f32 %v1214, %v1358
        %v1360 = vpop.f32.mrb[0].mxu0
        %1361 = vmatprep.mubr.f32.mxu0 0.0
        %1362 = vmatmul.mubr.f32.gmra.mrb[0].mxu0 %v1108
        %v1363 = vpop.f32.mrb[0].mxu0
        %v1364 = vadd.f32 %v1219, %v1363
        %v1365 = vpop.f32.mrb[0].mxu0
        %1366 = vmatprep.mubr.f32.mxu0 0.0
        %1367 = vmatmul.mubr.f32.gmra.mrb[0].mxu0 %v1110
        %v1368 = vpop.f32.mrb[0].mxu0
        %v1369 = vadd.f32 %v1224, %v1368
        %v1370 = vpop.f32.mrb[0].mxu0
        %1371 = vmatprep.mubr.f32.mxu0 0.0
        %1372 = vmatmul.mubr.f32.gmra.mrb[0].mxu0 %v1112
        %v1373 = vpop.f32.mrb[0].mxu0
        %v1374 = vadd.f32 %v1229, %v1373
        %v1375 = vpop.f32.mrb[0].mxu0
        %1376 = vmatprep.mubr.f32.mxu0 0.0
        %1377 = vmatmul.mubr.f32.gmra.mrb[0].mxu0 %v1114
        %v1378 = vpop.f32.mrb[0].mxu0
        %v1379 = vadd.f32 %v1234, %v1378
        %v1380 = vpop.f32.mrb[0].mxu0
        %1381 = vmatprep.mubr.f32.mxu0 0.0
        %1382 = vmatmul.mubr.f32.gmra.mrb[0].mxu0 %v1116
        %v1383 = vpop.f32.mrb[0].mxu0
        %v1384 = vadd.f32 %v1239, %v1383
        %v1385 = vpop.f32.mrb[0].mxu0
        %1386 = vmatprep.mubr.f32.mxu0 0.0
        %1387 = vmatmul.mubr.f32.gmra.mrb[0].mxu0 %v1118
        %v1388 = vpop.f32.mrb[0].mxu0
        %v1389 = vadd.f32 %v1244, %v1388
        %v1390 = vpop.f32.mrb[0].mxu0
        %1391 = vmatprep.mubr.f32.mxu0 0.0
        %1392 = vmatmul.mubr.f32.gmra.mrb[0].mxu0 %v1120
        %v1393 = vpop.f32.mrb[0].mxu0
        %v1394 = vadd.f32 %v1249, %v1393
        %v1395 = vpop.f32.mrb[0].mxu0
        %1396 = vmatprep.mubr.f32.mxu0 0.0
        %1397 = vmatmul.mubr.f32.gmra.mrb[0].mxu0 %v1122
        %v1398 = vpop.f32.mrb[0].mxu0
        %v1399 = vadd.f32 %v1254, %v1398
        %v1400 = vpop.f32.mrb[0].mxu0
        %1401 = vmatprep.mubr.f32.mxu0 0.0
        %1402 = vmatmul.mubr.f32.gmra.mrb[0].mxu0 %v1124
        %v1403 = vpop.f32.mrb[0].mxu0
        %v1404 = vadd.f32 %v1259, %v1403
        %v1405 = vpop.f32.mrb[0].mxu0
        %1406 = vmatprep.mubr.f32.mxu0 0.0
        %1407 = vmatmul.mubr.f32.gmra.mrb[0].mxu0 %v1126
        %v1408 = vpop.f32.mrb[0].mxu0
        %v1409 = vadd.f32 %v1264, %v1408
        %v1410 = vpop.f32.mrb[0].mxu0
        %1411 = vmatprep.mubr.f32.mxu0 0.0
        %1412 = vmatmul.mubr.f32.gmra.mrb[0].mxu0 %v1128
        %v1413 = vpop.f32.mrb[0].mxu0
        %v1414 = vadd.f32 %v1269, %v1413
        %v1415 = vpop.f32.mrb[0].mxu0
        %1416 = vmatprep.mubr.f32.mxu0 0.0
        %1417 = vmatmul.mubr.f32.gmra.mrb[0].mxu0 %v1130
        %v1418 = vpop.f32.mrb[0].mxu0
        %v1419 = vadd.f32 %v1274, %v1418
        %v1420 = vpop.f32.mrb[0].mxu0
        %1421 = vdwg.mxu0
        %1422 = vst.msk [vmem:[%s250] sm:$0xff] %vm982, %v1344
        %1423 = vst.msk [vmem:[%s250 + $0x8] sm:$0xff] %vm982, %v1349
        %1424 = vst.msk [vmem:[%s250 + $0x10] sm:$0xff] %vm982, %v1354
        %1425 = vst.msk [vmem:[%s250 + $0x18] sm:$0xff] %vm982, %v1359
        %1426 = vst.msk [vmem:[%s250 + $0x20] sm:$0xff] %vm982, %v1364
        %1427 = vst.msk [vmem:[%s250 + $0x28] sm:$0xff] %vm982, %v1369
        %1428 = vst.msk [vmem:[%s250 + $0x30] sm:$0xff] %vm982, %v1374
        %1429 = vst.msk [vmem:[%s250 + $0x38] sm:$0xff] %vm982, %v1379
        %1430 = vst.msk [vmem:[%s250 + $0x40] sm:$0xff] %vm982, %v1384
        %1431 = vst.msk [vmem:[%s250 + $0x48] sm:$0xff] %vm982, %v1389
        %1432 = vst.msk [vmem:[%s250 + $0x50] sm:$0xff] %vm982, %v1394
        %1433 = vst.msk [vmem:[%s250 + $0x58] sm:$0xff] %vm982, %v1399
        %1434 = vst.msk [vmem:[%s250 + $0x60] sm:$0xff] %vm982, %v1404
        %1435 = vst.msk [vmem:[%s250 + $0x68] sm:$0xff] %vm982, %v1409
        %1436 = vst.msk [vmem:[%s250 + $0x70] sm:$0xff] %vm982, %v1414
        %1437 = vst.msk [vmem:[%s250 + $0x78] sm:$0xff] %vm982, %v1419
        %p1438 = scmp.eq.s32.totalorder %s31, 0
        // Predicated region
        $region37: #{bottleneck_forward.4} parent=27 // pred_check
          %p1439 = pneg %p1438
        $region38: #{bottleneck_forward.4} parent=27 // pred_check_branch
          %1441 = sbr.rel (%p1439) target = $region40
        $region39: #{bottleneck_forward.4} parent=27 // pred_region
          %vm1442 = vcmask 516096
          %1443 = vst.msk [vmem:[%s256] sm:$0x1] %vm1442, 0.0
          %1444 = vst.msk [vmem:[%s262] sm:$0x1] %vm1442, 0.0
        $region40: #{bottleneck_forward.4} parent=27 // pred_fallthru
          _
        %v1445 = vld [vmem:[%s256] sm:$0x1]
        %v1446 = vsel %vm982, %v1344, 0.0
        %v1447 = vsel %vm982, %v1349, 0.0
        %v1448 = vadd.f32 %v1446, %v1447
        %v1449 = vsel %vm982, %v1354, 0.0
        %v1450 = vadd.f32 %v1448, %v1449
        %v1451 = vsel %vm982, %v1359, 0.0
        %v1452 = vadd.f32 %v1450, %v1451
        %v1453 = vsel %vm982, %v1364, 0.0
        %v1454 = vadd.f32 %v1452, %v1453
        %v1455 = vsel %vm982, %v1369, 0.0
        %v1456 = vadd.f32 %v1454, %v1455
        %v1457 = vsel %vm982, %v1374, 0.0
        %v1458 = vadd.f32 %v1456, %v1457
        %v1459 = vsel %vm982, %v1379, 0.0
        %v1460 = vadd.f32 %v1458, %v1459
        %v1461 = vsel %vm982, %v1384, 0.0
        %v1462 = vadd.f32 %v1460, %v1461
        %v1463 = vsel %vm982, %v1389, 0.0
        %v1464 = vadd.f32 %v1462, %v1463
        %v1465 = vsel %vm982, %v1394, 0.0
        %v1466 = vadd.f32 %v1464, %v1465
        %v1467 = vsel %vm982, %v1399, 0.0
        %v1468 = vadd.f32 %v1466, %v1467
        %v1469 = vsel %vm982, %v1404, 0.0
        %v1470 = vadd.f32 %v1468, %v1469
        %v1471 = vsel %vm982, %v1409, 0.0
        %v1472 = vadd.f32 %v1470, %v1471
        %v1473 = vsel %vm982, %v1414, 0.0
        %v1474 = vadd.f32 %v1472, %v1473
        %v1475 = vsel %vm982, %v1419, 0.0
        %v1476 = vadd.f32 %v1474, %v1475
        %v1477 = vrot.slane %v1476, 4
        %v1478 = vadd.f32 %v1476, %v1477
        %v1479 = vrot.slane %v1478, 2
        %v1480 = vadd.f32 %v1478, %v1479
        %v1481 = vrot.slane %v1480, 1
        %v1482 = vadd.f32 %v1480, %v1481
        %v1483 = vadd.f32 %v1445, %v1482
        %vm1484 = vcmask 516096
        %1485 = vst.msk [vmem:[%s256] sm:$0x1] %vm1484, %v1483
        %v1486 = vld [vmem:[%s262] sm:$0x1]
        %v1487 = vmul.f32 %v1344, %v1344
        %v1488 = vmul.f32 %v1349, %v1349
        %v1489 = vmul.f32 %v1354, %v1354
        %v1490 = vmul.f32 %v1359, %v1359
        %v1491 = vmul.f32 %v1364, %v1364
        %v1492 = vmul.f32 %v1369, %v1369
        %v1493 = vmul.f32 %v1374, %v1374
        %v1494 = vmul.f32 %v1379, %v1379
        %v1495 = vmul.f32 %v1384, %v1384
        %v1496 = vmul.f32 %v1389, %v1389
        %v1497 = vmul.f32 %v1394, %v1394
        %v1498 = vmul.f32 %v1399, %v1399
        %v1499 = vmul.f32 %v1404, %v1404
        %v1500 = vmul.f32 %v1409, %v1409
        %v1501 = vmul.f32 %v1414, %v1414
        %v1502 = vmul.f32 %v1419, %v1419
        %v1503 = vsel %vm982, %v1487, 0.0
        %v1504 = vsel %vm982, %v1488, 0.0
        %v1505 = vadd.f32 %v1503, %v1504
        %v1506 = vsel %vm982, %v1489, 0.0
        %v1507 = vadd.f32 %v1505, %v1506
        %v1508 = vsel %vm982, %v1490, 0.0
        %v1509 = vadd.f32 %v1507, %v1508
        %v1510 = vsel %vm982, %v1491, 0.0
        %v1511 = vadd.f32 %v1509, %v1510
        %v1512 = vsel %vm982, %v1492, 0.0
        %v1513 = vadd.f32 %v1511, %v1512
        %v1514 = vsel %vm982, %v1493, 0.0
        %v1515 = vadd.f32 %v1513, %v1514
        %v1516 = vsel %vm982, %v1494, 0.0
        %v1517 = vadd.f32 %v1515, %v1516
        %v1518 = vsel %vm982, %v1495, 0.0
        %v1519 = vadd.f32 %v1517, %v1518
        %v1520 = vsel %vm982, %v1496, 0.0
        %v1521 = vadd.f32 %v1519, %v1520
        %v1522 = vsel %vm982, %v1497, 0.0
        %v1523 = vadd.f32 %v1521, %v1522
        %v1524 = vsel %vm982, %v1498, 0.0
        %v1525 = vadd.f32 %v1523, %v1524
        %v1526 = vsel %vm982, %v1499, 0.0
        %v1527 = vadd.f32 %v1525, %v1526
        %v1528 = vsel %vm982, %v1500, 0.0
        %v1529 = vadd.f32 %v1527, %v1528
        %v1530 = vsel %vm982, %v1501, 0.0
        %v1531 = vadd.f32 %v1529, %v1530
        %v1532 = vsel %vm982, %v1502, 0.0
        %v1533 = vadd.f32 %v1531, %v1532
        %v1534 = vrot.slane %v1533, 4
        %v1535 = vadd.f32 %v1533, %v1534
        %v1536 = vrot.slane %v1535, 2
        %v1537 = vadd.f32 %v1535, %v1536
        %v1538 = vrot.slane %v1537, 1
        %v1539 = vadd.f32 %v1537, %v1538
        %v1540 = vadd.f32 %v1486, %v1539
        %1541 = vst.msk [vmem:[%s262] sm:$0x1] %vm1484, %v1540
        %s1542 = sand.u32 %s97, 1
        %s1543 = scalar_lea.sflag [#allocation4], %s1542
        %s1544 = sand.u32 %s97, 1
        %s1545 = smul.addr %s1544, 128
        %s1546 = scalar_lea.vmem [#allocation7], %s1545
        %s1547 = sand.u32 %s26, 1
        %s1548 = scalar_lea.sflag [#allocation9], %s1547
        %s1549 = sand.u32 %s123, 1
        %s1550 = scalar_lea.vmem [#allocation8], %s1549
        %s1551 = sand.u32 %s26, 1
        %s1552 = scalar_lea.sflag [#allocation9], %s1551
        %s1553 = sand.u32 %s149, 1
        %s1554 = scalar_lea.vmem [#allocation10], %s1553
        // Predicated region
        $region41: #{bottleneck_forward.4} parent=27 // pred_check
          %p1555 = pneg %p107
        $region42: #{bottleneck_forward.4} parent=27 // pred_check_branch
          %1557 = sbr.rel (%p1555) target = $region44
        $region43: #{bottleneck_forward.4} parent=27 // pred_region
          %s1558 = smul.u32 %s30, 2
          %s1559 = sadd.s32 %s1558, %s31
          %s1560 = smul.u32 16, %s1559
          %s1562 = ssub.s32 2048, 2048
          %1563 = vsyncadd %s1543, %s1562
          %s1564 = smul.addr %s1560, 128
          %s1565 = scalar_lea.hbm %s2, %s1564
          %s1566 = sshll.u32 %s1546, 4
          %s1567 = int_to_ptr.vmem [resolvable:$true] %s1566
          %1572 = dma.vmem_to_hbm [thread:$0]  %s1567, 2048, %s1565, %s1543, 128, 128, 8
        $region44: #{bottleneck_forward.4} parent=27 // pred_fallthru
          _
        // Predicated region
        $region45: #{bottleneck_forward.4} parent=27 // pred_check
          %p1573 = pneg %p133
        $region46: #{bottleneck_forward.4} parent=27 // pred_check_branch
          %1575 = sbr.rel (%p1573) target = $region48
        $region47: #{bottleneck_forward.4} parent=27 // pred_region
          %s1577 = ssub.s32 16, 16
          %1578 = vsyncadd %s1548, %s1577
          %s1579 = smul.addr %s30, 16
          %s1580 = scalar_lea.hbm %s3, %s1579
          %s1582 = sshll.u32 %s1550, 4
          %s1583 = int_to_ptr.vmem [resolvable:$true] %s1582
          %1585 = dma.vmem_to_hbm [thread:$0]  %s1583, 16, %s1580, %s1548
        $region48: #{bottleneck_forward.4} parent=27 // pred_fallthru
          _
        // Predicated region
        $region49: #{bottleneck_forward.4} parent=27 // pred_check
          %p1586 = pneg %p159
        $region50: #{bottleneck_forward.4} parent=27 // pred_check_branch
          %1588 = sbr.rel (%p1586) target = $region52
        $region51: #{bottleneck_forward.4} parent=27 // pred_region
          %s1590 = ssub.s32 16, 16
          %1591 = vsyncadd %s1552, %s1590
          %s1592 = smul.addr %s30, 16
          %s1593 = scalar_lea.hbm %s4, %s1592
          %s1595 = sshll.u32 %s1554, 4
          %s1596 = int_to_ptr.vmem [resolvable:$true] %s1595
          %1598 = dma.vmem_to_hbm [thread:$0]  %s1596, 16, %s1593, %s1552
        $region52: #{bottleneck_forward.4} parent=27 // pred_fallthru
          _
      $region28: #{bottleneck_forward.4} parent=5 // pred_fallthru
        _
      %p1599 = scmp.le.s32.totalorder 2, %s21
      // Predicated region
      $region53: #{bottleneck_forward.4} parent=5 // pred_check
        %p1600 = pneg %p1599
      $region54: #{bottleneck_forward.4} parent=5 // pred_check_branch
        %1602 = sbr.rel (%p1600) target = $region56
      $region55: #{bottleneck_forward.4} parent=5 // pred_region
        %s1603 = ssub.s32 %s21, 2
        // Predicated region
        $region57: #{bottleneck_forward.4} parent=55 // pred_check
          %p1604 = pneg %p113
        $region58: #{bottleneck_forward.4} parent=55 // pred_check_branch
          %1606 = sbr.rel (%p1604) target = $region60
        $region59: #{bottleneck_forward.4} parent=55 // pred_region
          %s1607 = sand.u32 %s98, 1
          %s1608 = scalar_lea.sflag [#allocation4], %s1607
          %s1609 = sand.u32 %s98, 1
          %s1610 = smul.addr %s1609, 128
          %s1611 = scalar_lea.vmem [#allocation7], %s1610
          %1612 = dma.done %s1608, 2048
        $region60: #{bottleneck_forward.4} parent=55 // pred_fallthru
          _
        // Predicated region
        $region61: #{bottleneck_forward.4} parent=55 // pred_check
          %p1613 = pneg %p139
        $region62: #{bottleneck_forward.4} parent=55 // pred_check_branch
          %1615 = sbr.rel (%p1613) target = $region64
        $region63: #{bottleneck_forward.4} parent=55 // pred_region
          %s1616 = sand.u32 %s27, 1
          %s1617 = scalar_lea.sflag [#allocation9], %s1616
          %s1618 = sand.u32 %s124, 1
          %s1619 = scalar_lea.vmem [#allocation8], %s1618
          %1620 = dma.done %s1617, 16
        $region64: #{bottleneck_forward.4} parent=55 // pred_fallthru
          _
        // Predicated region
        $region65: #{bottleneck_forward.4} parent=55 // pred_check
          %p1621 = pneg %p165
        $region66: #{bottleneck_forward.4} parent=55 // pred_check_branch
          %1623 = sbr.rel (%p1621) target = $region68
        $region67: #{bottleneck_forward.4} parent=55 // pred_region
          %s1624 = sand.u32 %s27, 1
          %s1625 = scalar_lea.sflag [#allocation9], %s1624
          %s1626 = sand.u32 %s150, 1
          %s1627 = scalar_lea.vmem [#allocation10], %s1626
          %1628 = dma.done %s1625, 16
        $region68: #{bottleneck_forward.4} parent=55 // pred_fallthru
          _
      $region56: #{bottleneck_forward.4} parent=5 // pred_fallthru
        _
    $region6: #{bottleneck_forward.4} parent=1 // loop_footer
      %s25 = sadd.s32 1, %s21
    $region7: #{bottleneck_forward.4} parent=1 // loop_footer_branch
      %20 = sbr.rel target = $region3
    $region8: #{bottleneck_forward.4} parent=1 // loop_exit
      _
    %1629 = vsyncpa [#allocation3], 1
    %s1630 = scalar_lea.sflag [#allocation3], 1
    %1631 = vsyncpa %s1630, 1
    %1632 = vsyncpa [#allocation6], 1
    %1633 = vsyncpa [#allocation4], 1
    %s1634 = scalar_lea.sflag [#allocation4], 1
    %1635 = vsyncpa %s1634, 1
    %1636 = vsyncpa [#allocation9], 1
    %s1637 = scalar_lea.sflag [#allocation9], 1
    %1638 = vsyncpa %s1637, 1

// kernel: bottleneck_forward.6
$region0: #{bottleneck_forward.6}
  #allocation0 [shape = 'u32[]', space=smem, size = 0x4, offset = 0x4, fixed_abs, tag = 'smem constant byte address 0x4 - core index']
  #allocation1 [shape = 'u32[144,128]{1,0:T(1,128)}', space=vmem, size = 0x12000, scoped, tag = 'internal scratch']
  %s0 = inlined_call_operand.hbm [shape: f32[2,18,18,64], index: 0, kind: input, shape index: {}]
  %s1 = inlined_call_operand.hbm [shape: f32[576,64], index: 1, kind: input, shape index: {}]
  %s2 = inlined_call_operand.hbm [shape: f32[512,64], index: 2, kind: output, shape index: {0}]
  %s3 = inlined_call_operand.hbm [shape: f32[2,1,64], index: 3, kind: output, shape index: {1}]
  %s4 = inlined_call_operand.hbm [shape: f32[2,1,64], index: 4, kind: output, shape index: {2}]
  %5 = xla_tuple %s2, %s3, %s4
  %s6 = sld [smem:[#allocation0]]
  $region69: #{bottleneck_forward.6} parent=0
    _
  %s8 = ssub.s32 1, %s6
  %s9 = scalar_select 0, %s8, %s6
  $region1: #{bottleneck_forward.6} parent=0
    #allocation2 [shape = 'u8[442368]{0}', space=vmem, size = 0x6c000, scoped, tag = 'input window, operand 0']
    #allocation3 [shape = 's32[2]{0}', space=sflag, size = 0x8, scoped, tag = 'scoped memory for bottleneck_forward.6']
    #allocation4 [shape = 's32[2]{0}', space=sflag, size = 0x8, scoped, tag = 'scoped memory for bottleneck_forward.6']
    #allocation5 [shape = 'u8[294912]{0}', space=vmem, size = 0x48000, scoped, tag = 'input window, operand 1, single buffered']
    #allocation6 [shape = 's32[1]{0}', space=sflag, size = 0x4, scoped, tag = 'scoped memory for bottleneck_forward.6']
    #allocation7 [shape = 'u8[131072]{0}', space=vmem, size = 0x20000, scoped, tag = 'output window, operand 0']
    #allocation8 [shape = 'u8[1024]{0}', space=vmem, size = 0x400, scoped, tag = 'output window, operand 1']
    #allocation9 [shape = 's32[2]{0}', space=sflag, size = 0x8, scoped, tag = 'scoped memory for bottleneck_forward.6']
    #allocation10 [shape = 'u8[1024]{0}', space=vmem, size = 0x400, scoped, tag = 'output window, operand 2']
    %10 = vsyncpa [#allocation3], 0
    %s11 = scalar_lea.sflag [#allocation3], 1
    %12 = vsyncpa %s11, 0
    %13 = vsyncpa [#allocation6], 0
    %14 = vsyncpa [#allocation4], 0
    %s15 = scalar_lea.sflag [#allocation4], 1
    %16 = vsyncpa %s15, 0
    %17 = vsyncpa [#allocation9], 0
    %s18 = scalar_lea.sflag [#allocation9], 1
    %19 = vsyncpa %s18, 0
    loop: start=0, step=1, limit=6
    $region2: #{bottleneck_forward.6} parent=1 // loop_pre_header
      _
    $region3: #{bottleneck_forward.6} parent=1 // loop_header
      %s21 = sphi 0, %s25
      %p22 = scmp.ge.s32.totalorder %s21, 6
      %s28 = sphi 0, %s40
      %s29 = sphi 0, %s36
      %s30 = sphi 0, %s28
      %s31 = sphi 0, %s29
      %s32 = sphi 0, %s30
      %s33 = sphi 0, %s31
      %s43 = sphi 0, %s45
      %s46 = sphi 0, %s43
      %s47 = sphi 0, %s46
      %s63 = sphi 0, %s47
      %s67 = sphi 0, %s67
      %s69 = sphi 0, %s67
      %s70 = sphi 0, %s69
      %s84 = sphi 0, %s70
      %s94 = sphi 0, %s96
      %s97 = sphi 0, %s94
      %s98 = sphi 0, %s97
      %s114 = sphi 0, %s98
      %s120 = sphi 0, %s122
      %s123 = sphi 0, %s120
      %s124 = sphi 0, %s123
      %s140 = sphi 0, %s124
      %s146 = sphi 0, %s148
      %s149 = sphi 0, %s146
      %s150 = sphi 0, %s149
      %s166 = sphi 0, %s150
    $region4: #{bottleneck_forward.6} parent=1 // loop_header_branch
      %24 = sbr.rel (%p22) target = $region8
    $region5: #{bottleneck_forward.6} parent=1 // loop_body
      %s26 = ssub.s32 %s21, 1
      %s27 = ssub.s32 %s21, 2
      %s34 = sadd.s32 1, %s29
      %p35 = scmp.ge.s32.totalorder %s34, 2
      %s36 = scalar_select %p35, 0, %s34
      %s37 = sadd.s32 1, %s28
      %s38 = scalar_select %p35, %s37, %s28
      %p39 = scmp.ge.s32.totalorder %s38, 2
      %s40 = scalar_select %p39, 0, %s38
      %s41 = ssub.s32 %s28, %s40
      %p42 = scmp.eq.s32.totalorder %s41, 0
      %s44 = sadd.s32 %s43, 1
      %s45 = scalar_select %p42, %s43, %s44
      %p48 = pneg %p42
      %p49 = scmp.eq.s32.totalorder %s21, 3
      %p50 = por %p48, %p49
      %p51 = scmp.ne.s32.totalorder %s43, %s46
      %p52 = scmp.eq.s32.totalorder %s21, 0
      %p53 = por %p51, %p52
      %p54 = scmp.ne.s32.totalorder %s43, %s46
      %p55 = scmp.eq.s32.totalorder %s26, 3
      %p56 = por %p54, %p55
      %p57 = scmp.ne.s32.totalorder %s46, %s47
      %p58 = scmp.eq.s32.totalorder %s26, 0
      %p59 = por %p57, %p58
      %p60 = scmp.ne.s32.totalorder %s46, %s47
      %p61 = scmp.eq.s32.totalorder %s27, 3
      %p62 = por %p60, %p61
      %p64 = scmp.ne.s32.totalorder %s47, %s63
      %p65 = scmp.eq.s32.totalorder %s27, 0
      %p66 = por %p64, %p65
      %s68 = sadd.s32 %s67, 1
      %p71 = scmp.eq.s32.totalorder %s21, 3
      %p72 = scmp.ne.s32.totalorder %s67, %s69
      %p73 = scmp.eq.s32.totalorder %s21, 0
      %p74 = por %p72, %p73
      %p75 = scmp.ne.s32.totalorder %s67, %s69
      %p76 = scmp.eq.s32.totalorder %s26, 3
      %p77 = por %p75, %p76
      %p78 = scmp.ne.s32.totalorder %s69, %s70
      %p79 = scmp.eq.s32.totalorder %s26, 0
      %p80 = por %p78, %p79
      %p81 = scmp.ne.s32.totalorder %s69, %s70
      %p82 = scmp.eq.s32.totalorder %s27, 3
      %p83 = por %p81, %p82
      %p85 = scmp.ne.s32.totalorder %s70, %s84
      %p86 = scmp.eq.s32.totalorder %s27, 0
      %p87 = por %p85, %p86
      %s88 = smul.u32 %s28, 2
      %s89 = sadd.s32 %s88, %s29
      %s90 = smul.u32 %s40, 2
      %s91 = sadd.s32 %s90, %s36
      %s92 = ssub.s32 %s89, %s91
      %p93 = scmp.eq.s32.totalorder %s92, 0
      %s95 = sadd.s32 %s94, 1
      %s96 = scalar_select %p93, %s94, %s95
      %p99 = pneg %p93
      %p100 = scmp.eq.s32.totalorder %s21, 3
      %p101 = por %p99, %p100
      %p102 = scmp.ne.s32.totalorder %s94, %s97
      %p103 = scmp.eq.s32.totalorder %s21, 0
      %p104 = por %p102, %p103
      %p105 = scmp.ne.s32.totalorder %s94, %s97
      %p106 = scmp.eq.s32.totalorder %s26, 3
      %p107 = por %p105, %p106
      %p108 = scmp.ne.s32.totalorder %s97, %s98
      %p109 = scmp.eq.s32.totalorder %s26, 0
      %p110 = por %p108, %p109
      %p111 = scmp.ne.s32.totalorder %s97, %s98
      %p112 = scmp.eq.s32.totalorder %s27, 3
      %p113 = por %p111, %p112
      %p115 = scmp.ne.s32.totalorder %s98, %s114
      %p116 = scmp.eq.s32.totalorder %s27, 0
      %p117 = por %p115, %p116
      %s118 = ssub.s32 %s28, %s40
      %p119 = scmp.eq.s32.totalorder %s118, 0
      %s121 = sadd.s32 %s120, 1
      %s122 = scalar_select %p119, %s120, %s121
      %p125 = pneg %p119
      %p126 = scmp.eq.s32.totalorder %s21, 3
      %p127 = por %p125, %p126
      %p128 = scmp.ne.s32.totalorder %s120, %s123
      %p129 = scmp.eq.s32.totalorder %s21, 0
      %p130 = por %p128, %p129
      %p131 = scmp.ne.s32.totalorder %s120, %s123
      %p132 = scmp.eq.s32.totalorder %s26, 3
      %p133 = por %p131, %p132
      %p134 = scmp.ne.s32.totalorder %s123, %s124
      %p135 = scmp.eq.s32.totalorder %s26, 0
      %p136 = por %p134, %p135
      %p137 = scmp.ne.s32.totalorder %s123, %s124
      %p138 = scmp.eq.s32.totalorder %s27, 3
      %p139 = por %p137, %p138
      %p141 = scmp.ne.s32.totalorder %s124, %s140
      %p142 = scmp.eq.s32.totalorder %s27, 0
      %p143 = por %p141, %p142
      %s144 = ssub.s32 %s28, %s40
      %p145 = scmp.eq.s32.totalorder %s144, 0
      %s147 = sadd.s32 %s146, 1
      %s148 = scalar_select %p145, %s146, %s147
      %p151 = pneg %p145
      %p152 = scmp.eq.s32.totalorder %s21, 3
      %p153 = por %p151, %p152
      %p154 = scmp.ne.s32.totalorder %s146, %s149
      %p155 = scmp.eq.s32.totalorder %s21, 0
      %p156 = por %p154, %p155
      %p157 = scmp.ne.s32.totalorder %s146, %s149
      %p158 = scmp.eq.s32.totalorder %s26, 3
      %p159 = por %p157, %p158
      %p160 = scmp.ne.s32.totalorder %s149, %s150
      %p161 = scmp.eq.s32.totalorder %s26, 0
      %p162 = por %p160, %p161
      %p163 = scmp.ne.s32.totalorder %s149, %s150
      %p164 = scmp.eq.s32.totalorder %s27, 3
      %p165 = por %p163, %p164
      %p167 = scmp.ne.s32.totalorder %s150, %s166
      %p168 = scmp.eq.s32.totalorder %s27, 0
      %p169 = por %p167, %p168
      %p170 = scmp.le.s32.totalorder 1, %s21
      %p171 = scmp.lt.s32.totalorder %s21, 5
      %p172 = pnand %p170, %p171
      %p173 = pneg %p172
      // Predicated region
      $region9: #{bottleneck_forward.6} parent=5 // pred_check
        _
      $region10: #{bottleneck_forward.6} parent=5 // pred_check_branch
        %175 = sbr.rel (%p172) target = $region12
      $region11: #{bottleneck_forward.6} parent=5 // pred_region
        %s176 = ssub.s32 %s21, 1
        // Predicated region
        $region13: #{bottleneck_forward.6} parent=11 // pred_check
          %p177 = pneg %p80
        $region14: #{bottleneck_forward.6} parent=11 // pred_check_branch
          %179 = sbr.rel (%p177) target = $region16
        $region15: #{bottleneck_forward.6} parent=11 // pred_region
          %s181 = ssub.s32 9216, 9216
          %182 = vsyncadd [#allocation6], %s181
          %s183 = sshll.u32 [#allocation5], 4
          %s184 = int_to_ptr.vmem [resolvable:$true] %s183
          %189 = dma.hbm_to_vmem [thread:$0]  %s1, 9216, %s184, [#allocation6], 128, 128, 8
        $region16: #{bottleneck_forward.6} parent=11 // pred_fallthru
          _
      $region12: #{bottleneck_forward.6} parent=5 // pred_fallthru
        _
      %p190 = scmp.lt.s32.totalorder %s21, 4
      // Predicated region
      $region17: #{bottleneck_forward.6} parent=5 // pred_check
        %p191 = pneg %p190
      $region18: #{bottleneck_forward.6} parent=5 // pred_check_branch
        %193 = sbr.rel (%p191) target = $region20
      $region19: #{bottleneck_forward.6} parent=5 // pred_region
        // Predicated region
        $region21: #{bottleneck_forward.6} parent=19 // pred_check
          %p194 = pneg %p53
        $region22: #{bottleneck_forward.6} parent=19 // pred_check_branch
          %196 = sbr.rel (%p194) target = $region24
        $region23: #{bottleneck_forward.6} parent=19 // pred_region
          %s197 = sand.u32 %s43, 1
          %s198 = scalar_lea.sflag [#allocation3], %s197
          %s199 = sand.u32 %s43, 1
          %s200 = smul.addr %s199, 432
          %s201 = scalar_lea.vmem [#allocation2], %s200
          %s203 = ssub.s32 6912, 6912
          %204 = vsyncadd %s198, %s203
          %s205 = smul.addr %s28, 54
          %s206 = smul.addr %s205, 128
          %s207 = scalar_lea.hbm %s0, %s206
          %s208 = sshll.u32 %s201, 4
          %s209 = int_to_ptr.vmem [resolvable:$true] %s208
          %214 = dma.hbm_to_vmem [thread:$0]  %s207, 6912, %s209, %s198, 128, 128, 8
        $region24: #{bottleneck_forward.6} parent=19 // pred_fallthru
          _
      $region20: #{bottleneck_forward.6} parent=5 // pred_fallthru
        _
      %p215 = scmp.le.s32.totalorder 1, %s21
      %p216 = scmp.lt.s32.totalorder %s21, 5
      %p217 = pnand %p215, %p216
      %p218 = pneg %p217
      // Predicated region
      $region25: #{bottleneck_forward.6} parent=5 // pred_check
        _
      $region26: #{bottleneck_forward.6} parent=5 // pred_check_branch
        %220 = sbr.rel (%p217) target = $region28
      $region27: #{bottleneck_forward.6} parent=5 // pred_region
        %s221 = ssub.s32 %s21, 1
        %s222 = sand.u32 %s46, 1
        %s223 = scalar_lea.sflag [#allocation3], %s222
        %s224 = sand.u32 %s46, 1
        %s225 = smul.addr %s224, 432
        %s226 = scalar_lea.vmem [#allocation2], %s225
        // Predicated region
        $region29: #{bottleneck_forward.6} parent=27 // pred_check
          %p227 = pneg %p59
        $region30: #{bottleneck_forward.6} parent=27 // pred_check_branch
          %229 = sbr.rel (%p227) target = $region32
        $region31: #{bottleneck_forward.6} parent=27 // pred_region
          %230 = dma.done %s223, 6912
        $region32: #{bottleneck_forward.6} parent=27 // pred_fallthru
          _
        // Predicated region
        $region33: #{bottleneck_forward.6} parent=27 // pred_check
          %p231 = pneg %p80
        $region34: #{bottleneck_forward.6} parent=27 // pred_check_branch
          %233 = sbr.rel (%p231) target = $region36
        $region35: #{bottleneck_forward.6} parent=27 // pred_region
          %234 = dma.done [#allocation6], 9216
        $region36: #{bottleneck_forward.6} parent=27 // pred_fallthru
          _
        %s235 = sand.u32 %s46, 1
        %s236 = scalar_lea.sflag [#allocation3], %s235
        %s237 = sand.u32 %s46, 1
        %s238 = smul.addr %s237, 432
        %s239 = scalar_lea.vmem [#allocation2], %s238
        %p240 = pneg %p59
        %p241 = pneg %p56
        %p242 = pneg %p80
        %p243 = pneg %p77
        %p244 = pneg %p110
        %p245 = pneg %p107
        %s246 = sand.u32 %s97, 1
        %s247 = scalar_lea.sflag [#allocation4], %s246
        %s248 = sand.u32 %s97, 1
        %s249 = smul.addr %s248, 128
        %s250 = scalar_lea.vmem [#allocation7], %s249
        %p251 = pneg %p136
        %p252 = pneg %p133
        %s253 = sand.u32 %s26, 1
        %s254 = scalar_lea.sflag [#allocation9], %s253
        %s255 = sand.u32 %s123, 1
        %s256 = scalar_lea.vmem [#allocation8], %s255
        %p257 = pneg %p162
        %p258 = pneg %p159
        %s259 = sand.u32 %s26, 1
        %s260 = scalar_lea.sflag [#allocation9], %s259
        %s261 = sand.u32 %s149, 1
        %s262 = scalar_lea.vmem [#allocation10], %s261
        %s263 = smul.u32 %s30, 2
        %s264 = sadd.s32 %s263, %s31
        %s265 = smul.u32 16, %s264
        %s266 = smul.u32 %s31, 8
        %s267 = smul.u32 %s266, 24
        %s268 = scalar_lea.vmem %s226, %s267 [#allocation2]
        %v269 = vld [vmem:[%s268] sm:$0xff]
        %v270 = vld [vmem:[%s268 + $0x8] sm:$0xff]
        %v271 = vld [vmem:[%s268 + $0x10] sm:$0x3]
        %v272 = vld [vmem:[%s268 + $0x18] sm:$0xff]
        %v273 = vld [vmem:[%s268 + $0x20] sm:$0xff]
        %v274 = vld [vmem:[%s268 + $0x28] sm:$0x3]
        %v275 = vld [vmem:[%s268 + $0x30] sm:$0xff]
        %v276 = vld [vmem:[%s268 + $0x38] sm:$0xff]
        %v277 = vld [vmem:[%s268 + $0x40] sm:$0x3]
        %v278 = vld [vmem:[%s268 + $0x48] sm:$0xff]
        %v279 = vld [vmem:[%s268 + $0x50] sm:$0xff]
        %v280 = vld [vmem:[%s268 + $0x58] sm:$0x3]
        %v281 = vld [vmem:[%s268 + $0x60] sm:$0xff]
        %v282 = vld [vmem:[%s268 + $0x68] sm:$0xff]
        %v283 = vld [vmem:[%s268 + $0x70] sm:$0x3]
        %v284 = vld [vmem:[%s268 + $0x78] sm:$0xff]
        %v285 = vld [vmem:[%s268 + $0x80] sm:$0xff]
        %v286 = vld [vmem:[%s268 + $0x88] sm:$0x3]
        %v287 = vld [vmem:[%s268 + $0x90] sm:$0xff]
        %v288 = vld [vmem:[%s268 + $0x98] sm:$0xff]
        %v289 = vld [vmem:[%s268 + $0xa0] sm:$0x3]
        %v290 = vld [vmem:[%s268 + $0xa8] sm:$0xff]
        %v291 = vld [vmem:[%s268 + $0xb0] sm:$0xff]
        %v292 = vld [vmem:[%s268 + $0xb8] sm:$0x3]
        %s293 = sadd.s32 %s266, 1
        %s294 = smul.u32 %s293, 24
        %s295 = scalar_lea.vmem %s226, %s294 [#allocation2]
        %v296 = vld [vmem:[%s295] sm:$0xff]
        %v297 = vld [vmem:[%s295 + $0x8] sm:$0xff]
        %v298 = vld [vmem:[%s295 + $0x10] sm:$0x3]
        %v299 = vld [vmem:[%s295 + $0x18] sm:$0xff]
        %v300 = vld [vmem:[%s295 + $0x20] sm:$0xff]
        %v301 = vld [vmem:[%s295 + $0x28] sm:$0x3]
        %v302 = vld [vmem:[%s295 + $0x30] sm:$0xff]
        %v303 = vld [vmem:[%s295 + $0x38] sm:$0xff]
        %v304 = vld [vmem:[%s295 + $0x40] sm:$0x3]
        %v305 = vld [vmem:[%s295 + $0x48] sm:$0xff]
        %v306 = vld [vmem:[%s295 + $0x50] sm:$0xff]
        %v307 = vld [vmem:[%s295 + $0x58] sm:$0x3]
        %v308 = vld [vmem:[%s295 + $0x60] sm:$0xff]
        %v309 = vld [vmem:[%s295 + $0x68] sm:$0xff]
        %v310 = vld [vmem:[%s295 + $0x70] sm:$0x3]
        %v311 = vld [vmem:[%s295 + $0x78] sm:$0xff]
        %v312 = vld [vmem:[%s295 + $0x80] sm:$0xff]
        %v313 = vld [vmem:[%s295 + $0x88] sm:$0x3]
        %v314 = vld [vmem:[%s295 + $0x90] sm:$0xff]
        %v315 = vld [vmem:[%s295 + $0x98] sm:$0xff]
        %v316 = vld [vmem:[%s295 + $0xa0] sm:$0x3]
        %v317 = vld [vmem:[%s295 + $0xa8] sm:$0xff]
        %v318 = vld [vmem:[%s295 + $0xb0] sm:$0xff]
        %v319 = vld [vmem:[%s295 + $0xb8] sm:$0x3]
        %s320 = sadd.s32 %s266, 2
        %s321 = smul.u32 %s320, 24
        %s322 = scalar_lea.vmem %s226, %s321 [#allocation2]
        %v323 = vld [vmem:[%s322] sm:$0xff]
        %v324 = vld [vmem:[%s322 + $0x8] sm:$0xff]
        %v325 = vld [vmem:[%s322 + $0x10] sm:$0x3]
        %v326 = vld [vmem:[%s322 + $0x18] sm:$0xff]
        %v327 = vld [vmem:[%s322 + $0x20] sm:$0xff]
        %v328 = vld [vmem:[%s322 + $0x28] sm:$0x3]
        %v329 = vld [vmem:[%s322 + $0x30] sm:$0xff]
        %v330 = vld [vmem:[%s322 + $0x38] sm:$0xff]
        %v331 = vld [vmem:[%s322 + $0x40] sm:$0x3]
        %v332 = vld [vmem:[%s322 + $0x48] sm:$0xff]
        %v333 = vld [vmem:[%s322 + $0x50] sm:$0xff]
        %v334 = vld [vmem:[%s322 + $0x58] sm:$0x3]
        %v335 = vld [vmem:[%s322 + $0x60] sm:$0xff]
        %v336 = vld [vmem:[%s322 + $0x68] sm:$0xff]
        %v337 = vld [vmem:[%s322 + $0x70] sm:$0x3]
        %v338 = vld [vmem:[%s322 + $0x78] sm:$0xff]
        %v339 = vld [vmem:[%s322 + $0x80] sm:$0xff]
        %v340 = vld [vmem:[%s322 + $0x88] sm:$0x3]
        %v341 = vld [vmem:[%s322 + $0x90] sm:$0xff]
        %v342 = vld [vmem:[%s322 + $0x98] sm:$0xff]
        %v343 = vld [vmem:[%s322 + $0xa0] sm:$0x3]
        %v344 = vld [vmem:[%s322 + $0xa8] sm:$0xff]
        %v345 = vld [vmem:[%s322 + $0xb0] sm:$0xff]
        %v346 = vld [vmem:[%s322 + $0xb8] sm:$0x3]
        %vm371 = vcmask 1046528
        %v372 = vrot.slane %v269, 1
        %v373 = vrot.slane %v270, 1
        %v374 = vsel %vm371, %v372, %v373
        %v375 = vrot.slane %v271, 1
        %v376 = vsel %vm371, %v373, %v375
        %v377 = vrot.slane %v272, 1
        %v378 = vrot.slane %v273, 1
        %v379 = vsel %vm371, %v377, %v378
        %v380 = vrot.slane %v274, 1
        %v381 = vsel %vm371, %v378, %v380
        %v382 = vrot.slane %v275, 1
        %v383 = vrot.slane %v276, 1
        %v384 = vsel %vm371, %v382, %v383
        %v385 = vrot.slane %v277, 1
        %v386 = vsel %vm371, %v383, %v385
        %v387 = vrot.slane %v278, 1
        %v388 = vrot.slane %v279, 1
        %v389 = vsel %vm371, %v387, %v388
        %v390 = vrot.slane %v280, 1
        %v391 = vsel %vm371, %v388, %v390
        %v392 = vrot.slane %v281, 1
        %v393 = vrot.slane %v282, 1
        %v394 = vsel %vm371, %v392, %v393
        %v395 = vrot.slane %v283, 1
        %v396 = vsel %vm371, %v393, %v395
        %v397 = vrot.slane %v284, 1
        %v398 = vrot.slane %v285, 1
        %v399 = vsel %vm371, %v397, %v398
        %v400 = vrot.slane %v286, 1
        %v401 = vsel %vm371, %v398, %v400
        %v402 = vrot.slane %v287, 1
        %v403 = vrot.slane %v288, 1
        %v404 = vsel %vm371, %v402, %v403
        %v405 = vrot.slane %v289, 1
        %v406 = vsel %vm371, %v403, %v405
        %v407 = vrot.slane %v290, 1
        %v408 = vrot.slane %v291, 1
        %v409 = vsel %vm371, %v407, %v408
        %v410 = vrot.slane %v292, 1
        %v411 = vsel %vm371, %v408, %v410
        %412 = vrot.lane.b32.xlu0 %v374, 64
        %v413 = vpop.permute.xlu0 %412
        %414 = vrot.lane.b32.xlu0 %v376, 64
        %v415 = vpop.permute.xlu0 %414
        %416 = vrot.lane.b32.xlu0 %v379, 64
        %v417 = vpop.permute.xlu0 %416
        %418 = vrot.lane.b32.xlu0 %v381, 64
        %v419 = vpop.permute.xlu0 %418
        %420 = vrot.lane.b32.xlu0 %v384, 64
        %v421 = vpop.permute.xlu0 %420
        %422 = vrot.lane.b32.xlu0 %v386, 64
        %v423 = vpop.permute.xlu0 %422
        %424 = vrot.lane.b32.xlu0 %v389, 64
        %v425 = vpop.permute.xlu0 %424
        %426 = vrot.lane.b32.xlu0 %v391, 64
        %v427 = vpop.permute.xlu0 %426
        %428 = vrot.lane.b32.xlu0 %v394, 64
        %v429 = vpop.permute.xlu0 %428
        %430 = vrot.lane.b32.xlu0 %v396, 64
        %v431 = vpop.permute.xlu0 %430
        %432 = vrot.lane.b32.xlu0 %v399, 64
        %v433 = vpop.permute.xlu0 %432
        %434 = vrot.lane.b32.xlu0 %v401, 64
        %v435 = vpop.permute.xlu0 %434
        %436 = vrot.lane.b32.xlu0 %v404, 64
        %v437 = vpop.permute.xlu0 %436
        %438 = vrot.lane.b32.xlu0 %v406, 64
        %v439 = vpop.permute.xlu0 %438
        %440 = vrot.lane.b32.xlu0 %v409, 64
        %v441 = vpop.permute.xlu0 %440
        %442 = vrot.lane.b32.xlu0 %v411, 64
        %v443 = vpop.permute.xlu0 %442
        %vm460 = vcmask 1045504
        %v461 = vrot.slane %v269, 2
        %v462 = vrot.slane %v270, 2
        %v463 = vsel %vm460, %v461, %v462
        %v464 = vrot.slane %v271, 2
        %v465 = vsel %vm460, %v462, %v464
        %v466 = vrot.slane %v272, 2
        %v467 = vrot.slane %v273, 2
        %v468 = vsel %vm460, %v466, %v467
        %v469 = vrot.slane %v274, 2
        %v470 = vsel %vm460, %v467, %v469
        %v471 = vrot.slane %v275, 2
        %v472 = vrot.slane %v276, 2
        %v473 = vsel %vm460, %v471, %v472
        %v474 = vrot.slane %v277, 2
        %v475 = vsel %vm460, %v472, %v474
        %v476 = vrot.slane %v278, 2
        %v477 = vrot.slane %v279, 2
        %v478 = vsel %vm460, %v476, %v477
        %v479 = vrot.slane %v280, 2
        %v480 = vsel %vm460, %v477, %v479
        %v481 = vrot.slane %v281, 2
        %v482 = vrot.slane %v282, 2
        %v483 = vsel %vm460, %v481, %v482
        %v484 = vrot.slane %v283, 2
        %v485 = vsel %vm460, %v482, %v484
        %v486 = vrot.slane %v284, 2
        %v487 = vrot.slane %v285, 2
        %v488 = vsel %vm460, %v486, %v487
        %v489 = vrot.slane %v286, 2
        %v490 = vsel %vm460, %v487, %v489
        %v491 = vrot.slane %v287, 2
        %v492 = vrot.slane %v288, 2
        %v493 = vsel %vm460, %v491, %v492
        %v494 = vrot.slane %v289, 2
        %v495 = vsel %vm460, %v492, %v494
        %v496 = vrot.slane %v290, 2
        %v497 = vrot.slane %v291, 2
        %v498 = vsel %vm460, %v496, %v497
        %v499 = vrot.slane %v292, 2
        %v500 = vsel %vm460, %v497, %v499
        %533 = vrot.lane.b32.xlu0 %v296, 64
        %v534 = vpop.permute.xlu0 %533
        %535 = vrot.lane.b32.xlu0 %v297, 64
        %v536 = vpop.permute.xlu0 %535
        %537 = vrot.lane.b32.xlu0 %v299, 64
        %v538 = vpop.permute.xlu0 %537
        %539 = vrot.lane.b32.xlu0 %v300, 64
        %v540 = vpop.permute.xlu0 %539
        %541 = vrot.lane.b32.xlu0 %v302, 64
        %v542 = vpop.permute.xlu0 %541
        %543 = vrot.lane.b32.xlu0 %v303, 64
        %v544 = vpop.permute.xlu0 %543
        %545 = vrot.lane.b32.xlu0 %v305, 64
        %v546 = vpop.permute.xlu0 %545
        %547 = vrot.lane.b32.xlu0 %v306, 64
        %v548 = vpop.permute.xlu0 %547
        %549 = vrot.lane.b32.xlu0 %v308, 64
        %v550 = vpop.permute.xlu0 %549
        %551 = vrot.lane.b32.xlu0 %v309, 64
        %v552 = vpop.permute.xlu0 %551
        %553 = vrot.lane.b32.xlu0 %v311, 64
        %v554 = vpop.permute.xlu0 %553
        %555 = vrot.lane.b32.xlu0 %v312, 64
        %v556 = vpop.permute.xlu0 %555
        %557 = vrot.lane.b32.xlu0 %v314, 64
        %v558 = vpop.permute.xlu0 %557
        %559 = vrot.lane.b32.xlu0 %v315, 64
        %v560 = vpop.permute.xlu0 %559
        %561 = vrot.lane.b32.xlu0 %v317, 64
        %v562 = vpop.permute.xlu0 %561
        %563 = vrot.lane.b32.xlu0 %v318, 64
        %v564 = vpop.permute.xlu0 %563
        %v589 = vrot.slane %v296, 1
        %v590 = vrot.slane %v297, 1
        %v591 = vsel %vm371, %v589, %v590
        %v592 = vrot.slane %v298, 1
        %v593 = vsel %vm371, %v590, %v592
        %v594 = vrot.slane %v299, 1
        %v595 = vrot.slane %v300, 1
        %v596 = vsel %vm371, %v594, %v595
        %v597 = vrot.slane %v301, 1
        %v598 = vsel %vm371, %v595, %v597
        %v599 = vrot.slane %v302, 1
        %v600 = vrot.slane %v303, 1
        %v601 = vsel %vm371, %v599, %v600
        %v602 = vrot.slane %v304, 1
        %v603 = vsel %vm371, %v600, %v602
        %v604 = vrot.slane %v305, 1
        %v605 = vrot.slane %v306, 1
        %v606 = vsel %vm371, %v604, %v605
        %v607 = vrot.slane %v307, 1
        %v608 = vsel %vm371, %v605, %v607
        %v609 = vrot.slane %v308, 1
        %v610 = vrot.slane %v309, 1
        %v611 = vsel %vm371, %v609, %v610
        %v612 = vrot.slane %v310, 1
        %v613 = vsel %vm371, %v610, %v612
        %v614 = vrot.slane %v311, 1
        %v615 = vrot.slane %v312, 1
        %v616 = vsel %vm371, %v614, %v615
        %v617 = vrot.slane %v313, 1
        %v618 = vsel %vm371, %v615, %v617
        %v619 = vrot.slane %v314, 1
        %v620 = vrot.slane %v315, 1
        %v621 = vsel %vm371, %v619, %v620
        %v622 = vrot.slane %v316, 1
        %v623 = vsel %vm371, %v620, %v622
        %v624 = vrot.slane %v317, 1
        %v625 = vrot.slane %v318, 1
        %v626 = vsel %vm371, %v624, %v625
        %v627 = vrot.slane %v319, 1
        %v628 = vsel %vm371, %v625, %v627
        %v645 = vrot.slane %v296, 2
        %v646 = vrot.slane %v297, 2
        %v647 = vsel %vm460, %v645, %v646
        %v648 = vrot.slane %v298, 2
        %v649 = vsel %vm460, %v646, %v648
        %v650 = vrot.slane %v299, 2
        %v651 = vrot.slane %v300, 2
        %v652 = vsel %vm460, %v650, %v651
        %v653 = vrot.slane %v301, 2
        %v654 = vsel %vm460, %v651, %v653
        %v655 = vrot.slane %v302, 2
        %v656 = vrot.slane %v303, 2
        %v657 = vsel %vm460, %v655, %v656
        %v658 = vrot.slane %v304, 2
        %v659 = vsel %vm460, %v656, %v658
        %v660 = vrot.slane %v305, 2
        %v661 = vrot.slane %v306, 2
        %v662 = vsel %vm460, %v660, %v661
        %v663 = vrot.slane %v307, 2
        %v664 = vsel %vm460, %v661, %v663
        %v665 = vrot.slane %v308, 2
        %v666 = vrot.slane %v309, 2
        %v667 = vsel %vm460, %v665, %v666
        %v668 = vrot.slane %v310, 2
        %v669 = vsel %vm460, %v666, %v668
        %v670 = vrot.slane %v311, 2
        %v671 = vrot.slane %v312, 2
        %v672 = vsel %vm460, %v670, %v671
        %v673 = vrot.slane %v313, 2
        %v674 = vsel %vm460, %v671, %v673
        %v675 = vrot.slane %v314, 2
        %v676 = vrot.slane %v315, 2
        %v677 = vsel %vm460, %v675, %v676
        %v678 = vrot.slane %v316, 2
        %v679 = vsel %vm460, %v676, %v678
        %v680 = vrot.slane %v317, 2
        %v681 = vrot.slane %v318, 2
        %v682 = vsel %vm460, %v680, %v681
        %v683 = vrot.slane %v319, 2
        %v684 = vsel %vm460, %v681, %v683
        %685 = vrot.lane.b32.xlu0 %v647, 64
        %v686 = vpop.permute.xlu0 %685
        %687 = vrot.lane.b32.xlu0 %v649, 64
        %v688 = vpop.permute.xlu0 %687
        %689 = vrot.lane.b32.xlu0 %v652, 64
        %v690 = vpop.permute.xlu0 %689
        %691 = vrot.lane.b32.xlu0 %v654, 64
        %v692 = vpop.permute.xlu0 %691
        %693 = vrot.lane.b32.xlu0 %v657, 64
        %v694 = vpop.permute.xlu0 %693
        %695 = vrot.lane.b32.xlu0 %v659, 64
        %v696 = vpop.permute.xlu0 %695
        %697 = vrot.lane.b32.xlu0 %v662, 64
        %v698 = vpop.permute.xlu0 %697
        %699 = vrot.lane.b32.xlu0 %v664, 64
        %v700 = vpop.permute.xlu0 %699
        %701 = vrot.lane.b32.xlu0 %v667, 64
        %v702 = vpop.permute.xlu0 %701
        %703 = vrot.lane.b32.xlu0 %v669, 64
        %v704 = vpop.permute.xlu0 %703
        %705 = vrot.lane.b32.xlu0 %v672, 64
        %v706 = vpop.permute.xlu0 %705
        %707 = vrot.lane.b32.xlu0 %v674, 64
        %v708 = vpop.permute.xlu0 %707
        %709 = vrot.lane.b32.xlu0 %v677, 64
        %v710 = vpop.permute.xlu0 %709
        %711 = vrot.lane.b32.xlu0 %v679, 64
        %v712 = vpop.permute.xlu0 %711
        %713 = vrot.lane.b32.xlu0 %v682, 64
        %v714 = vpop.permute.xlu0 %713
        %715 = vrot.lane.b32.xlu0 %v684, 64
        %v716 = vpop.permute.xlu0 %715
        %v757 = vrot.slane %v323, 1
        %v758 = vrot.slane %v324, 1
        %v759 = vsel %vm371, %v757, %v758
        %v760 = vrot.slane %v325, 1
        %v761 = vsel %vm371, %v758, %v760
        %v762 = vrot.slane %v326, 1
        %v763 = vrot.slane %v327, 1
        %v764 = vsel %vm371, %v762, %v763
        %v765 = vrot.slane %v328, 1
        %v766 = vsel %vm371, %v763, %v765
        %v767 = vrot.slane %v329, 1
        %v768 = vrot.slane %v330, 1
        %v769 = vsel %vm371, %v767, %v768
        %v770 = vrot.slane %v331, 1
        %v771 = vsel %vm371, %v768, %v770
        %v772 = vrot.slane %v332, 1
        %v773 = vrot.slane %v333, 1
        %v774 = vsel %vm371, %v772, %v773
        %v775 = vrot.slane %v334, 1
        %v776 = vsel %vm371, %v773, %v775
        %v777 = vrot.slane %v335, 1
        %v778 = vrot.slane %v336, 1
        %v779 = vsel %vm371, %v777, %v778
        %v780 = vrot.slane %v337, 1
        %v781 = vsel %vm371, %v778, %v780
        %v782 = vrot.slane %v338, 1
        %v783 = vrot.slane %v339, 1
        %v784 = vsel %vm371, %v782, %v783
        %v785 = vrot.slane %v340, 1
        %v786 = vsel %vm371, %v783, %v785
        %v787 = vrot.slane %v341, 1
        %v788 = vrot.slane %v342, 1
        %v789 = vsel %vm371, %v787, %v788
        %v790 = vrot.slane %v343, 1
        %v791 = vsel %vm371, %v788, %v790
        %v792 = vrot.slane %v344, 1
        %v793 = vrot.slane %v345, 1
        %v794 = vsel %vm371, %v792, %v793
        %v795 = vrot.slane %v346, 1
        %v796 = vsel %vm371, %v793, %v795
        %797 = vrot.lane.b32.xlu0 %v759, 64
        %v798 = vpop.permute.xlu0 %797
        %799 = vrot.lane.b32.xlu0 %v761, 64
        %v800 = vpop.permute.xlu0 %799
        %801 = vrot.lane.b32.xlu0 %v764, 64
        %v802 = vpop.permute.xlu0 %801
        %803 = vrot.lane.b32.xlu0 %v766, 64
        %v804 = vpop.permute.xlu0 %803
        %805 = vrot.lane.b32.xlu0 %v769, 64
        %v806 = vpop.permute.xlu0 %805
        %807 = vrot.lane.b32.xlu0 %v771, 64
        %v808 = vpop.permute.xlu0 %807
        %809 = vrot.lane.b32.xlu0 %v774, 64
        %v810 = vpop.permute.xlu0 %809
        %811 = vrot.lane.b32.xlu0 %v776, 64
        %v812 = vpop.permute.xlu0 %811
        %813 = vrot.lane.b32.xlu0 %v779, 64
        %v814 = vpop.permute.xlu0 %813
        %815 = vrot.lane.b32.xlu0 %v781, 64
        %v816 = vpop.permute.xlu0 %815
        %817 = vrot.lane.b32.xlu0 %v784, 64
        %v818 = vpop.permute.xlu0 %817
        %819 = vrot.lane.b32.xlu0 %v786, 64
        %v820 = vpop.permute.xlu0 %819
        %821 = vrot.lane.b32.xlu0 %v789, 64
        %v822 = vpop.permute.xlu0 %821
        %823 = vrot.lane.b32.xlu0 %v791, 64
        %v824 = vpop.permute.xlu0 %823
        %825 = vrot.lane.b32.xlu0 %v794, 64
        %v826 = vpop.permute.xlu0 %825
        %827 = vrot.lane.b32.xlu0 %v796, 64
        %v828 = vpop.permute.xlu0 %827
        %v845 = vrot.slane %v323, 2
        %v846 = vrot.slane %v324, 2
        %v847 = vsel %vm460, %v845, %v846
        %v848 = vrot.slane %v325, 2
        %v849 = vsel %vm460, %v846, %v848
        %v850 = vrot.slane %v326, 2
        %v851 = vrot.slane %v327, 2
        %v852 = vsel %vm460, %v850, %v851
        %v853 = vrot.slane %v328, 2
        %v854 = vsel %vm460, %v851, %v853
        %v855 = vrot.slane %v329, 2
        %v856 = vrot.slane %v330, 2
        %v857 = vsel %vm460, %v855, %v856
        %v858 = vrot.slane %v331, 2
        %v859 = vsel %vm460, %v856, %v858
        %v860 = vrot.slane %v332, 2
        %v861 = vrot.slane %v333, 2
        %v862 = vsel %vm460, %v860, %v861
        %v863 = vrot.slane %v334, 2
        %v864 = vsel %vm460, %v861, %v863
        %v865 = vrot.slane %v335, 2
        %v866 = vrot.slane %v336, 2
        %v867 = vsel %vm460, %v865, %v866
        %v868 = vrot.slane %v337, 2
        %v869 = vsel %vm460, %v866, %v868
        %v870 = vrot.slane %v338, 2
        %v871 = vrot.slane %v339, 2
        %v872 = vsel %vm460, %v870, %v871
        %v873 = vrot.slane %v340, 2
        %v874 = vsel %vm460, %v871, %v873
        %v875 = vrot.slane %v341, 2
        %v876 = vrot.slane %v342, 2
        %v877 = vsel %vm460, %v875, %v876
        %v878 = vrot.slane %v343, 2
        %v879 = vsel %vm460, %v876, %v878
        %v880 = vrot.slane %v344, 2
        %v881 = vrot.slane %v345, 2
        %v882 = vsel %vm460, %v880, %v881
        %v883 = vrot.slane %v346, 2
        %v884 = vsel %vm460, %v881, %v883
        %vm885 = vcmask 523264
        %v886 = vsel %vm885, %v269, %v413
        %v887 = vsel %vm885, %v270, %v415
        %v888 = vsel %vm885, %v272, %v417
        %v889 = vsel %vm885, %v273, %v419
        %v890 = vsel %vm885, %v275, %v421
        %v891 = vsel %vm885, %v276, %v423
        %v892 = vsel %vm885, %v278, %v425
        %v893 = vsel %vm885, %v279, %v427
        %v894 = vsel %vm885, %v281, %v429
        %v895 = vsel %vm885, %v282, %v431
        %v896 = vsel %vm885, %v284, %v433
        %v897 = vsel %vm885, %v285, %v435
        %v898 = vsel %vm885, %v287, %v437
        %v899 = vsel %vm885, %v288, %v439
        %v900 = vsel %vm885, %v290, %v441
        %v901 = vsel %vm885, %v291, %v443
        %v902 = vsel %vm885, %v463, %v534
        %v903 = vsel %vm885, %v465, %v536
        %v904 = vsel %vm885, %v468, %v538
        %v905 = vsel %vm885, %v470, %v540
        %v906 = vsel %vm885, %v473, %v542
        %v907 = vsel %vm885, %v475, %v544
        %v908 = vsel %vm885, %v478, %v546
        %v909 = vsel %vm885, %v480, %v548
        %v910 = vsel %vm885, %v483, %v550
        %v911 = vsel %vm885, %v485, %v552
        %v912 = vsel %vm885, %v488, %v554
        %v913 = vsel %vm885, %v490, %v556
        %v914 = vsel %vm885, %v493, %v558
        %v915 = vsel %vm885, %v495, %v560
        %v916 = vsel %vm885, %v498, %v562
        %v917 = vsel %vm885, %v500, %v564
        %v918 = vsel %vm885, %v591, %v686
        %v919 = vsel %vm885, %v593, %v688
        %v920 = vsel %vm885, %v596, %v690
        %v921 = vsel %vm885, %v598, %v692
        %v922 = vsel %vm885, %v601, %v694
        %v923 = vsel %vm885, %v603, %v696
        %v924 = vsel %vm885, %v606, %v698
        %v925 = vsel %vm885, %v608, %v700
        %v926 = vsel %vm885, %v611, %v702
        %v927 = vsel %vm885, %v613, %v704
        %v928 = vsel %vm885, %v616, %v706
        %v929 = vsel %vm885, %v618, %v708
        %v930 = vsel %vm885, %v621, %v710
        %v931 = vsel %vm885, %v623, %v712
        %v932 = vsel %vm885, %v626, %v714
        %v933 = vsel %vm885, %v628, %v716
        %v934 = vsel %vm885, %v323, %v798
        %v935 = vsel %vm885, %v324, %v800
        %v936 = vsel %vm885, %v326, %v802
        %v937 = vsel %vm885, %v327, %v804
        %v938 = vsel %vm885, %v329, %v806
        %v939 = vsel %vm885, %v330, %v808
        %v940 = vsel %vm885, %v332, %v810
        %v941 = vsel %vm885, %v333, %v812
        %v942 = vsel %vm885, %v335, %v814
        %v943 = vsel %vm885, %v336, %v816
        %v944 = vsel %vm885, %v338, %v818
        %v945 = vsel %vm885, %v339, %v820
        %v946 = vsel %vm885, %v341, %v822
        %v947 = vsel %vm885, %v342, %v824
        %v948 = vsel %vm885, %v344, %v826
        %v949 = vsel %vm885, %v345, %v828
        %v950 = vld [vmem:[#allocation5] sm:$0xff]
        %v951 = vld [vmem:[#allocation5 + $0x8] sm:$0xff]
        %v952 = vld [vmem:[#allocation5 + $0x10] sm:$0xff]
        %v953 = vld [vmem:[#allocation5 + $0x18] sm:$0xff]
        %v954 = vld [vmem:[#allocation5 + $0x20] sm:$0xff]
        %v955 = vld [vmem:[#allocation5 + $0x28] sm:$0xff]
        %v956 = vld [vmem:[#allocation5 + $0x30] sm:$0xff]
        %v957 = vld [vmem:[#allocation5 + $0x38] sm:$0xff]
        %v958 = vld [vmem:[#allocation5 + $0x40] sm:$0xff]
        %v959 = vld [vmem:[#allocation5 + $0x48] sm:$0xff]
        %v960 = vld [vmem:[#allocation5 + $0x50] sm:$0xff]
        %v961 = vld [vmem:[#allocation5 + $0x58] sm:$0xff]
        %v962 = vld [vmem:[#allocation5 + $0x60] sm:$0xff]
        %v963 = vld [vmem:[#allocation5 + $0x68] sm:$0xff]
        %v964 = vld [vmem:[#allocation5 + $0x70] sm:$0xff]
        %v965 = vld [vmem:[#allocation5 + $0x78] sm:$0xff]
        %v966 = vld [vmem:[#allocation5 + $0x80] sm:$0xff]
        %v967 = vld [vmem:[#allocation5 + $0x88] sm:$0xff]
        %v968 = vld [vmem:[#allocation5 + $0x90] sm:$0xff]
        %v969 = vld [vmem:[#allocation5 + $0x98] sm:$0xff]
        %v970 = vld [vmem:[#allocation5 + $0xa0] sm:$0xff]
        %v971 = vld [vmem:[#allocation5 + $0xa8] sm:$0xff]
        %v972 = vld [vmem:[#allocation5 + $0xb0] sm:$0xff]
        %v973 = vld [vmem:[#allocation5 + $0xb8] sm:$0xff]
        %v974 = vld [vmem:[#allocation5 + $0xc0] sm:$0xff]
        %v975 = vld [vmem:[#allocation5 + $0xc8] sm:$0xff]
        %v976 = vld [vmem:[#allocation5 + $0xd0] sm:$0xff]
        %v977 = vld [vmem:[#allocation5 + $0xd8] sm:$0xff]
        %v978 = vld [vmem:[#allocation5 + $0xe0] sm:$0xff]
        %v979 = vld [vmem:[#allocation5 + $0xe8] sm:$0xff]
        %v980 = vld [vmem:[#allocation5 + $0xf0] sm:$0xff]
        %v981 = vld [vmem:[#allocation5 + $0xf8] sm:$0xff]
        %v982 = vld [vmem:[#allocation5 + $0x100] sm:$0xff]
        %v983 = vld [vmem:[#allocation5 + $0x108] sm:$0xff]
        %v984 = vld [vmem:[#allocation5 + $0x110] sm:$0xff]
        %v985 = vld [vmem:[#allocation5 + $0x118] sm:$0xff]
        %v986 = vld [vmem:[#allocation5 + $0x120] sm:$0xff]
        %v987 = vld [vmem:[#allocation5 + $0x128] sm:$0xff]
        %v988 = vld [vmem:[#allocation5 + $0x130] sm:$0xff]
        %v989 = vld [vmem:[#allocation5 + $0x138] sm:$0xff]
        %v990 = vld [vmem:[#allocation5 + $0x140] sm:$0xff]
        %v991 = vld [vmem:[#allocation5 + $0x148] sm:$0xff]
        %v992 = vld [vmem:[#allocation5 + $0x150] sm:$0xff]
        %v993 = vld [vmem:[#allocation5 + $0x158] sm:$0xff]
        %v994 = vld [vmem:[#allocation5 + $0x160] sm:$0xff]
        %v995 = vld [vmem:[#allocation5 + $0x168] sm:$0xff]
        %v996 = vld [vmem:[#allocation5 + $0x170] sm:$0xff]
        %v997 = vld [vmem:[#allocation5 + $0x178] sm:$0xff]
        %v998 = vld [vmem:[#allocation5 + $0x180] sm:$0xff]
        %v999 = vld [vmem:[#allocation5 + $0x188] sm:$0xff]
        %v1000 = vld [vmem:[#allocation5 + $0x190] sm:$0xff]
        %v1001 = vld [vmem:[#allocation5 + $0x198] sm:$0xff]
        %v1002 = vld [vmem:[#allocation5 + $0x1a0] sm:$0xff]
        %v1003 = vld [vmem:[#allocation5 + $0x1a8] sm:$0xff]
        %v1004 = vld [vmem:[#allocation5 + $0x1b0] sm:$0xff]
        %v1005 = vld [vmem:[#allocation5 + $0x1b8] sm:$0xff]
        %v1006 = vld [vmem:[#allocation5 + $0x1c0] sm:$0xff]
        %v1007 = vld [vmem:[#allocation5 + $0x1c8] sm:$0xff]
        %v1008 = vld [vmem:[#allocation5 + $0x1d0] sm:$0xff]
        %v1009 = vld [vmem:[#allocation5 + $0x1d8] sm:$0xff]
        %v1010 = vld [vmem:[#allocation5 + $0x1e0] sm:$0xff]
        %v1011 = vld [vmem:[#allocation5 + $0x1e8] sm:$0xff]
        %v1012 = vld [vmem:[#allocation5 + $0x1f0] sm:$0xff]
        %v1013 = vld [vmem:[#allocation5 + $0x1f8] sm:$0xff]
        %v1014 = vld [vmem:[#allocation5 + $0x200] sm:$0xff]
        %v1015 = vld [vmem:[#allocation5 + $0x208] sm:$0xff]
        %v1016 = vld [vmem:[#allocation5 + $0x210] sm:$0xff]
        %v1017 = vld [vmem:[#allocation5 + $0x218] sm:$0xff]
        %v1018 = vld [vmem:[#allocation5 + $0x220] sm:$0xff]
        %v1019 = vld [vmem:[#allocation5 + $0x228] sm:$0xff]
        %v1020 = vld [vmem:[#allocation5 + $0x230] sm:$0xff]
        %v1021 = vld [vmem:[#allocation5 + $0x238] sm:$0xff]
        %v1022 = vsel %vm885, %v847, 0
        %v1024 = vsel %vm885, %v849, 0
        %v1026 = vsel %vm885, %v852, 0
        %v1028 = vsel %vm885, %v854, 0
        %v1030 = vsel %vm885, %v857, 0
        %v1032 = vsel %vm885, %v859, 0
        %v1034 = vsel %vm885, %v862, 0
        %v1036 = vsel %vm885, %v864, 0
        %v1038 = vsel %vm885, %v867, 0
        %v1040 = vsel %vm885, %v869, 0
        %v1042 = vsel %vm885, %v872, 0
        %v1044 = vsel %vm885, %v874, 0
        %v1046 = vsel %vm885, %v877, 0
        %v1048 = vsel %vm885, %v879, 0
        %v1050 = vsel %vm885, %v882, 0
        %v1052 = vsel %vm885, %v884, 0
        %1054 = vmatprep.subr.mxu0 0.0
        %1055 = vmatpush1.msra.mxu0 %v950
        %1056 = vmatprep.subr.mxu0 0.0
        %1057 = vmatpush1.msra.mxu0 %v951
        %1058 = vmatprep.subr.mxu0 0.0
        %1059 = vmatpush1.msra.mxu0 %v952
        %1060 = vmatprep.subr.mxu0 0.0
        %1061 = vmatpush1.msra.mxu0 %v953
        %1062 = vmatprep.subr.mxu0 0.0
        %1063 = vmatpush1.msra.mxu0 %v954
        %1064 = vmatprep.subr.mxu0 0.0
        %1065 = vmatpush1.msra.mxu0 %v955
        %1066 = vmatprep.subr.mxu0 0.0
        %1067 = vmatpush1.msra.mxu0 %v956
        %1068 = vmatprep.subr.mxu0 0.0
        %1069 = vmatpush1.msra.mxu0 %v957
        %1070 = vmatprep.subr.mxu0 0.0
        %1071 = vmatpush1.msra.mxu0 %v958
        %1072 = vmatprep.subr.mxu0 0.0
        %1073 = vmatpush1.msra.mxu0 %v959
        %1074 = vmatprep.subr.mxu0 0.0
        %1075 = vmatpush1.msra.mxu0 %v960
        %1076 = vmatprep.subr.mxu0 0.0
        %1077 = vmatpush1.msra.mxu0 %v961
        %1078 = vmatprep.subr.mxu0 0.0
        %1079 = vmatpush1.msra.mxu0 %v962
        %1080 = vmatprep.subr.mxu0 0.0
        %1081 = vmatpush1.msra.mxu0 %v963
        %1082 = vmatprep.subr.mxu0 0.0
        %1083 = vmatpush1.msra.mxu0 %v964
        %1084 = vmatprep.subr.mxu0 0.0
        %1085 = vmatpush1.msra.mxu0 %v965
        %1086 = vmatprep.subr.mxu0 0.0
        %1087 = vmatpush1.msra.mxu0 %v966
        %1088 = vmatprep.subr.mxu0 0.0
        %1089 = vmatpush1.msra.mxu0 %v967
        %1090 = vmatprep.subr.mxu0 0.0
        %1091 = vmatpush1.msra.mxu0 %v968
        %1092 = vmatprep.subr.mxu0 0.0
        %1093 = vmatpush1.msra.mxu0 %v969
        %1094 = vmatprep.subr.mxu0 0.0
        %1095 = vmatpush1.msra.mxu0 %v970
        %1096 = vmatprep.subr.mxu0 0.0
        %1097 = vmatpush1.msra.mxu0 %v971
        %1098 = vmatprep.subr.mxu0 0.0
        %1099 = vmatpush1.msra.mxu0 %v972
        %1100 = vmatprep.subr.mxu0 0.0
        %1101 = vmatpush1.msra.mxu0 %v973
        %1102 = vmatprep.subr.mxu0 0.0
        %1103 = vmatpush1.msra.mxu0 %v974
        %1104 = vmatprep.subr.mxu0 0.0
        %1105 = vmatpush1.msra.mxu0 %v975
        %1106 = vmatprep.subr.mxu0 0.0
        %1107 = vmatpush1.msra.mxu0 %v976
        %1108 = vmatprep.subr.mxu0 0.0
        %1109 = vmatpush1.msra.mxu0 %v977
        %1110 = vmatprep.subr.mxu0 0.0
        %1111 = vmatpush1.msra.mxu0 %v978
        %1112 = vmatprep.subr.mxu0 0.0
        %1113 = vmatpush1.msra.mxu0 %v979
        %1114 = vmatprep.subr.mxu0 0.0
        %1115 = vmatpush1.msra.mxu0 %v980
        %1116 = vmatprep.subr.mxu0 0.0
        %1117 = vmatpush1.msra.mxu0 %v981
        %1118 = vmatprep.mubr.f32.mxu0 %v902
        %1119 = vmatmul.mubr.f32.gmra.mrb[0].mxu0 %v886
        %v1120 = vpop.f32.mrb[0].mxu0
        %v1121 = vadd.f32 0.0, %v1120
        %v1122 = vpop.f32.mrb[0].mxu0
        %1123 = vmatprep.mubr.f32.mxu0 %v903
        %1124 = vmatmul.mubr.f32.gmra.mrb[0].mxu0 %v887
        %v1125 = vpop.f32.mrb[0].mxu0
        %v1126 = vadd.f32 0.0, %v1125
        %v1127 = vpop.f32.mrb[0].mxu0
        %1128 = vmatprep.mubr.f32.mxu0 %v904
        %1129 = vmatmul.mubr.f32.gmra.mrb[0].mxu0 %v888
        %v1130 = vpop.f32.mrb[0].mxu0
        %v1131 = vadd.f32 0.0, %v1130
        %v1132 = vpop.f32.mrb[0].mxu0
        %1133 = vmatprep.mubr.f32.mxu0 %v905
        %1134 = vmatmul.mubr.f32.gmra.mrb[0].mxu0 %v889
        %v1135 = vpop.f32.mrb[0].mxu0
        %v1136 = vadd.f32 0.0, %v1135
        %v1137 = vpop.f32.mrb[0].mxu0
        %1138 = vmatprep.mubr.f32.mxu0 %v906
        %1139 = vmatmul.mubr.f32.gmra.mrb[0].mxu0 %v890
        %v1140 = vpop.f32.mrb[0].mxu0
        %v1141 = vadd.f32 0.0, %v1140
        %v1142 = vpop.f32.mrb[0].mxu0
        %1143 = vmatprep.mubr.f32.mxu0 %v907
        %1144 = vmatmul.mubr.f32.gmra.mrb[0].mxu0 %v891
        %v1145 = vpop.f32.mrb[0].mxu0
        %v1146 = vadd.f32 0.0, %v1145
        %v1147 = vpop.f32.mrb[0].mxu0
        %1148 = vmatprep.mubr.f32.mxu0 %v908
        %1149 = vmatmul.mubr.f32.gmra.mrb[0].mxu0 %v892
        %v1150 = vpop.f32.mrb[0].mxu0
        %v1151 = vadd.f32 0.0, %v1150
        %v1152 = vpop.f32.mrb[0].mxu0
        %1153 = vmatprep.mubr.f32.mxu0 %v909
        %1154 = vmatmul.mubr.f32.gmra.mrb[0].mxu0 %v893
        %v1155 = vpop.f32.mrb[0].mxu0
        %v1156 = vadd.f32 0.0, %v1155
        %v1157 = vpop.f32.mrb[0].mxu0
        %1158 = vmatprep.mubr.f32.mxu0 %v910
        %1159 = vmatmul.mubr.f32.gmra.mrb[0].mxu0 %v894
        %v1160 = vpop.f32.mrb[0].mxu0
        %v1161 = vadd.f32 0.0, %v1160
        %v1162 = vpop.f32.mrb[0].mxu0
        %1163 = vmatprep.mubr.f32.mxu0 %v911
        %1164 = vmatmul.mubr.f32.gmra.mrb[0].mxu0 %v895
        %v1165 = vpop.f32.mrb[0].mxu0
        %v1166 = vadd.f32 0.0, %v1165
        %v1167 = vpop.f32.mrb[0].mxu0
        %1168 = vmatprep.mubr.f32.mxu0 %v912
        %1169 = vmatmul.mubr.f32.gmra.mrb[0].mxu0 %v896
        %v1170 = vpop.f32.mrb[0].mxu0
        %v1171 = vadd.f32 0.0, %v1170
        %v1172 = vpop.f32.mrb[0].mxu0
        %1173 = vmatprep.mubr.f32.mxu0 %v913
        %1174 = vmatmul.mubr.f32.gmra.mrb[0].mxu0 %v897
        %v1175 = vpop.f32.mrb[0].mxu0
        %v1176 = vadd.f32 0.0, %v1175
        %v1177 = vpop.f32.mrb[0].mxu0
        %1178 = vmatprep.mubr.f32.mxu0 %v914
        %1179 = vmatmul.mubr.f32.gmra.mrb[0].mxu0 %v898
        %v1180 = vpop.f32.mrb[0].mxu0
        %v1181 = vadd.f32 0.0, %v1180
        %v1182 = vpop.f32.mrb[0].mxu0
        %1183 = vmatprep.mubr.f32.mxu0 %v915
        %1184 = vmatmul.mubr.f32.gmra.mrb[0].mxu0 %v899
        %v1185 = vpop.f32.mrb[0].mxu0
        %v1186 = vadd.f32 0.0, %v1185
        %v1187 = vpop.f32.mrb[0].mxu0
        %1188 = vmatprep.mubr.f32.mxu0 %v916
        %1189 = vmatmul.mubr.f32.gmra.mrb[0].mxu0 %v900
        %v1190 = vpop.f32.mrb[0].mxu0
        %v1191 = vadd.f32 0.0, %v1190
        %v1192 = vpop.f32.mrb[0].mxu0
        %1193 = vmatprep.mubr.f32.mxu0 %v917
        %1194 = vmatmul.mubr.f32.gmra.mrb[0].mxu0 %v901
        %v1195 = vpop.f32.mrb[0].mxu0
        %v1196 = vadd.f32 0.0, %v1195
        %v1197 = vpop.f32.mrb[0].mxu0
        %1198 = vdwg.mxu0
        %1199 = vmatprep.subr.mxu0 0.0
        %1200 = vmatpush1.msra.mxu0 %v982
        %1201 = vmatprep.subr.mxu0 0.0
        %1202 = vmatpush1.msra.mxu0 %v983
        %1203 = vmatprep.subr.mxu0 0.0
        %1204 = vmatpush1.msra.mxu0 %v984
        %1205 = vmatprep.subr.mxu0 0.0
        %1206 = vmatpush1.msra.mxu0 %v985
        %1207 = vmatprep.subr.mxu0 0.0
        %1208 = vmatpush1.msra.mxu0 %v986
        %1209 = vmatprep.subr.mxu0 0.0
        %1210 = vmatpush1.msra.mxu0 %v987
        %1211 = vmatprep.subr.mxu0 0.0
        %1212 = vmatpush1.msra.mxu0 %v988
        %1213 = vmatprep.subr.mxu0 0.0
        %1214 = vmatpush1.msra.mxu0 %v989
        %1215 = vmatprep.subr.mxu0 0.0
        %1216 = vmatpush1.msra.mxu0 %v990
        %1217 = vmatprep.subr.mxu0 0.0
        %1218 = vmatpush1.msra.mxu0 %v991
        %1219 = vmatprep.subr.mxu0 0.0
        %1220 = vmatpush1.msra.mxu0 %v992
        %1221 = vmatprep.subr.mxu0 0.0
        %1222 = vmatpush1.msra.mxu0 %v993
        %1223 = vmatprep.subr.mxu0 0.0
        %1224 = vmatpush1.msra.mxu0 %v994
        %1225 = vmatprep.subr.mxu0 0.0
        %1226 = vmatpush1.msra.mxu0 %v995
        %1227 = vmatprep.subr.mxu0 0.0
        %1228 = vmatpush1.msra.mxu0 %v996
        %1229 = vmatprep.subr.mxu0 0.0
        %1230 = vmatpush1.msra.mxu0 %v997
        %1231 = vmatprep.subr.mxu0 0.0
        %1232 = vmatpush1.msra.mxu0 %v998
        %1233 = vmatprep.subr.mxu0 0.0
        %1234 = vmatpush1.msra.mxu0 %v999
        %1235 = vmatprep.subr.mxu0 0.0
        %1236 = vmatpush1.msra.mxu0 %v1000
        %1237 = vmatprep.subr.mxu0 0.0
        %1238 = vmatpush1.msra.mxu0 %v1001
        %1239 = vmatprep.subr.mxu0 0.0
        %1240 = vmatpush1.msra.mxu0 %v1002
        %1241 = vmatprep.subr.mxu0 0.0
        %1242 = vmatpush1.msra.mxu0 %v1003
        %1243 = vmatprep.subr.mxu0 0.0
        %1244 = vmatpush1.msra.mxu0 %v1004
        %1245 = vmatprep.subr.mxu0 0.0
        %1246 = vmatpush1.msra.mxu0 %v1005
        %1247 = vmatprep.subr.mxu0 0.0
        %1248 = vmatpush1.msra.mxu0 %v1006
        %1249 = vmatprep.subr.mxu0 0.0
        %1250 = vmatpush1.msra.mxu0 %v1007
        %1251 = vmatprep.subr.mxu0 0.0
        %1252 = vmatpush1.msra.mxu0 %v1008
        %1253 = vmatprep.subr.mxu0 0.0
        %1254 = vmatpush1.msra.mxu0 %v1009
        %1255 = vmatprep.subr.mxu0 0.0
        %1256 = vmatpush1.msra.mxu0 %v1010
        %1257 = vmatprep.subr.mxu0 0.0
        %1258 = vmatpush1.msra.mxu0 %v1011
        %1259 = vmatprep.subr.mxu0 0.0
        %1260 = vmatpush1.msra.mxu0 %v1012
        %1261 = vmatprep.subr.mxu0 0.0
        %1262 = vmatpush1.msra.mxu0 %v1013
        %1263 = vmatprep.mubr.f32.mxu0 %v934
        %1264 = vmatmul.mubr.f32.gmra.mrb[0].mxu0 %v918
        %v1265 = vpop.f32.mrb[0].mxu0
        %v1266 = vadd.f32 %v1121, %v1265
        %v1267 = vpop.f32.mrb[0].mxu0
        %1268 = vmatprep.mubr.f32.mxu0 %v935
        %1269 = vmatmul.mubr.f32.gmra.mrb[0].mxu0 %v919
        %v1270 = vpop.f32.mrb[0].mxu0
        %v1271 = vadd.f32 %v1126, %v1270
        %v1272 = vpop.f32.mrb[0].mxu0
        %1273 = vmatprep.mubr.f32.mxu0 %v936
        %1274 = vmatmul.mubr.f32.gmra.mrb[0].mxu0 %v920
        %v1275 = vpop.f32.mrb[0].mxu0
        %v1276 = vadd.f32 %v1131, %v1275
        %v1277 = vpop.f32.mrb[0].mxu0
        %1278 = vmatprep.mubr.f32.mxu0 %v937
        %1279 = vmatmul.mubr.f32.gmra.mrb[0].mxu0 %v921
        %v1280 = vpop.f32.mrb[0].mxu0
        %v1281 = vadd.f32 %v1136, %v1280
        %v1282 = vpop.f32.mrb[0].mxu0
        %1283 = vmatprep.mubr.f32.mxu0 %v938
        %1284 = vmatmul.mubr.f32.gmra.mrb[0].mxu0 %v922
        %v1285 = vpop.f32.mrb[0].mxu0
        %v1286 = vadd.f32 %v1141, %v1285
        %v1287 = vpop.f32.mrb[0].mxu0
        %1288 = vmatprep.mubr.f32.mxu0 %v939
        %1289 = vmatmul.mubr.f32.gmra.mrb[0].mxu0 %v923
        %v1290 = vpop.f32.mrb[0].mxu0
        %v1291 = vadd.f32 %v1146, %v1290
        %v1292 = vpop.f32.mrb[0].mxu0
        %1293 = vmatprep.mubr.f32.mxu0 %v940
        %1294 = vmatmul.mubr.f32.gmra.mrb[0].mxu0 %v924
        %v1295 = vpop.f32.mrb[0].mxu0
        %v1296 = vadd.f32 %v1151, %v1295
        %v1297 = vpop.f32.mrb[0].mxu0
        %1298 = vmatprep.mubr.f32.mxu0 %v941
        %1299 = vmatmul.mubr.f32.gmra.mrb[0].mxu0 %v925
        %v1300 = vpop.f32.mrb[0].mxu0
        %v1301 = vadd.f32 %v1156, %v1300
        %v1302 = vpop.f32.mrb[0].mxu0
        %1303 = vmatprep.mubr.f32.mxu0 %v942
        %1304 = vmatmul.mubr.f32.gmra.mrb[0].mxu0 %v926
        %v1305 = vpop.f32.mrb[0].mxu0
        %v1306 = vadd.f32 %v1161, %v1305
        %v1307 = vpop.f32.mrb[0].mxu0
        %1308 = vmatprep.mubr.f32.mxu0 %v943
        %1309 = vmatmul.mubr.f32.gmra.mrb[0].mxu0 %v927
        %v1310 = vpop.f32.mrb[0].mxu0
        %v1311 = vadd.f32 %v1166, %v1310
        %v1312 = vpop.f32.mrb[0].mxu0
        %1313 = vmatprep.mubr.f32.mxu0 %v944
        %1314 = vmatmul.mubr.f32.gmra.mrb[0].mxu0 %v928
        %v1315 = vpop.f32.mrb[0].mxu0
        %v1316 = vadd.f32 %v1171, %v1315
        %v1317 = vpop.f32.mrb[0].mxu0
        %1318 = vmatprep.mubr.f32.mxu0 %v945
        %1319 = vmatmul.mubr.f32.gmra.mrb[0].mxu0 %v929
        %v1320 = vpop.f32.mrb[0].mxu0
        %v1321 = vadd.f32 %v1176, %v1320
        %v1322 = vpop.f32.mrb[0].mxu0
        %1323 = vmatprep.mubr.f32.mxu0 %v946
        %1324 = vmatmul.mubr.f32.gmra.mrb[0].mxu0 %v930
        %v1325 = vpop.f32.mrb[0].mxu0
        %v1326 = vadd.f32 %v1181, %v1325
        %v1327 = vpop.f32.mrb[0].mxu0
        %1328 = vmatprep.mubr.f32.mxu0 %v947
        %1329 = vmatmul.mubr.f32.gmra.mrb[0].mxu0 %v931
        %v1330 = vpop.f32.mrb[0].mxu0
        %v1331 = vadd.f32 %v1186, %v1330
        %v1332 = vpop.f32.mrb[0].mxu0
        %1333 = vmatprep.mubr.f32.mxu0 %v948
        %1334 = vmatmul.mubr.f32.gmra.mrb[0].mxu0 %v932
        %v1335 = vpop.f32.mrb[0].mxu0
        %v1336 = vadd.f32 %v1191, %v1335
        %v1337 = vpop.f32.mrb[0].mxu0
        %1338 = vmatprep.mubr.f32.mxu0 %v949
        %1339 = vmatmul.mubr.f32.gmra.mrb[0].mxu0 %v933
        %v1340 = vpop.f32.mrb[0].mxu0
        %v1341 = vadd.f32 %v1196, %v1340
        %v1342 = vpop.f32.mrb[0].mxu0
        %1343 = vdwg.mxu0
        %1344 = vmatprep.subr.mxu0 0.0
        %1345 = vmatpush1.msra.mxu0 %v1014
        %1346 = vmatprep.subr.mxu0 0.0
        %1347 = vmatpush1.msra.mxu0 %v1015
        %1348 = vmatprep.subr.mxu0 0.0
        %1349 = vmatpush1.msra.mxu0 %v1016
        %1350 = vmatprep.subr.mxu0 0.0
        %1351 = vmatpush1.msra.mxu0 %v1017
        %1352 = vmatprep.subr.mxu0 0.0
        %1353 = vmatpush1.msra.mxu0 %v1018
        %1354 = vmatprep.subr.mxu0 0.0
        %1355 = vmatpush1.msra.mxu0 %v1019
        %1356 = vmatprep.subr.mxu0 0.0
        %1357 = vmatpush1.msra.mxu0 %v1020
        %1358 = vmatprep.subr.mxu0 0.0
        %1359 = vmatpush1.msra.mxu0 %v1021
        %1360 = vmatprep.subr.mxu0 0.0
        %1361 = vmatpush1.msra.mxu0 0.0
        %1362 = vmatprep.subr.mxu0 0.0
        %1363 = vmatpush1.msra.mxu0 0.0
        %1364 = vmatprep.subr.mxu0 0.0
        %1365 = vmatpush1.msra.mxu0 0.0
        %1366 = vmatprep.subr.mxu0 0.0
        %1367 = vmatpush1.msra.mxu0 0.0
        %1368 = vmatprep.subr.mxu0 0.0
        %1369 = vmatpush1.msra.mxu0 0.0
        %1370 = vmatprep.subr.mxu0 0.0
        %1371 = vmatpush1.msra.mxu0 0.0
        %1372 = vmatprep.subr.mxu0 0.0
        %1373 = vmatpush1.msra.mxu0 0.0
        %1374 = vmatprep.subr.mxu0 0.0
        %1375 = vmatpush1.msra.mxu0 0.0
        %1376 = vmatprep.subr.mxu0 0.0
        %1377 = vmatpush1.msra.mxu0 0.0
        %1378 = vmatprep.subr.mxu0 0.0
        %1379 = vmatpush1.msra.mxu0 0.0
        %1380 = vmatprep.subr.mxu0 0.0
        %1381 = vmatpush1.msra.mxu0 0.0
        %1382 = vmatprep.subr.mxu0 0.0
        %1383 = vmatpush1.msra.mxu0 0.0
        %1384 = vmatprep.subr.mxu0 0.0
        %1385 = vmatpush1.msra.mxu0 0.0
        %1386 = vmatprep.subr.mxu0 0.0
        %1387 = vmatpush1.msra.mxu0 0.0
        %1388 = vmatprep.subr.mxu0 0.0
        %1389 = vmatpush1.msra.mxu0 0.0
        %1390 = vmatprep.subr.mxu0 0.0
        %1391 = vmatpush1.msra.mxu0 0.0
        %1392 = vmatprep.subr.mxu0 0.0
        %1393 = vmatpush1.msra.mxu0 0.0
        %1394 = vmatprep.subr.mxu0 0.0
        %1395 = vmatpush1.msra.mxu0 0.0
        %1396 = vmatprep.subr.mxu0 0.0
        %1397 = vmatpush1.msra.mxu0 0.0
        %1398 = vmatprep.subr.mxu0 0.0
        %1399 = vmatpush1.msra.mxu0 0.0
        %1400 = vmatprep.subr.mxu0 0.0
        %1401 = vmatpush1.msra.mxu0 0.0
        %1402 = vmatprep.subr.mxu0 0.0
        %1403 = vmatpush1.msra.mxu0 0.0
        %1404 = vmatprep.subr.mxu0 0.0
        %1405 = vmatpush1.msra.mxu0 0.0
        %1406 = vmatprep.subr.mxu0 0.0
        %1407 = vmatpush1.msra.mxu0 0.0
        %1408 = vmatprep.mubr.f32.mxu0 0.0
        %1409 = vmatmul.mubr.f32.gmra.mrb[0].mxu0 %v1022
        %v1410 = vpop.f32.mrb[0].mxu0
        %v1411 = vadd.f32 %v1266, %v1410
        %v1412 = vpop.f32.mrb[0].mxu0
        %1413 = vmatprep.mubr.f32.mxu0 0.0
        %1414 = vmatmul.mubr.f32.gmra.mrb[0].mxu0 %v1024
        %v1415 = vpop.f32.mrb[0].mxu0
        %v1416 = vadd.f32 %v1271, %v1415
        %v1417 = vpop.f32.mrb[0].mxu0
        %1418 = vmatprep.mubr.f32.mxu0 0.0
        %1419 = vmatmul.mubr.f32.gmra.mrb[0].mxu0 %v1026
        %v1420 = vpop.f32.mrb[0].mxu0
        %v1421 = vadd.f32 %v1276, %v1420
        %v1422 = vpop.f32.mrb[0].mxu0
        %1423 = vmatprep.mubr.f32.mxu0 0.0
        %1424 = vmatmul.mubr.f32.gmra.mrb[0].mxu0 %v1028
        %v1425 = vpop.f32.mrb[0].mxu0
        %v1426 = vadd.f32 %v1281, %v1425
        %v1427 = vpop.f32.mrb[0].mxu0
        %1428 = vmatprep.mubr.f32.mxu0 0.0
        %1429 = vmatmul.mubr.f32.gmra.mrb[0].mxu0 %v1030
        %v1430 = vpop.f32.mrb[0].mxu0
        %v1431 = vadd.f32 %v1286, %v1430
        %v1432 = vpop.f32.mrb[0].mxu0
        %1433 = vmatprep.mubr.f32.mxu0 0.0
        %1434 = vmatmul.mubr.f32.gmra.mrb[0].mxu0 %v1032
        %v1435 = vpop.f32.mrb[0].mxu0
        %v1436 = vadd.f32 %v1291, %v1435
        %v1437 = vpop.f32.mrb[0].mxu0
        %1438 = vmatprep.mubr.f32.mxu0 0.0
        %1439 = vmatmul.mubr.f32.gmra.mrb[0].mxu0 %v1034
        %v1440 = vpop.f32.mrb[0].mxu0
        %v1441 = vadd.f32 %v1296, %v1440
        %v1442 = vpop.f32.mrb[0].mxu0
        %1443 = vmatprep.mubr.f32.mxu0 0.0
        %1444 = vmatmul.mubr.f32.gmra.mrb[0].mxu0 %v1036
        %v1445 = vpop.f32.mrb[0].mxu0
        %v1446 = vadd.f32 %v1301, %v1445
        %v1447 = vpop.f32.mrb[0].mxu0
        %1448 = vmatprep.mubr.f32.mxu0 0.0
        %1449 = vmatmul.mubr.f32.gmra.mrb[0].mxu0 %v1038
        %v1450 = vpop.f32.mrb[0].mxu0
        %v1451 = vadd.f32 %v1306, %v1450
        %v1452 = vpop.f32.mrb[0].mxu0
        %1453 = vmatprep.mubr.f32.mxu0 0.0
        %1454 = vmatmul.mubr.f32.gmra.mrb[0].mxu0 %v1040
        %v1455 = vpop.f32.mrb[0].mxu0
        %v1456 = vadd.f32 %v1311, %v1455
        %v1457 = vpop.f32.mrb[0].mxu0
        %1458 = vmatprep.mubr.f32.mxu0 0.0
        %1459 = vmatmul.mubr.f32.gmra.mrb[0].mxu0 %v1042
        %v1460 = vpop.f32.mrb[0].mxu0
        %v1461 = vadd.f32 %v1316, %v1460
        %v1462 = vpop.f32.mrb[0].mxu0
        %1463 = vmatprep.mubr.f32.mxu0 0.0
        %1464 = vmatmul.mubr.f32.gmra.mrb[0].mxu0 %v1044
        %v1465 = vpop.f32.mrb[0].mxu0
        %v1466 = vadd.f32 %v1321, %v1465
        %v1467 = vpop.f32.mrb[0].mxu0
        %1468 = vmatprep.mubr.f32.mxu0 0.0
        %1469 = vmatmul.mubr.f32.gmra.mrb[0].mxu0 %v1046
        %v1470 = vpop.f32.mrb[0].mxu0
        %v1471 = vadd.f32 %v1326, %v1470
        %v1472 = vpop.f32.mrb[0].mxu0
        %1473 = vmatprep.mubr.f32.mxu0 0.0
        %1474 = vmatmul.mubr.f32.gmra.mrb[0].mxu0 %v1048
        %v1475 = vpop.f32.mrb[0].mxu0
        %v1476 = vadd.f32 %v1331, %v1475
        %v1477 = vpop.f32.mrb[0].mxu0
        %1478 = vmatprep.mubr.f32.mxu0 0.0
        %1479 = vmatmul.mubr.f32.gmra.mrb[0].mxu0 %v1050
        %v1480 = vpop.f32.mrb[0].mxu0
        %v1481 = vadd.f32 %v1336, %v1480
        %v1482 = vpop.f32.mrb[0].mxu0
        %1483 = vmatprep.mubr.f32.mxu0 0.0
        %1484 = vmatmul.mubr.f32.gmra.mrb[0].mxu0 %v1052
        %v1485 = vpop.f32.mrb[0].mxu0
        %v1486 = vadd.f32 %v1341, %v1485
        %v1487 = vpop.f32.mrb[0].mxu0
        %1488 = vdwg.mxu0
        %1489 = vst.msk [vmem:[%s250] sm:$0xff] %vm885, %v1411
        %1490 = vst.msk [vmem:[%s250 + $0x8] sm:$0xff] %vm885, %v1416
        %1491 = vst.msk [vmem:[%s250 + $0x10] sm:$0xff] %vm885, %v1421
        %1492 = vst.msk [vmem:[%s250 + $0x18] sm:$0xff] %vm885, %v1426
        %1493 = vst.msk [vmem:[%s250 + $0x20] sm:$0xff] %vm885, %v1431
        %1494 = vst.msk [vmem:[%s250 + $0x28] sm:$0xff] %vm885, %v1436
        %1495 = vst.msk [vmem:[%s250 + $0x30] sm:$0xff] %vm885, %v1441
        %1496 = vst.msk [vmem:[%s250 + $0x38] sm:$0xff] %vm885, %v1446
        %1497 = vst.msk [vmem:[%s250 + $0x40] sm:$0xff] %vm885, %v1451
        %1498 = vst.msk [vmem:[%s250 + $0x48] sm:$0xff] %vm885, %v1456
        %1499 = vst.msk [vmem:[%s250 + $0x50] sm:$0xff] %vm885, %v1461
        %1500 = vst.msk [vmem:[%s250 + $0x58] sm:$0xff] %vm885, %v1466
        %1501 = vst.msk [vmem:[%s250 + $0x60] sm:$0xff] %vm885, %v1471
        %1502 = vst.msk [vmem:[%s250 + $0x68] sm:$0xff] %vm885, %v1476
        %1503 = vst.msk [vmem:[%s250 + $0x70] sm:$0xff] %vm885, %v1481
        %1504 = vst.msk [vmem:[%s250 + $0x78] sm:$0xff] %vm885, %v1486
        %p1505 = scmp.eq.s32.totalorder %s31, 0
        // Predicated region
        $region37: #{bottleneck_forward.6} parent=27 // pred_check
          %p1506 = pneg %p1505
        $region38: #{bottleneck_forward.6} parent=27 // pred_check_branch
          %1508 = sbr.rel (%p1506) target = $region40
        $region39: #{bottleneck_forward.6} parent=27 // pred_region
          %vm1509 = vcmask 516096
          %1510 = vst.msk [vmem:[%s256] sm:$0x1] %vm1509, 0.0
          %1511 = vst.msk [vmem:[%s262] sm:$0x1] %vm1509, 0.0
        $region40: #{bottleneck_forward.6} parent=27 // pred_fallthru
          _
        %v1512 = vld [vmem:[%s256] sm:$0x1]
        %v1513 = vsel %vm885, %v1411, 0.0
        %v1514 = vsel %vm885, %v1416, 0.0
        %v1515 = vadd.f32 %v1513, %v1514
        %v1516 = vsel %vm885, %v1421, 0.0
        %v1517 = vadd.f32 %v1515, %v1516
        %v1518 = vsel %vm885, %v1426, 0.0
        %v1519 = vadd.f32 %v1517, %v1518
        %v1520 = vsel %vm885, %v1431, 0.0
        %v1521 = vadd.f32 %v1519, %v1520
        %v1522 = vsel %vm885, %v1436, 0.0
        %v1523 = vadd.f32 %v1521, %v1522
        %v1524 = vsel %vm885, %v1441, 0.0
        %v1525 = vadd.f32 %v1523, %v1524
        %v1526 = vsel %vm885, %v1446, 0.0
        %v1527 = vadd.f32 %v1525, %v1526
        %v1528 = vsel %vm885, %v1451, 0.0
        %v1529 = vadd.f32 %v1527, %v1528
        %v1530 = vsel %vm885, %v1456, 0.0
        %v1531 = vadd.f32 %v1529, %v1530
        %v1532 = vsel %vm885, %v1461, 0.0
        %v1533 = vadd.f32 %v1531, %v1532
        %v1534 = vsel %vm885, %v1466, 0.0
        %v1535 = vadd.f32 %v1533, %v1534
        %v1536 = vsel %vm885, %v1471, 0.0
        %v1537 = vadd.f32 %v1535, %v1536
        %v1538 = vsel %vm885, %v1476, 0.0
        %v1539 = vadd.f32 %v1537, %v1538
        %v1540 = vsel %vm885, %v1481, 0.0
        %v1541 = vadd.f32 %v1539, %v1540
        %v1542 = vsel %vm885, %v1486, 0.0
        %v1543 = vadd.f32 %v1541, %v1542
        %v1544 = vrot.slane %v1543, 4
        %v1545 = vadd.f32 %v1543, %v1544
        %v1546 = vrot.slane %v1545, 2
        %v1547 = vadd.f32 %v1545, %v1546
        %v1548 = vrot.slane %v1547, 1
        %v1549 = vadd.f32 %v1547, %v1548
        %v1550 = vadd.f32 %v1512, %v1549
        %vm1551 = vcmask 516096
        %1552 = vst.msk [vmem:[%s256] sm:$0x1] %vm1551, %v1550
        %v1553 = vld [vmem:[%s262] sm:$0x1]
        %v1554 = vmul.f32 %v1411, %v1411
        %v1555 = vmul.f32 %v1416, %v1416
        %v1556 = vmul.f32 %v1421, %v1421
        %v1557 = vmul.f32 %v1426, %v1426
        %v1558 = vmul.f32 %v1431, %v1431
        %v1559 = vmul.f32 %v1436, %v1436
        %v1560 = vmul.f32 %v1441, %v1441
        %v1561 = vmul.f32 %v1446, %v1446
        %v1562 = vmul.f32 %v1451, %v1451
        %v1563 = vmul.f32 %v1456, %v1456
        %v1564 = vmul.f32 %v1461, %v1461
        %v1565 = vmul.f32 %v1466, %v1466
        %v1566 = vmul.f32 %v1471, %v1471
        %v1567 = vmul.f32 %v1476, %v1476
        %v1568 = vmul.f32 %v1481, %v1481
        %v1569 = vmul.f32 %v1486, %v1486
        %v1570 = vsel %vm885, %v1554, 0.0
        %v1571 = vsel %vm885, %v1555, 0.0
        %v1572 = vadd.f32 %v1570, %v1571
        %v1573 = vsel %vm885, %v1556, 0.0
        %v1574 = vadd.f32 %v1572, %v1573
        %v1575 = vsel %vm885, %v1557, 0.0
        %v1576 = vadd.f32 %v1574, %v1575
        %v1577 = vsel %vm885, %v1558, 0.0
        %v1578 = vadd.f32 %v1576, %v1577
        %v1579 = vsel %vm885, %v1559, 0.0
        %v1580 = vadd.f32 %v1578, %v1579
        %v1581 = vsel %vm885, %v1560, 0.0
        %v1582 = vadd.f32 %v1580, %v1581
        %v1583 = vsel %vm885, %v1561, 0.0
        %v1584 = vadd.f32 %v1582, %v1583
        %v1585 = vsel %vm885, %v1562, 0.0
        %v1586 = vadd.f32 %v1584, %v1585
        %v1587 = vsel %vm885, %v1563, 0.0
        %v1588 = vadd.f32 %v1586, %v1587
        %v1589 = vsel %vm885, %v1564, 0.0
        %v1590 = vadd.f32 %v1588, %v1589
        %v1591 = vsel %vm885, %v1565, 0.0
        %v1592 = vadd.f32 %v1590, %v1591
        %v1593 = vsel %vm885, %v1566, 0.0
        %v1594 = vadd.f32 %v1592, %v1593
        %v1595 = vsel %vm885, %v1567, 0.0
        %v1596 = vadd.f32 %v1594, %v1595
        %v1597 = vsel %vm885, %v1568, 0.0
        %v1598 = vadd.f32 %v1596, %v1597
        %v1599 = vsel %vm885, %v1569, 0.0
        %v1600 = vadd.f32 %v1598, %v1599
        %v1601 = vrot.slane %v1600, 4
        %v1602 = vadd.f32 %v1600, %v1601
        %v1603 = vrot.slane %v1602, 2
        %v1604 = vadd.f32 %v1602, %v1603
        %v1605 = vrot.slane %v1604, 1
        %v1606 = vadd.f32 %v1604, %v1605
        %v1607 = vadd.f32 %v1553, %v1606
        %1608 = vst.msk [vmem:[%s262] sm:$0x1] %vm1551, %v1607
        %s1609 = sand.u32 %s97, 1
        %s1610 = scalar_lea.sflag [#allocation4], %s1609
        %s1611 = sand.u32 %s97, 1
        %s1612 = smul.addr %s1611, 128
        %s1613 = scalar_lea.vmem [#allocation7], %s1612
        %s1614 = sand.u32 %s26, 1
        %s1615 = scalar_lea.sflag [#allocation9], %s1614
        %s1616 = sand.u32 %s123, 1
        %s1617 = scalar_lea.vmem [#allocation8], %s1616
        %s1618 = sand.u32 %s26, 1
        %s1619 = scalar_lea.sflag [#allocation9], %s1618
        %s1620 = sand.u32 %s149, 1
        %s1621 = scalar_lea.vmem [#allocation10], %s1620
        // Predicated region
        $region41: #{bottleneck_forward.6} parent=27 // pred_check
          %p1622 = pneg %p107
        $region42: #{bottleneck_forward.6} parent=27 // pred_check_branch
          %1624 = sbr.rel (%p1622) target = $region44
        $region43: #{bottleneck_forward.6} parent=27 // pred_region
          %s1625 = smul.u32 %s30, 2
          %s1626 = sadd.s32 %s1625, %s31
          %s1627 = smul.u32 16, %s1626
          %s1629 = ssub.s32 2048, 2048
          %1630 = vsyncadd %s1610, %s1629
          %s1631 = smul.addr %s1627, 128
          %s1632 = scalar_lea.hbm %s2, %s1631
          %s1633 = sshll.u32 %s1613, 4
          %s1634 = int_to_ptr.vmem [resolvable:$true] %s1633
          %1639 = dma.vmem_to_hbm [thread:$0]  %s1634, 2048, %s1632, %s1610, 128, 128, 8
        $region44: #{bottleneck_forward.6} parent=27 // pred_fallthru
          _
        // Predicated region
        $region45: #{bottleneck_forward.6} parent=27 // pred_check
          %p1640 = pneg %p133
        $region46: #{bottleneck_forward.6} parent=27 // pred_check_branch
          %1642 = sbr.rel (%p1640) target = $region48
        $region47: #{bottleneck_forward.6} parent=27 // pred_region
          %s1644 = ssub.s32 16, 16
          %1645 = vsyncadd %s1615, %s1644
          %s1646 = smul.addr %s30, 16
          %s1647 = scalar_lea.hbm %s3, %s1646
          %s1649 = sshll.u32 %s1617, 4
          %s1650 = int_to_ptr.vmem [resolvable:$true] %s1649
          %1652 = dma.vmem_to_hbm [thread:$0]  %s1650, 16, %s1647, %s1615
        $region48: #{bottleneck_forward.6} parent=27 // pred_fallthru
          _
        // Predicated region
        $region49: #{bottleneck_forward.6} parent=27 // pred_check
          %p1653 = pneg %p159
        $region50: #{bottleneck_forward.6} parent=27 // pred_check_branch
          %1655 = sbr.rel (%p1653) target = $region52
        $region51: #{bottleneck_forward.6} parent=27 // pred_region
          %s1657 = ssub.s32 16, 16
          %1658 = vsyncadd %s1619, %s1657
          %s1659 = smul.addr %s30, 16
          %s1660 = scalar_lea.hbm %s4, %s1659
          %s1662 = sshll.u32 %s1621, 4
          %s1663 = int_to_ptr.vmem [resolvable:$true] %s1662
          %1665 = dma.vmem_to_hbm [thread:$0]  %s1663, 16, %s1660, %s1619
        $region52: #{bottleneck_forward.6} parent=27 // pred_fallthru
          _
      $region28: #{bottleneck_forward.6} parent=5 // pred_fallthru
        _
      %p1666 = scmp.le.s32.totalorder 2, %s21
      // Predicated region
      $region53: #{bottleneck_forward.6} parent=5 // pred_check
        %p1667 = pneg %p1666
      $region54: #{bottleneck_forward.6} parent=5 // pred_check_branch
        %1669 = sbr.rel (%p1667) target = $region56
      $region55: #{bottleneck_forward.6} parent=5 // pred_region
        %s1670 = ssub.s32 %s21, 2
        // Predicated region
        $region57: #{bottleneck_forward.6} parent=55 // pred_check
          %p1671 = pneg %p113
        $region58: #{bottleneck_forward.6} parent=55 // pred_check_branch
          %1673 = sbr.rel (%p1671) target = $region60
        $region59: #{bottleneck_forward.6} parent=55 // pred_region
          %s1674 = sand.u32 %s98, 1
          %s1675 = scalar_lea.sflag [#allocation4], %s1674
          %s1676 = sand.u32 %s98, 1
          %s1677 = smul.addr %s1676, 128
          %s1678 = scalar_lea.vmem [#allocation7], %s1677
          %1679 = dma.done %s1675, 2048
        $region60: #{bottleneck_forward.6} parent=55 // pred_fallthru
          _
        // Predicated region
        $region61: #{bottleneck_forward.6} parent=55 // pred_check
          %p1680 = pneg %p139
        $region62: #{bottleneck_forward.6} parent=55 // pred_check_branch
          %1682 = sbr.rel (%p1680) target = $region64
        $region63: #{bottleneck_forward.6} parent=55 // pred_region
          %s1683 = sand.u32 %s27, 1
          %s1684 = scalar_lea.sflag [#allocation9], %s1683
          %s1685 = sand.u32 %s124, 1
          %s1686 = scalar_lea.vmem [#allocation8], %s1685
          %1687 = dma.done %s1684, 16
        $region64: #{bottleneck_forward.6} parent=55 // pred_fallthru
          _
        // Predicated region
        $region65: #{bottleneck_forward.6} parent=55 // pred_check
          %p1688 = pneg %p165
        $region66: #{bottleneck_forward.6} parent=55 // pred_check_branch
          %1690 = sbr.rel (%p1688) target = $region68
        $region67: #{bottleneck_forward.6} parent=55 // pred_region
          %s1691 = sand.u32 %s27, 1
          %s1692 = scalar_lea.sflag [#allocation9], %s1691
          %s1693 = sand.u32 %s150, 1
          %s1694 = scalar_lea.vmem [#allocation10], %s1693
          %1695 = dma.done %s1692, 16
        $region68: #{bottleneck_forward.6} parent=55 // pred_fallthru
          _
      $region56: #{bottleneck_forward.6} parent=5 // pred_fallthru
        _
    $region6: #{bottleneck_forward.6} parent=1 // loop_footer
      %s25 = sadd.s32 1, %s21
    $region7: #{bottleneck_forward.6} parent=1 // loop_footer_branch
      %20 = sbr.rel target = $region3
    $region8: #{bottleneck_forward.6} parent=1 // loop_exit
      _
    %1696 = vsyncpa [#allocation3], 1
    %s1697 = scalar_lea.sflag [#allocation3], 1
    %1698 = vsyncpa %s1697, 1
    %1699 = vsyncpa [#allocation6], 1
    %1700 = vsyncpa [#allocation4], 1
    %s1701 = scalar_lea.sflag [#allocation4], 1
    %1702 = vsyncpa %s1701, 1
    %1703 = vsyncpa [#allocation9], 1
    %s1704 = scalar_lea.sflag [#allocation9], 1
    %1705 = vsyncpa %s1704, 1

</llo_original>
